<compile_context>
chip_gen: v6e
topology: v6e:2x2x1
jax: 0.10.0
libtpu: 0.0.40
codegen_flags: <defaults>
</compile_context>

<pallas_src>
import functools

import jax
import jax.numpy as jnp
from jax import lax
from jax.experimental import pallas as pl
from jax.experimental.pallas import tpu as pltpu


# ---------------------------------------------------------------------------
# Fused kernel: conv (9 taps) + bias + ReLU + masked mean-pool + all classifiers
# ---------------------------------------------------------------------------
def _fused_encoder_classify_kernel(xf_ref, mask_ref, wconv_ref, bconv_ref,
                                   wcls_ref, bcls_ref, out_ref, *, H, W, KH, KW):
    # xf:    (1, Hp*Wp, Cin)   bf16  flattened zero-padded NHWC image (one sample)
    # mask:  (L, 1)            f32   1.0 where the flat index is a valid output pos
    # wconv: (KH*KW, Cin, Cout) bf16 conv taps
    # bconv: (1, Cout)         f32
    # wcls:  (Cout, TNCp)      bf16  all T classifier heads, lane-padded to 128
    # bcls:  (1, TNCp)         f32
    # out:   (1, 1, TNCp)      f32
    Wp = W + KW - 1
    L = (H - 1) * Wp + W                 # contiguous flat range covering all outputs
    Cout = wconv_ref.shape[-1]

    # Load once; upcast so the 9 shifted windows slice on a 32-bit layout.
    x_all = xf_ref[0].astype(jnp.float32)            # (Hp*Wp, Cin)

    acc = jnp.zeros((L, Cout), jnp.float32)
    for kh in range(KH):                              # KH*KW taps, static unroll
        for kw in range(KW):
            off = kh * Wp + kw
            win = x_all[off:off + L, :].astype(jnp.bfloat16)          # (L, Cin)
            acc = acc + jnp.dot(win, wconv_ref[kh * KW + kw],
                                preferred_element_type=jnp.float32)

    feat = jnp.maximum(acc + bconv_ref[...], 0.0)                      # (L, Cout) f32
    feat = feat * mask_ref[...]                                        # zero pad columns
    pooled = jnp.sum(feat, axis=0, keepdims=True) * (1.0 / (H * W))    # (1, Cout) f32

    logits = jnp.dot(pooled.astype(jnp.bfloat16), wcls_ref[...],
                     preferred_element_type=jnp.float32) + bcls_ref[...]
    out_ref[0] = logits                                                # (1, TNCp)


# ---------------------------------------------------------------------------
# Wrapper: layout glue (transpose/pad/flatten, head fusion) in plain JAX
# ---------------------------------------------------------------------------
def vit_merged_forward(x_nchw, conv_w, conv_b, cls_w, cls_b):
    N, Cin, H, W = x_nchw.shape
    KH, KW, _, Cout = conv_w.shape
    T, _, NC = cls_w.shape
    ph, pw = (KH - 1) // 2, (KW - 1) // 2
    Hp, Wp = H + 2 * ph, W + 2 * pw
    L = (H - 1) * Wp + W
    TNC = T * NC
    TNCp = -(-TNC // 128) * 128                       # lane-dense output width

    # NCHW -> padded NHWC, spatially flattened; streamed to the kernel as bf16.
    x = jnp.transpose(x_nchw, (0, 2, 3, 1)).astype(jnp.float32)
    xpad = jnp.pad(x, ((0, 0), (ph, ph), (pw, pw), (0, 0)))
    xf = xpad.reshape(N, Hp * Wp, Cin).astype(jnp.bfloat16)

    # Valid-output mask over the contiguous flat range [0, L).
    q = jnp.arange(L)
    mask = ((q % Wp) < W).astype(jnp.float32).reshape(L, 1)

    w_taps = conv_w.reshape(KH * KW, Cin, Cout).astype(jnp.bfloat16)
    b_conv = conv_b.reshape(1, Cout).astype(jnp.float32)

    # Fuse all T classifier heads into one lane-dense (Cout, TNCp) matmul.
    w_all = jnp.transpose(cls_w, (1, 0, 2)).reshape(Cout, TNC)
    w_all = jnp.pad(w_all, ((0, 0), (0, TNCp - TNC))).astype(jnp.bfloat16)
    b_all = jnp.pad(cls_b.reshape(1, TNC), ((0, 0), (0, TNCp - TNC))).astype(jnp.float32)

    kernel = functools.partial(_fused_encoder_classify_kernel, H=H, W=W, KH=KH, KW=KW)

    out = pl.pallas_call(
        kernel,
        out_shape=jax.ShapeDtypeStruct((N, 1, TNCp), jnp.float32),
        grid=(N,),
        in_specs=[
            pl.BlockSpec((1, Hp * Wp, Cin), lambda n: (n, 0, 0)),   # streamed per sample
            pl.BlockSpec((L, 1), lambda n: (0, 0)),                 # resident
            pl.BlockSpec((KH * KW, Cin, Cout), lambda n: (0, 0, 0)),  # resident
            pl.BlockSpec((1, Cout), lambda n: (0, 0)),              # resident
            pl.BlockSpec((Cout, TNCp), lambda n: (0, 0)),           # resident
            pl.BlockSpec((1, TNCp), lambda n: (0, 0)),              # resident
        ],
        out_specs=pl.BlockSpec((1, 1, TNCp), lambda n: (n, 0, 0)),
        compiler_params=pltpu.CompilerParams(
            dimension_semantics=("parallel",),      # megacore sharding on v7x
            vmem_limit_bytes=32 * 1024 * 1024,
        ),
    )(xf, mask, w_taps, b_conv, w_all, b_all)

    # Stacked lane-dense logits; drop the lane padding.  Per-task splitting is
    # done by the caller OUTSIDE jit so the device output stays one contiguous array.
    return out[:, 0, :TNC]


# ---------------------------------------------------------------------------
# Pure-JAX reference for verification
# ---------------------------------------------------------------------------
def reference_forward(x_nchw, conv_w, conv_b, cls_w, cls_b):
    x = jnp.transpose(x_nchw, (0, 2, 3, 1)).astype(jnp.float32)
    y = lax.conv_general_dilated(
        x, conv_w, window_strides=(1, 1), padding="SAME",
        dimension_numbers=("NHWC", "HWIO", "NHWC"))
    y = jax.nn.relu(y + conv_b.reshape(1, 1, 1, -1))
    pooled = y.mean(axis=(1, 2))
    T = cls_w.shape[0]
    return [pooled @ cls_w[t] + cls_b[t, 0] for t in range(T)]


if __name__ == "__main__":
    # Small, deterministic synthetic setup (encoder + 3 classifier heads).
    N, Cin, H, W = 2, 4, 16, 16
    Cout, KH, KW = 32, 3, 3
    T, NC = 3, 10  # number of tasks / classes per classifier

    key = jax.random.PRNGKey(0)
    k1, k2, k3, k4, k5 = jax.random.split(key, 5)

    x = jax.random.normal(k1, (N, Cin, H, W), jnp.float32)                    # NCHW
    conv_w = 0.1 * jax.random.normal(k2, (KH, KW, Cin, Cout), jnp.float32)    # HWIO
    conv_b = 0.1 * jax.random.normal(k3, (1, Cout), jnp.float32)
    cls_w = 0.1 * jax.random.normal(k4, (T, Cout, NC), jnp.float32)
    cls_b = 0.1 * jax.random.normal(k5, (T, 1, NC), jnp.float32)

    fwd = jax.jit(vit_merged_forward)
    logits = jax.block_until_ready(fwd(x, conv_w, conv_b, cls_w, cls_b))
    assert logits.shape == (N, T * NC)

    # Per-task list (matches the PyTorch module's return type), split outside jit.
    outs = [logits[:, t * NC:(t + 1) * NC] for t in range(T)]

    refs = reference_forward(x, conv_w, conv_b, cls_w, cls_b)
    for o, r in zip(outs, refs):
        assert o.shape == (N, NC)
        # bf16 MXU operands -> loosened tolerance vs f32 reference.
        assert jnp.allclose(o, r, atol=2e-2, rtol=2e-2), "mismatch vs JAX reference"

    # TODO(synk): single_task=True branch just delegates to the wrapped submodule
    # (no distinct compute); only the single_task=False forward path is kernelized.
    # TODO(synk): for large H*W, add an inner spatial-row pipeline (haloed tiles via
    # pltpu.emit_pipeline / manual DMA) instead of one whole image per grid step.
    print("KERNEL_OK")
</pallas_src>

<mosaic_0001>
module attributes {stable_mosaic.version = 11 : i64} {
  func.func @_fused_encoder_classify_kernel(%arg0: i32, %arg1: memref<1x324x4xbf16, #tpu.memory_space<vmem>>, %arg2: memref<286x1xf32, #tpu.memory_space<vmem>>, %arg3: memref<9x4x32xbf16, #tpu.memory_space<vmem>>, %arg4: memref<1x32xf32, #tpu.memory_space<vmem>>, %arg5: memref<32x128xbf16, #tpu.memory_space<vmem>>, %arg6: memref<1x128xf32, #tpu.memory_space<vmem>>, %arg7: memref<1x1x128xf32, #tpu.memory_space<vmem>>) attributes {dimension_semantics = [#tpu.dimension_semantics<parallel>], iteration_bounds = array<i64: 2>, scalar_prefetch = 0 : i64, scratch_operands = 0 : i64, tpu.core_type = #tpu.core_type<tc>, window_params = [{transform_indices = @transform_0, window_bounds = array<i64: 1, 324, 4>}, {pipeline_mode = #tpu.pipeline_mode<synchronous>, transform_indices = @transform_1, window_bounds = array<i64: 286, 1>}, {pipeline_mode = #tpu.pipeline_mode<synchronous>, transform_indices = @transform_2, window_bounds = array<i64: 9, 4, 32>}, {pipeline_mode = #tpu.pipeline_mode<synchronous>, transform_indices = @transform_3, window_bounds = array<i64: 1, 32>}, {pipeline_mode = #tpu.pipeline_mode<synchronous>, transform_indices = @transform_4, window_bounds = array<i64: 32, 128>}, {pipeline_mode = #tpu.pipeline_mode<synchronous>, transform_indices = @transform_5, window_bounds = array<i64: 1, 128>}, {transform_indices = @transform_6, window_bounds = array<i64: 1, 1, 128>}]} {
    %c0 = arith.constant 0 : index
    %c0_0 = arith.constant 0 : index
    %c0_1 = arith.constant 0 : index
    %0 = vector.load %arg1[%c0, %c0_0, %c0_1] : memref<1x324x4xbf16, #tpu.memory_space<vmem>>, vector<1x324x4xbf16>
    %1 = vector.shape_cast %0 : vector<1x324x4xbf16> to vector<324x4xbf16>
    %2 = arith.extf %1 : vector<324x4xbf16> to vector<324x4xf32>
    %cst = arith.constant 0.000000e+00 : f32
    %3 = vector.broadcast %cst : f32 to vector<286x32xf32>
    %4 = vector.extract_strided_slice %2 {offsets = [0, 0], sizes = [286, 4], strides = [1, 1]} : vector<324x4xf32> to vector<286x4xf32>
    %5 = arith.truncf %4 : vector<286x4xf32> to vector<286x4xbf16>
    %c0_2 = arith.constant 0 : index
    %c0_3 = arith.constant 0 : index
    %c0_4 = arith.constant 0 : index
    %6 = vector.load %arg3[%c0_2, %c0_3, %c0_4] : memref<9x4x32xbf16, #tpu.memory_space<vmem>>, vector<1x4x32xbf16>
    %7 = vector.shape_cast %6 : vector<1x4x32xbf16> to vector<4x32xbf16>
    %cst_5 = arith.constant dense<0.000000e+00> : vector<286x32xf32>
    %8 = tpu.matmul %5, %7, %cst_5 {dimension_numbers = #tpu.dot_dimension_numbers<[1], [0], [0], [1], [0, 0, 1, 1], [], []>} : vector<286x4xbf16>, vector<4x32xbf16>, vector<286x32xf32> -> vector<286x32xf32>
    %9 = arith.addf %3, %8 : vector<286x32xf32>
    %10 = vector.extract_strided_slice %2 {offsets = [1, 0], sizes = [286, 4], strides = [1, 1]} : vector<324x4xf32> to vector<286x4xf32>
    %11 = arith.truncf %10 : vector<286x4xf32> to vector<286x4xbf16>
    %c1 = arith.constant 1 : index
    %c0_6 = arith.constant 0 : index
    %c0_7 = arith.constant 0 : index
    %12 = vector.load %arg3[%c1, %c0_6, %c0_7] : memref<9x4x32xbf16, #tpu.memory_space<vmem>>, vector<1x4x32xbf16>
    %13 = vector.shape_cast %12 : vector<1x4x32xbf16> to vector<4x32xbf16>
    %cst_8 = arith.constant dense<0.000000e+00> : vector<286x32xf32>
    %14 = tpu.matmul %11, %13, %cst_8 {dimension_numbers = #tpu.dot_dimension_numbers<[1], [0], [0], [1], [0, 0, 1, 1], [], []>} : vector<286x4xbf16>, vector<4x32xbf16>, vector<286x32xf32> -> vector<286x32xf32>
    %15 = arith.addf %9, %14 : vector<286x32xf32>
    %16 = vector.extract_strided_slice %2 {offsets = [2, 0], sizes = [286, 4], strides = [1, 1]} : vector<324x4xf32> to vector<286x4xf32>
    %17 = arith.truncf %16 : vector<286x4xf32> to vector<286x4xbf16>
    %c2 = arith.constant 2 : index
    %c0_9 = arith.constant 0 : index
    %c0_10 = arith.constant 0 : index
    %18 = vector.load %arg3[%c2, %c0_9, %c0_10] : memref<9x4x32xbf16, #tpu.memory_space<vmem>>, vector<1x4x32xbf16>
    %19 = vector.shape_cast %18 : vector<1x4x32xbf16> to vector<4x32xbf16>
    %cst_11 = arith.constant dense<0.000000e+00> : vector<286x32xf32>
    %20 = tpu.matmul %17, %19, %cst_11 {dimension_numbers = #tpu.dot_dimension_numbers<[1], [0], [0], [1], [0, 0, 1, 1], [], []>} : vector<286x4xbf16>, vector<4x32xbf16>, vector<286x32xf32> -> vector<286x32xf32>
    %21 = arith.addf %15, %20 : vector<286x32xf32>
    %22 = vector.extract_strided_slice %2 {offsets = [18, 0], sizes = [286, 4], strides = [1, 1]} : vector<324x4xf32> to vector<286x4xf32>
    %23 = arith.truncf %22 : vector<286x4xf32> to vector<286x4xbf16>
    %c3 = arith.constant 3 : index
    %c0_12 = arith.constant 0 : index
    %c0_13 = arith.constant 0 : index
    %24 = vector.load %arg3[%c3, %c0_12, %c0_13] : memref<9x4x32xbf16, #tpu.memory_space<vmem>>, vector<1x4x32xbf16>
    %25 = vector.shape_cast %24 : vector<1x4x32xbf16> to vector<4x32xbf16>
    %cst_14 = arith.constant dense<0.000000e+00> : vector<286x32xf32>
    %26 = tpu.matmul %23, %25, %cst_14 {dimension_numbers = #tpu.dot_dimension_numbers<[1], [0], [0], [1], [0, 0, 1, 1], [], []>} : vector<286x4xbf16>, vector<4x32xbf16>, vector<286x32xf32> -> vector<286x32xf32>
    %27 = arith.addf %21, %26 : vector<286x32xf32>
    %28 = vector.extract_strided_slice %2 {offsets = [19, 0], sizes = [286, 4], strides = [1, 1]} : vector<324x4xf32> to vector<286x4xf32>
    %29 = arith.truncf %28 : vector<286x4xf32> to vector<286x4xbf16>
    %c4 = arith.constant 4 : index
    %c0_15 = arith.constant 0 : index
    %c0_16 = arith.constant 0 : index
    %30 = vector.load %arg3[%c4, %c0_15, %c0_16] : memref<9x4x32xbf16, #tpu.memory_space<vmem>>, vector<1x4x32xbf16>
    %31 = vector.shape_cast %30 : vector<1x4x32xbf16> to vector<4x32xbf16>
    %cst_17 = arith.constant dense<0.000000e+00> : vector<286x32xf32>
    %32 = tpu.matmul %29, %31, %cst_17 {dimension_numbers = #tpu.dot_dimension_numbers<[1], [0], [0], [1], [0, 0, 1, 1], [], []>} : vector<286x4xbf16>, vector<4x32xbf16>, vector<286x32xf32> -> vector<286x32xf32>
    %33 = arith.addf %27, %32 : vector<286x32xf32>
    %34 = vector.extract_strided_slice %2 {offsets = [20, 0], sizes = [286, 4], strides = [1, 1]} : vector<324x4xf32> to vector<286x4xf32>
    %35 = arith.truncf %34 : vector<286x4xf32> to vector<286x4xbf16>
    %c5 = arith.constant 5 : index
    %c0_18 = arith.constant 0 : index
    %c0_19 = arith.constant 0 : index
    %36 = vector.load %arg3[%c5, %c0_18, %c0_19] : memref<9x4x32xbf16, #tpu.memory_space<vmem>>, vector<1x4x32xbf16>
    %37 = vector.shape_cast %36 : vector<1x4x32xbf16> to vector<4x32xbf16>
    %cst_20 = arith.constant dense<0.000000e+00> : vector<286x32xf32>
    %38 = tpu.matmul %35, %37, %cst_20 {dimension_numbers = #tpu.dot_dimension_numbers<[1], [0], [0], [1], [0, 0, 1, 1], [], []>} : vector<286x4xbf16>, vector<4x32xbf16>, vector<286x32xf32> -> vector<286x32xf32>
    %39 = arith.addf %33, %38 : vector<286x32xf32>
    %40 = vector.extract_strided_slice %2 {offsets = [36, 0], sizes = [286, 4], strides = [1, 1]} : vector<324x4xf32> to vector<286x4xf32>
    %41 = arith.truncf %40 : vector<286x4xf32> to vector<286x4xbf16>
    %c6 = arith.constant 6 : index
    %c0_21 = arith.constant 0 : index
    %c0_22 = arith.constant 0 : index
    %42 = vector.load %arg3[%c6, %c0_21, %c0_22] : memref<9x4x32xbf16, #tpu.memory_space<vmem>>, vector<1x4x32xbf16>
    %43 = vector.shape_cast %42 : vector<1x4x32xbf16> to vector<4x32xbf16>
    %cst_23 = arith.constant dense<0.000000e+00> : vector<286x32xf32>
    %44 = tpu.matmul %41, %43, %cst_23 {dimension_numbers = #tpu.dot_dimension_numbers<[1], [0], [0], [1], [0, 0, 1, 1], [], []>} : vector<286x4xbf16>, vector<4x32xbf16>, vector<286x32xf32> -> vector<286x32xf32>
    %45 = arith.addf %39, %44 : vector<286x32xf32>
    %46 = vector.extract_strided_slice %2 {offsets = [37, 0], sizes = [286, 4], strides = [1, 1]} : vector<324x4xf32> to vector<286x4xf32>
    %47 = arith.truncf %46 : vector<286x4xf32> to vector<286x4xbf16>
    %c7 = arith.constant 7 : index
    %c0_24 = arith.constant 0 : index
    %c0_25 = arith.constant 0 : index
    %48 = vector.load %arg3[%c7, %c0_24, %c0_25] : memref<9x4x32xbf16, #tpu.memory_space<vmem>>, vector<1x4x32xbf16>
    %49 = vector.shape_cast %48 : vector<1x4x32xbf16> to vector<4x32xbf16>
    %cst_26 = arith.constant dense<0.000000e+00> : vector<286x32xf32>
    %50 = tpu.matmul %47, %49, %cst_26 {dimension_numbers = #tpu.dot_dimension_numbers<[1], [0], [0], [1], [0, 0, 1, 1], [], []>} : vector<286x4xbf16>, vector<4x32xbf16>, vector<286x32xf32> -> vector<286x32xf32>
    %51 = arith.addf %45, %50 : vector<286x32xf32>
    %52 = vector.extract_strided_slice %2 {offsets = [38, 0], sizes = [286, 4], strides = [1, 1]} : vector<324x4xf32> to vector<286x4xf32>
    %53 = arith.truncf %52 : vector<286x4xf32> to vector<286x4xbf16>
    %c8 = arith.constant 8 : index
    %c0_27 = arith.constant 0 : index
    %c0_28 = arith.constant 0 : index
    %54 = vector.load %arg3[%c8, %c0_27, %c0_28] : memref<9x4x32xbf16, #tpu.memory_space<vmem>>, vector<1x4x32xbf16>
    %55 = vector.shape_cast %54 : vector<1x4x32xbf16> to vector<4x32xbf16>
    %cst_29 = arith.constant dense<0.000000e+00> : vector<286x32xf32>
    %56 = tpu.matmul %53, %55, %cst_29 {dimension_numbers = #tpu.dot_dimension_numbers<[1], [0], [0], [1], [0, 0, 1, 1], [], []>} : vector<286x4xbf16>, vector<4x32xbf16>, vector<286x32xf32> -> vector<286x32xf32>
    %57 = arith.addf %51, %56 : vector<286x32xf32>
    %c0_30 = arith.constant 0 : index
    %c0_31 = arith.constant 0 : index
    %58 = vector.load %arg4[%c0_30, %c0_31] : memref<1x32xf32, #tpu.memory_space<vmem>>, vector<1x32xf32>
    %59 = vector.broadcast %58 : vector<1x32xf32> to vector<286x32xf32>
    %60 = arith.addf %57, %59 : vector<286x32xf32>
    %cst_32 = arith.constant 0.000000e+00 : f32
    %61 = vector.broadcast %cst_32 : f32 to vector<286x32xf32>
    %62 = arith.maximumf %60, %61 : vector<286x32xf32>
    %c0_33 = arith.constant 0 : index
    %c0_34 = arith.constant 0 : index
    %63 = vector.load %arg2[%c0_33, %c0_34] : memref<286x1xf32, #tpu.memory_space<vmem>>, vector<286x1xf32>
    %64 = vector.broadcast %63 : vector<286x1xf32> to vector<286x32xf32>
    %65 = arith.mulf %62, %64 : vector<286x32xf32>
    %cst_35 = arith.constant dense<0.000000e+00> : vector<32xf32>
    %66 = vector.multi_reduction <add>, %65, %cst_35 [0] : vector<286x32xf32> to vector<32xf32>
    %67 = vector.shape_cast %66 : vector<32xf32> to vector<1x32xf32>
    %cst_36 = arith.constant 3.906250e-03 : f32
    %68 = vector.broadcast %cst_36 : f32 to vector<1x32xf32>
    %69 = arith.mulf %67, %68 : vector<1x32xf32>
    %70 = arith.truncf %69 : vector<1x32xf32> to vector<1x32xbf16>
    %c0_37 = arith.constant 0 : index
    %c0_38 = arith.constant 0 : index
    %71 = vector.load %arg5[%c0_37, %c0_38] : memref<32x128xbf16, #tpu.memory_space<vmem>>, vector<32x128xbf16>
    %cst_39 = arith.constant dense<0.000000e+00> : vector<1x128xf32>
    %72 = tpu.matmul %70, %71, %cst_39 {dimension_numbers = #tpu.dot_dimension_numbers<[1], [0], [0], [1], [0, 0, 1, 1], [], []>} : vector<1x32xbf16>, vector<32x128xbf16>, vector<1x128xf32> -> vector<1x128xf32>
    %c0_40 = arith.constant 0 : index
    %c0_41 = arith.constant 0 : index
    %73 = vector.load %arg6[%c0_40, %c0_41] : memref<1x128xf32, #tpu.memory_space<vmem>>, vector<1x128xf32>
    %74 = arith.addf %72, %73 : vector<1x128xf32>
    %c0_42 = arith.constant 0 : index
    %c0_43 = arith.constant 0 : index
    %c0_44 = arith.constant 0 : index
    %75 = vector.load %arg7[%c0_42, %c0_43, %c0_44] : memref<1x1x128xf32, #tpu.memory_space<vmem>>, vector<1x1x128xf32>
    %76 = vector.shape_cast %75 : vector<1x1x128xf32> to vector<1x128xf32>
    %77 = vector.shape_cast %74 : vector<1x128xf32> to vector<1x1x128xf32>
    tpu.vector_store %arg7[%c0_42, %c0_43, %c0_44], %77 {strides = array<i32>} : memref<1x1x128xf32, #tpu.memory_space<vmem>>, vector<1x1x128xf32>,
    return
  }
  func.func @transform_0(%arg0: i32) -> (i32, i32, i32) {
    %c0_i32 = arith.constant 0 : i32
    %c0_i32_0 = arith.constant 0 : i32
    %c0_i32_1 = arith.constant 0 : i32
    return %arg0, %c0_i32, %c0_i32_0 : i32, i32, i32
  }
  func.func @transform_1(%arg0: i32) -> (i32, i32) {
    %c0_i32 = arith.constant 0 : i32
    %c0_i32_0 = arith.constant 0 : i32
    %c0_i32_1 = arith.constant 0 : i32
    return %c0_i32, %c0_i32_0 : i32, i32
  }
  func.func @transform_2(%arg0: i32) -> (i32, i32, i32) {
    %c0_i32 = arith.constant 0 : i32
    %c0_i32_0 = arith.constant 0 : i32
    %c0_i32_1 = arith.constant 0 : i32
    %c0_i32_2 = arith.constant 0 : i32
    return %c0_i32, %c0_i32_0, %c0_i32_1 : i32, i32, i32
  }
  func.func @transform_3(%arg0: i32) -> (i32, i32) {
    %c0_i32 = arith.constant 0 : i32
    %c0_i32_0 = arith.constant 0 : i32
    %c0_i32_1 = arith.constant 0 : i32
    return %c0_i32, %c0_i32_0 : i32, i32
  }
  func.func @transform_4(%arg0: i32) -> (i32, i32) {
    %c0_i32 = arith.constant 0 : i32
    %c0_i32_0 = arith.constant 0 : i32
    %c0_i32_1 = arith.constant 0 : i32
    return %c0_i32, %c0_i32_0 : i32, i32
  }
  func.func @transform_5(%arg0: i32) -> (i32, i32) {
    %c0_i32 = arith.constant 0 : i32
    %c0_i32_0 = arith.constant 0 : i32
    %c0_i32_1 = arith.constant 0 : i32
    return %c0_i32, %c0_i32_0 : i32, i32
  }
  func.func @transform_6(%arg0: i32) -> (i32, i32, i32) {
    %c0_i32 = arith.constant 0 : i32
    %c0_i32_0 = arith.constant 0 : i32
    %c0_i32_1 = arith.constant 0 : i32
    return %arg0, %c0_i32, %c0_i32_0 : i32, i32, i32
  }
}

</mosaic_0001>

<llo_original>
// kernel: vit_merged_forward.1
$region0: #{vit_merged_forward.1}
  #allocation0 [shape = 'u32[]', space=smem, size = 0x4, offset = 0x4, fixed_abs, tag = 'smem constant byte address 0x4 - core index']
  #allocation1 [shape = 'u32[144,128]{1,0:T(1,128)}', space=vmem, size = 0x12000, scoped, tag = 'internal scratch']
  %s0 = inlined_call_operand.vmem [shape: bf16[2,324,4], index: 0, kind: input, shape index: {}]
  %s1 = inlined_call_operand.vmem [shape: f32[286,1], index: 1, kind: input, shape index: {}]
  %s2 = inlined_call_operand.vmem [shape: bf16[9,4,32], index: 2, kind: input, shape index: {}]
  %s3 = inlined_call_operand.vmem [shape: f32[1,32], index: 3, kind: input, shape index: {}]
  %s4 = inlined_call_operand.vmem [shape: bf16[32,128], index: 4, kind: input, shape index: {}]
  %s5 = inlined_call_operand.vmem [shape: f32[1,128], index: 5, kind: input, shape index: {}]
  %s6 = inlined_call_operand.hbm [shape: f32[2,1,128], index: 6, kind: output, shape index: {}]
  %s7 = sld [smem:[#allocation0]]
  $region57: #{vit_merged_forward.1} parent=0
    _
  %s9 = ssub.s32 1, %s7
  %s10 = scalar_select 0, %s9, %s7
  $region1: #{vit_merged_forward.1} parent=0
    #allocation2 [shape = 'u8[1024]{0}', space=vmem, size = 0x400, scoped, tag = 'output window, operand 0']
    #allocation3 [shape = 's32[2]{0}', space=sflag, size = 0x8, scoped, tag = 'scoped memory for vit_merged_forward.1']
    %11 = vsyncpa [#allocation3], 0
    %s12 = scalar_lea.sflag [#allocation3], 1
    %13 = vsyncpa %s12, 0
    loop: start=0, step=1, limit=4
    $region2: #{vit_merged_forward.1} parent=1 // loop_pre_header
      _
    $region3: #{vit_merged_forward.1} parent=1 // loop_header
      %s15 = sphi 0, %s19
      %p16 = scmp.ge.s32.totalorder %s15, 4
      %s25 = sphi 0, %s27
      %s28 = sphi 0, %s25
      %s29 = sphi 0, %s28
      %s45 = sphi 0, %s29
      %s49 = sphi 0, %s49
      %s51 = sphi 0, %s49
      %s52 = sphi 0, %s51
      %s66 = sphi 0, %s52
      %s70 = sphi 0, %s70
      %s72 = sphi 0, %s70
      %s73 = sphi 0, %s72
      %s87 = sphi 0, %s73
      %s91 = sphi 0, %s91
      %s93 = sphi 0, %s91
      %s94 = sphi 0, %s93
      %s108 = sphi 0, %s94
      %s112 = sphi 0, %s112
      %s114 = sphi 0, %s112
      %s115 = sphi 0, %s114
      %s129 = sphi 0, %s115
      %s133 = sphi 0, %s133
      %s135 = sphi 0, %s133
      %s136 = sphi 0, %s135
      %s150 = sphi 0, %s136
      %s156 = sphi 0, %s158
      %s159 = sphi 0, %s156
      %s160 = sphi 0, %s159
      %s176 = sphi 0, %s160
    $region4: #{vit_merged_forward.1} parent=1 // loop_header_branch
      %18 = sbr.rel (%p16) target = $region8
    $region5: #{vit_merged_forward.1} parent=1 // loop_body
      %s20 = ssub.s32 %s15, 1
      %s21 = ssub.s32 %s15, 2
      %s22 = sadd.s32 %s15, 1
      %s23 = ssub.s32 %s15, %s22
      %p24 = scmp.eq.s32.totalorder %s23, 0
      %s26 = sadd.s32 %s25, 1
      %s27 = scalar_select %p24, %s25, %s26
      %p30 = pneg %p24
      %p31 = scmp.eq.s32.totalorder %s15, 1
      %p32 = por %p30, %p31
      %p33 = scmp.ne.s32.totalorder %s25, %s28
      %p34 = scmp.eq.s32.totalorder %s15, 0
      %p35 = por %p33, %p34
      %p36 = scmp.ne.s32.totalorder %s25, %s28
      %p37 = scmp.eq.s32.totalorder %s20, 1
      %p38 = por %p36, %p37
      %p39 = scmp.ne.s32.totalorder %s28, %s29
      %p40 = scmp.eq.s32.totalorder %s20, 0
      %p41 = por %p39, %p40
      %p42 = scmp.ne.s32.totalorder %s28, %s29
      %p43 = scmp.eq.s32.totalorder %s21, 1
      %p44 = por %p42, %p43
      %p46 = scmp.ne.s32.totalorder %s29, %s45
      %p47 = scmp.eq.s32.totalorder %s21, 0
      %p48 = por %p46, %p47
      %s50 = sadd.s32 %s49, 1
      %p53 = scmp.eq.s32.totalorder %s15, 1
      %p54 = scmp.ne.s32.totalorder %s49, %s51
      %p55 = scmp.eq.s32.totalorder %s15, 0
      %p56 = por %p54, %p55
      %p57 = scmp.ne.s32.totalorder %s49, %s51
      %p58 = scmp.eq.s32.totalorder %s20, 1
      %p59 = por %p57, %p58
      %p60 = scmp.ne.s32.totalorder %s51, %s52
      %p61 = scmp.eq.s32.totalorder %s20, 0
      %p62 = por %p60, %p61
      %p63 = scmp.ne.s32.totalorder %s51, %s52
      %p64 = scmp.eq.s32.totalorder %s21, 1
      %p65 = por %p63, %p64
      %p67 = scmp.ne.s32.totalorder %s52, %s66
      %p68 = scmp.eq.s32.totalorder %s21, 0
      %p69 = por %p67, %p68
      %s71 = sadd.s32 %s70, 1
      %p74 = scmp.eq.s32.totalorder %s15, 1
      %p75 = scmp.ne.s32.totalorder %s70, %s72
      %p76 = scmp.eq.s32.totalorder %s15, 0
      %p77 = por %p75, %p76
      %p78 = scmp.ne.s32.totalorder %s70, %s72
      %p79 = scmp.eq.s32.totalorder %s20, 1
      %p80 = por %p78, %p79
      %p81 = scmp.ne.s32.totalorder %s72, %s73
      %p82 = scmp.eq.s32.totalorder %s20, 0
      %p83 = por %p81, %p82
      %p84 = scmp.ne.s32.totalorder %s72, %s73
      %p85 = scmp.eq.s32.totalorder %s21, 1
      %p86 = por %p84, %p85
      %p88 = scmp.ne.s32.totalorder %s73, %s87
      %p89 = scmp.eq.s32.totalorder %s21, 0
      %p90 = por %p88, %p89
      %s92 = sadd.s32 %s91, 1
      %p95 = scmp.eq.s32.totalorder %s15, 1
      %p96 = scmp.ne.s32.totalorder %s91, %s93
      %p97 = scmp.eq.s32.totalorder %s15, 0
      %p98 = por %p96, %p97
      %p99 = scmp.ne.s32.totalorder %s91, %s93
      %p100 = scmp.eq.s32.totalorder %s20, 1
      %p101 = por %p99, %p100
      %p102 = scmp.ne.s32.totalorder %s93, %s94
      %p103 = scmp.eq.s32.totalorder %s20, 0
      %p104 = por %p102, %p103
      %p105 = scmp.ne.s32.totalorder %s93, %s94
      %p106 = scmp.eq.s32.totalorder %s21, 1
      %p107 = por %p105, %p106
      %p109 = scmp.ne.s32.totalorder %s94, %s108
      %p110 = scmp.eq.s32.totalorder %s21, 0
      %p111 = por %p109, %p110
      %s113 = sadd.s32 %s112, 1
      %p116 = scmp.eq.s32.totalorder %s15, 1
      %p117 = scmp.ne.s32.totalorder %s112, %s114
      %p118 = scmp.eq.s32.totalorder %s15, 0
      %p119 = por %p117, %p118
      %p120 = scmp.ne.s32.totalorder %s112, %s114
      %p121 = scmp.eq.s32.totalorder %s20, 1
      %p122 = por %p120, %p121
      %p123 = scmp.ne.s32.totalorder %s114, %s115
      %p124 = scmp.eq.s32.totalorder %s20, 0
      %p125 = por %p123, %p124
      %p126 = scmp.ne.s32.totalorder %s114, %s115
      %p127 = scmp.eq.s32.totalorder %s21, 1
      %p128 = por %p126, %p127
      %p130 = scmp.ne.s32.totalorder %s115, %s129
      %p131 = scmp.eq.s32.totalorder %s21, 0
      %p132 = por %p130, %p131
      %s134 = sadd.s32 %s133, 1
      %p137 = scmp.eq.s32.totalorder %s15, 1
      %p138 = scmp.ne.s32.totalorder %s133, %s135
      %p139 = scmp.eq.s32.totalorder %s15, 0
      %p140 = por %p138, %p139
      %p141 = scmp.ne.s32.totalorder %s133, %s135
      %p142 = scmp.eq.s32.totalorder %s20, 1
      %p143 = por %p141, %p142
      %p144 = scmp.ne.s32.totalorder %s135, %s136
      %p145 = scmp.eq.s32.totalorder %s20, 0
      %p146 = por %p144, %p145
      %p147 = scmp.ne.s32.totalorder %s135, %s136
      %p148 = scmp.eq.s32.totalorder %s21, 1
      %p149 = por %p147, %p148
      %p151 = scmp.ne.s32.totalorder %s136, %s150
      %p152 = scmp.eq.s32.totalorder %s21, 0
      %p153 = por %p151, %p152
      %s154 = ssub.s32 %s15, %s22
      %p155 = scmp.eq.s32.totalorder %s154, 0
      %s157 = sadd.s32 %s156, 1
      %s158 = scalar_select %p155, %s156, %s157
      %p161 = pneg %p155
      %p162 = scmp.eq.s32.totalorder %s15, 1
      %p163 = por %p161, %p162
      %p164 = scmp.ne.s32.totalorder %s156, %s159
      %p165 = scmp.eq.s32.totalorder %s15, 0
      %p166 = por %p164, %p165
      %p167 = scmp.ne.s32.totalorder %s156, %s159
      %p168 = scmp.eq.s32.totalorder %s20, 1
      %p169 = por %p167, %p168
      %p170 = scmp.ne.s32.totalorder %s159, %s160
      %p171 = scmp.eq.s32.totalorder %s20, 0
      %p172 = por %p170, %p171
      %p173 = scmp.ne.s32.totalorder %s159, %s160
      %p174 = scmp.eq.s32.totalorder %s21, 1
      %p175 = por %p173, %p174
      %p177 = scmp.ne.s32.totalorder %s160, %s176
      %p178 = scmp.eq.s32.totalorder %s21, 0
      %p179 = por %p177, %p178
      %p180 = scmp.le.s32.totalorder 1, %s15
      %p181 = scmp.lt.s32.totalorder %s15, 3
      %p182 = pnand %p180, %p181
      %p183 = pneg %p182
      // Predicated region
      $region9: #{vit_merged_forward.1} parent=5 // pred_check
        _
      $region10: #{vit_merged_forward.1} parent=5 // pred_check_branch
        %185 = sbr.rel (%p182) target = $region12
      $region11: #{vit_merged_forward.1} parent=5 // pred_region
        %s186 = ssub.s32 %s15, 1
        // Predicated region
        $region13: #{vit_merged_forward.1} parent=11 // pred_check
          %p187 = pneg %p62
        $region14: #{vit_merged_forward.1} parent=11 // pred_check_branch
          %189 = sbr.rel (%p187) target = $region16
        $region15: #{vit_merged_forward.1} parent=11 // pred_region
          _
        $region16: #{vit_merged_forward.1} parent=11 // pred_fallthru
          _
        // Predicated region
        $region17: #{vit_merged_forward.1} parent=11 // pred_check
          %p190 = pneg %p83
        $region18: #{vit_merged_forward.1} parent=11 // pred_check_branch
          %192 = sbr.rel (%p190) target = $region20
        $region19: #{vit_merged_forward.1} parent=11 // pred_region
          _
        $region20: #{vit_merged_forward.1} parent=11 // pred_fallthru
          _
        // Predicated region
        $region21: #{vit_merged_forward.1} parent=11 // pred_check
          %p193 = pneg %p104
        $region22: #{vit_merged_forward.1} parent=11 // pred_check_branch
          %195 = sbr.rel (%p193) target = $region24
        $region23: #{vit_merged_forward.1} parent=11 // pred_region
          _
        $region24: #{vit_merged_forward.1} parent=11 // pred_fallthru
          _
        // Predicated region
        $region25: #{vit_merged_forward.1} parent=11 // pred_check
          %p196 = pneg %p125
        $region26: #{vit_merged_forward.1} parent=11 // pred_check_branch
          %198 = sbr.rel (%p196) target = $region28
        $region27: #{vit_merged_forward.1} parent=11 // pred_region
          _
        $region28: #{vit_merged_forward.1} parent=11 // pred_fallthru
          _
        // Predicated region
        $region29: #{vit_merged_forward.1} parent=11 // pred_check
          %p199 = pneg %p146
        $region30: #{vit_merged_forward.1} parent=11 // pred_check_branch
          %201 = sbr.rel (%p199) target = $region32
        $region31: #{vit_merged_forward.1} parent=11 // pred_region
          _
        $region32: #{vit_merged_forward.1} parent=11 // pred_fallthru
          _
      $region12: #{vit_merged_forward.1} parent=5 // pred_fallthru
        _
      %p202 = scmp.lt.s32.totalorder %s15, 2
      // Predicated region
      $region33: #{vit_merged_forward.1} parent=5 // pred_check
        %p203 = pneg %p202
      $region34: #{vit_merged_forward.1} parent=5 // pred_check_branch
        %205 = sbr.rel (%p203) target = $region36
      $region35: #{vit_merged_forward.1} parent=5 // pred_region
        // Predicated region
        $region37: #{vit_merged_forward.1} parent=35 // pred_check
          %p206 = pneg %p35
        $region38: #{vit_merged_forward.1} parent=35 // pred_check_branch
          %208 = sbr.rel (%p206) target = $region40
        $region39: #{vit_merged_forward.1} parent=35 // pred_region
          %p209 = scmp.lt.s32.totalorder %s15, 1
          %s210 = scalar_select %p209, %s15, 1
          %s211 = smul.addr %s210, 41
          %s212 = smul.addr %s211, 4
          %s213 = scalar_lea.vmem %s0, %s212
        $region40: #{vit_merged_forward.1} parent=35 // pred_fallthru
          _
      $region36: #{vit_merged_forward.1} parent=5 // pred_fallthru
        _
      %p214 = scmp.le.s32.totalorder 1, %s15
      %p215 = scmp.lt.s32.totalorder %s15, 3
      %p216 = pnand %p214, %p215
      %p217 = pneg %p216
      // Predicated region
      $region41: #{vit_merged_forward.1} parent=5 // pred_check
        _
      $region42: #{vit_merged_forward.1} parent=5 // pred_check_branch
        %219 = sbr.rel (%p216) target = $region44
      $region43: #{vit_merged_forward.1} parent=5 // pred_region
        %s220 = ssub.s32 %s15, 1
        %p221 = scmp.lt.s32.totalorder %s20, 1
        %s222 = scalar_select %p221, %s20, 1
        %s223 = smul.addr %s222, 41
        %s224 = smul.addr %s223, 4
        %s225 = scalar_lea.vmem %s0, %s224
        %p226 = pneg %p41
        %p227 = pneg %p38
        %p228 = pneg %p62
        %p229 = pneg %p59
        %p230 = pneg %p83
        %p231 = pneg %p80
        %p232 = pneg %p104
        %p233 = pneg %p101
        %p234 = pneg %p125
        %p235 = pneg %p122
        %p236 = pneg %p146
        %p237 = pneg %p143
        %p238 = pneg %p172
        %p239 = pneg %p169
        %s240 = sand.u32 %s159, 1
        %s241 = scalar_lea.sflag [#allocation3], %s240
        %s242 = sand.u32 %s159, 1
        %s243 = scalar_lea.vmem [#allocation2], %s242
        %p244 = scmp.lt.s32.totalorder %s20, 1
        %s245 = scalar_select %p244, %s20, 1
        %s246 = smul.addr %s245, 41
        %s247 = smul.addr %s246, 4
        %s248 = scalar_lea.vmem %s0, %s247
        %v250 = vld [vmem:[%s248] sm:$0xf]
        %v251 = vld [vmem:[%s248 + $0x4] sm:$0xf]
        %v252 = vld [vmem:[%s248 + $0x8] sm:$0xf]
        %v253 = vld [vmem:[%s248 + $0xc] sm:$0xf]
        %v254 = vld [vmem:[%s248 + $0x10] sm:$0xf]
        %v255 = vld [vmem:[%s248 + $0x14] sm:$0xf]
        %v256 = vld [vmem:[%s248 + $0x18] sm:$0xf]
        %v257 = vld [vmem:[%s248 + $0x1c] sm:$0xf]
        %v258 = vld [vmem:[%s248 + $0x20] sm:$0xf]
        %v259 = vld [vmem:[%s248 + $0x24] sm:$0xf]
        %v260 = vld [vmem:[%s248 + $0x28] sm:$0xf]
        %v261 = vld [vmem:[%s248 + $0x2c] sm:$0xf]
        %v262 = vld [vmem:[%s248 + $0x30] sm:$0xf]
        %v263 = vld [vmem:[%s248 + $0x34] sm:$0xf]
        %v264 = vld [vmem:[%s248 + $0x38] sm:$0xf]
        %v265 = vld [vmem:[%s248 + $0x3c] sm:$0xf]
        %v266 = vld [vmem:[%s248 + $0x40] sm:$0xf]
        %v267 = vld [vmem:[%s248 + $0x44] sm:$0xf]
        %v268 = vld [vmem:[%s248 + $0x48] sm:$0xf]
        %v269 = vld [vmem:[%s248 + $0x4c] sm:$0xf]
        %v270 = vld [vmem:[%s248 + $0x50] sm:$0xf]
        %v271 = vld [vmem:[%s248 + $0x54] sm:$0xf]
        %v272 = vld [vmem:[%s248 + $0x58] sm:$0xf]
        %v273 = vld [vmem:[%s248 + $0x5c] sm:$0xf]
        %v274 = vld [vmem:[%s248 + $0x60] sm:$0xf]
        %v275 = vld [vmem:[%s248 + $0x64] sm:$0xf]
        %v276 = vld [vmem:[%s248 + $0x68] sm:$0xf]
        %v277 = vld [vmem:[%s248 + $0x6c] sm:$0xf]
        %v278 = vld [vmem:[%s248 + $0x70] sm:$0xf]
        %v279 = vld [vmem:[%s248 + $0x74] sm:$0xf]
        %v280 = vld [vmem:[%s248 + $0x78] sm:$0xf]
        %v281 = vld [vmem:[%s248 + $0x7c] sm:$0xf]
        %v282 = vld [vmem:[%s248 + $0x80] sm:$0xf]
        %v283 = vld [vmem:[%s248 + $0x84] sm:$0xf]
        %v284 = vld [vmem:[%s248 + $0x88] sm:$0xf]
        %v285 = vld [vmem:[%s248 + $0x8c] sm:$0xf]
        %v286 = vld [vmem:[%s248 + $0x90] sm:$0xf]
        %v287 = vld [vmem:[%s248 + $0x94] sm:$0xf]
        %v288 = vld [vmem:[%s248 + $0x98] sm:$0xf]
        %v289 = vld [vmem:[%s248 + $0x9c] sm:$0xf]
        %v290 = vld [vmem:[%s248 + $0xa0] sm:$0x3]
        %v291 = vunpack.c.l.bf16 %v250
        %v292 = vunpack.c.l.bf16 %v251
        %v293 = vunpack.c.l.bf16 %v252
        %v294 = vunpack.c.l.bf16 %v253
        %v295 = vunpack.c.l.bf16 %v254
        %v296 = vunpack.c.l.bf16 %v255
        %v297 = vunpack.c.l.bf16 %v256
        %v298 = vunpack.c.l.bf16 %v257
        %v299 = vunpack.c.l.bf16 %v258
        %v300 = vunpack.c.l.bf16 %v259
        %v301 = vunpack.c.l.bf16 %v260
        %v302 = vunpack.c.l.bf16 %v261
        %v303 = vunpack.c.l.bf16 %v262
        %v304 = vunpack.c.l.bf16 %v263
        %v305 = vunpack.c.l.bf16 %v264
        %v306 = vunpack.c.l.bf16 %v265
        %v307 = vunpack.c.l.bf16 %v266
        %v308 = vunpack.c.l.bf16 %v267
        %v309 = vunpack.c.l.bf16 %v268
        %v310 = vunpack.c.l.bf16 %v269
        %v311 = vunpack.c.l.bf16 %v270
        %v312 = vunpack.c.l.bf16 %v271
        %v313 = vunpack.c.l.bf16 %v272
        %v314 = vunpack.c.l.bf16 %v273
        %v315 = vunpack.c.l.bf16 %v274
        %v316 = vunpack.c.l.bf16 %v275
        %v317 = vunpack.c.l.bf16 %v276
        %v318 = vunpack.c.l.bf16 %v277
        %v319 = vunpack.c.l.bf16 %v278
        %v320 = vunpack.c.l.bf16 %v279
        %v321 = vunpack.c.l.bf16 %v280
        %v322 = vunpack.c.l.bf16 %v281
        %v323 = vunpack.c.l.bf16 %v282
        %v324 = vunpack.c.l.bf16 %v283
        %v325 = vunpack.c.l.bf16 %v284
        %v326 = vunpack.c.l.bf16 %v285
        %v327 = vunpack.c.l.bf16 %v286
        %v328 = vunpack.c.l.bf16 %v287
        %v329 = vunpack.c.l.bf16 %v288
        %v330 = vunpack.c.l.bf16 %v289
        %v331 = vunpack.c.l.bf16 %v290
        %v332 = vpack.c.bf16 %v292, %v291
        %v333 = vpack.c.bf16 %v294, %v293
        %v334 = vpack.c.bf16 %v296, %v295
        %v335 = vpack.c.bf16 %v298, %v297
        %v336 = vpack.c.bf16 %v300, %v299
        %v337 = vpack.c.bf16 %v302, %v301
        %v338 = vpack.c.bf16 %v304, %v303
        %v339 = vpack.c.bf16 %v306, %v305
        %v340 = vpack.c.bf16 %v308, %v307
        %v341 = vpack.c.bf16 %v310, %v309
        %v342 = vpack.c.bf16 %v312, %v311
        %v343 = vpack.c.bf16 %v314, %v313
        %v344 = vpack.c.bf16 %v316, %v315
        %v345 = vpack.c.bf16 %v318, %v317
        %v346 = vpack.c.bf16 %v320, %v319
        %v347 = vpack.c.bf16 %v322, %v321
        %v348 = vpack.c.bf16 %v324, %v323
        %v349 = vpack.c.bf16 %v326, %v325
        %v350 = vld [vmem:[%s2] sm:$0x3]
        %s351 = scalar_lea.vmem %s2, 2
        %v352 = vld [vmem:[%s351] sm:$0x3]
        %vm353 = vsmask.f32 7424
        %v355 = vshrl.u32 %v332, 16
        %v357 = vshll.u32 %v332, 16
        %v359 = vrot.slane %v357, 1
        %v360 = vor.u32 %v355, %v359
        %v362 = vshll.u32 %v333, 16
        %v364 = vrot.slane %v362, 1
        %v365 = vsel %vm353, %v360, %v364
        %v366 = vshrl.u32 %v333, 16
        %v368 = vor.u32 %v366, %v364
        %v370 = vshll.u32 %v334, 16
        %v372 = vrot.slane %v370, 1
        %v373 = vsel %vm353, %v368, %v372
        %v374 = vshrl.u32 %v334, 16
        %v376 = vor.u32 %v374, %v372
        %v378 = vshll.u32 %v335, 16
        %v380 = vrot.slane %v378, 1
        %v381 = vsel %vm353, %v376, %v380
        %v382 = vshrl.u32 %v335, 16
        %v384 = vor.u32 %v382, %v380
        %v386 = vshll.u32 %v336, 16
        %v388 = vrot.slane %v386, 1
        %v389 = vsel %vm353, %v384, %v388
        %v390 = vshrl.u32 %v336, 16
        %v392 = vor.u32 %v390, %v388
        %v394 = vshll.u32 %v337, 16
        %v396 = vrot.slane %v394, 1
        %v397 = vsel %vm353, %v392, %v396
        %v398 = vshrl.u32 %v337, 16
        %v400 = vor.u32 %v398, %v396
        %v402 = vshll.u32 %v338, 16
        %v404 = vrot.slane %v402, 1
        %v405 = vsel %vm353, %v400, %v404
        %v406 = vshrl.u32 %v338, 16
        %v408 = vor.u32 %v406, %v404
        %v410 = vshll.u32 %v339, 16
        %v412 = vrot.slane %v410, 1
        %v413 = vsel %vm353, %v408, %v412
        %v414 = vshrl.u32 %v339, 16
        %v416 = vor.u32 %v414, %v412
        %v418 = vshll.u32 %v340, 16
        %v420 = vrot.slane %v418, 1
        %v421 = vsel %vm353, %v416, %v420
        %v422 = vshrl.u32 %v340, 16
        %v424 = vor.u32 %v422, %v420
        %v426 = vshll.u32 %v341, 16
        %v428 = vrot.slane %v426, 1
        %v429 = vsel %vm353, %v424, %v428
        %v430 = vshrl.u32 %v341, 16
        %v432 = vor.u32 %v430, %v428
        %v434 = vshll.u32 %v342, 16
        %v436 = vrot.slane %v434, 1
        %v437 = vsel %vm353, %v432, %v436
        %v438 = vshrl.u32 %v342, 16
        %v440 = vor.u32 %v438, %v436
        %v442 = vshll.u32 %v343, 16
        %v444 = vrot.slane %v442, 1
        %v445 = vsel %vm353, %v440, %v444
        %v446 = vshrl.u32 %v343, 16
        %v448 = vor.u32 %v446, %v444
        %v450 = vshll.u32 %v344, 16
        %v452 = vrot.slane %v450, 1
        %v453 = vsel %vm353, %v448, %v452
        %v454 = vshrl.u32 %v344, 16
        %v456 = vor.u32 %v454, %v452
        %v458 = vshll.u32 %v345, 16
        %v460 = vrot.slane %v458, 1
        %v461 = vsel %vm353, %v456, %v460
        %v462 = vshrl.u32 %v345, 16
        %v464 = vor.u32 %v462, %v460
        %v466 = vshll.u32 %v346, 16
        %v468 = vrot.slane %v466, 1
        %v469 = vsel %vm353, %v464, %v468
        %v470 = vshrl.u32 %v346, 16
        %v472 = vor.u32 %v470, %v468
        %v474 = vshll.u32 %v347, 16
        %v476 = vrot.slane %v474, 1
        %v477 = vsel %vm353, %v472, %v476
        %v478 = vshrl.u32 %v347, 16
        %v480 = vor.u32 %v478, %v476
        %v482 = vshll.u32 %v348, 16
        %v484 = vrot.slane %v482, 1
        %v485 = vsel %vm353, %v480, %v484
        %v486 = vshrl.u32 %v348, 16
        %v488 = vor.u32 %v486, %v484
        %v490 = vshll.u32 %v349, 16
        %v492 = vrot.slane %v490, 1
        %v493 = vsel %vm353, %v488, %v492
        %v494 = vshrl.u32 %v349, 16
        %v496 = vor.u32 %v494, %v492
        %vm497 = vcmask 31744
        %v499 = vsel %vm497, %v365, 0
        %v502 = vsel %vm497, %v373, 0
        %v505 = vsel %vm497, %v381, 0
        %v508 = vsel %vm497, %v389, 0
        %v511 = vsel %vm497, %v397, 0
        %v514 = vsel %vm497, %v405, 0
        %v517 = vsel %vm497, %v413, 0
        %v520 = vsel %vm497, %v421, 0
        %v523 = vsel %vm497, %v429, 0
        %v526 = vsel %vm497, %v437, 0
        %v529 = vsel %vm497, %v445, 0
        %v532 = vsel %vm497, %v453, 0
        %v535 = vsel %vm497, %v461, 0
        %v538 = vsel %vm497, %v469, 0
        %v541 = vsel %vm497, %v477, 0
        %v544 = vsel %vm497, %v485, 0
        %v547 = vsel %vm497, %v493, 0
        %v550 = vsel %vm497, %v496, 0
        %vm552 = vcmask 1041408
        %v554 = vsel %vm552, %v352, 0
        %556 = vmatprep.subr.bf16.mxu0 0
        %557 = vmatpush1.bf16.msra.mxu0 0
        %558 = vmatprep.subr.bf16.mxu0 0
        %559 = vmatpush1.bf16.msra.mxu0 0
        %560 = vmatprep.subr.bf16.mxu0 0
        %561 = vmatpush1.bf16.msra.mxu0 0
        %562 = vmatprep.subr.bf16.mxu0 0
        %563 = vmatpush1.bf16.msra.mxu0 0
        %564 = vmatprep.subr.bf16.mxu0 0
        %565 = vmatpush1.bf16.msra.mxu0 0
        %566 = vmatprep.subr.bf16.mxu0 0
        %567 = vmatpush1.bf16.msra.mxu0 0
        %568 = vmatprep.subr.bf16.mxu0 0
        %569 = vmatpush1.bf16.msra.mxu0 0
        %570 = vmatprep.subr.bf16.mxu0 0
        %571 = vmatpush1.bf16.msra.mxu0 %v554
        %572 = vmatprep.subr.bf16.mxu0 0
        %573 = vmatpush2.bf16.msra.mxu0 0
        %574 = vmatprep.subr.bf16.mxu0 0
        %575 = vmatpush2.bf16.msra.mxu0 0
        %576 = vmatprep.subr.bf16.mxu0 0
        %577 = vmatpush2.bf16.msra.mxu0 0
        %578 = vmatprep.subr.bf16.mxu0 0
        %579 = vmatpush2.bf16.msra.mxu0 0
        %580 = vmatprep.subr.bf16.mxu0 0
        %581 = vmatpush2.bf16.msra.mxu0 0
        %582 = vmatprep.subr.bf16.mxu0 0
        %583 = vmatpush2.bf16.msra.mxu0 0
        %584 = vmatprep.subr.bf16.mxu0 0
        %585 = vmatpush2.bf16.msra.mxu0 0
        %586 = vmatprep.subr.bf16.mxu0 0
        %587 = vmatpush2.bf16.msra.mxu0 0
        %588 = vmatprep.mubr.bf16.mxu0 0
        %589 = vmatmul.mubr.bf16.gmra.mxu0 %v499
        %v590 = vpop.f32.mrf.mxu0
        %v591 = vadd.f32 0.0, %v590
        %v592 = vpop.f32.mrf.mxu0
        %v593 = vpop.f32.mrf.mxu0
        %v594 = vadd.f32 0.0, %v593
        %v595 = vpop.f32.mrf.mxu0
        %596 = vmatprep.mubr.bf16.mxu0 0
        %597 = vmatmul.mubr.bf16.gmra.mxu0 %v502
        %v598 = vpop.f32.mrf.mxu0
        %v599 = vadd.f32 0.0, %v598
        %v600 = vpop.f32.mrf.mxu0
        %v601 = vpop.f32.mrf.mxu0
        %v602 = vadd.f32 0.0, %v601
        %v603 = vpop.f32.mrf.mxu0
        %604 = vmatprep.mubr.bf16.mxu0 0
        %605 = vmatmul.mubr.bf16.gmra.mxu0 %v505
        %v606 = vpop.f32.mrf.mxu0
        %v607 = vadd.f32 0.0, %v606
        %v608 = vpop.f32.mrf.mxu0
        %v609 = vpop.f32.mrf.mxu0
        %v610 = vadd.f32 0.0, %v609
        %v611 = vpop.f32.mrf.mxu0
        %612 = vmatprep.mubr.bf16.mxu0 0
        %613 = vmatmul.mubr.bf16.gmra.mxu0 %v508
        %v614 = vpop.f32.mrf.mxu0
        %v615 = vadd.f32 0.0, %v614
        %v616 = vpop.f32.mrf.mxu0
        %v617 = vpop.f32.mrf.mxu0
        %v618 = vadd.f32 0.0, %v617
        %v619 = vpop.f32.mrf.mxu0
        %620 = vmatprep.mubr.bf16.mxu0 0
        %621 = vmatmul.mubr.bf16.gmra.mxu0 %v511
        %v622 = vpop.f32.mrf.mxu0
        %v623 = vadd.f32 0.0, %v622
        %v624 = vpop.f32.mrf.mxu0
        %v625 = vpop.f32.mrf.mxu0
        %v626 = vadd.f32 0.0, %v625
        %v627 = vpop.f32.mrf.mxu0
        %628 = vmatprep.mubr.bf16.mxu0 0
        %629 = vmatmul.mubr.bf16.gmra.mxu0 %v514
        %v630 = vpop.f32.mrf.mxu0
        %v631 = vadd.f32 0.0, %v630
        %v632 = vpop.f32.mrf.mxu0
        %v633 = vpop.f32.mrf.mxu0
        %v634 = vadd.f32 0.0, %v633
        %v635 = vpop.f32.mrf.mxu0
        %636 = vmatprep.mubr.bf16.mxu0 0
        %637 = vmatmul.mubr.bf16.gmra.mxu0 %v517
        %v638 = vpop.f32.mrf.mxu0
        %v639 = vadd.f32 0.0, %v638
        %v640 = vpop.f32.mrf.mxu0
        %v641 = vpop.f32.mrf.mxu0
        %v642 = vadd.f32 0.0, %v641
        %v643 = vpop.f32.mrf.mxu0
        %644 = vmatprep.mubr.bf16.mxu0 0
        %645 = vmatmul.mubr.bf16.gmra.mxu0 %v520
        %v646 = vpop.f32.mrf.mxu0
        %v647 = vadd.f32 0.0, %v646
        %v648 = vpop.f32.mrf.mxu0
        %v649 = vpop.f32.mrf.mxu0
        %v650 = vadd.f32 0.0, %v649
        %v651 = vpop.f32.mrf.mxu0
        %652 = vmatprep.mubr.bf16.mxu0 0
        %653 = vmatmul.mubr.bf16.gmra.mxu0 %v523
        %v654 = vpop.f32.mrf.mxu0
        %v655 = vadd.f32 0.0, %v654
        %v656 = vpop.f32.mrf.mxu0
        %v657 = vpop.f32.mrf.mxu0
        %v658 = vadd.f32 0.0, %v657
        %v659 = vpop.f32.mrf.mxu0
        %660 = vmatprep.mubr.bf16.mxu0 0
        %661 = vmatmul.mubr.bf16.gmra.mxu0 %v526
        %v662 = vpop.f32.mrf.mxu0
        %v663 = vadd.f32 0.0, %v662
        %v664 = vpop.f32.mrf.mxu0
        %v665 = vpop.f32.mrf.mxu0
        %v666 = vadd.f32 0.0, %v665
        %v667 = vpop.f32.mrf.mxu0
        %668 = vmatprep.mubr.bf16.mxu0 0
        %669 = vmatmul.mubr.bf16.gmra.mxu0 %v529
        %v670 = vpop.f32.mrf.mxu0
        %v671 = vadd.f32 0.0, %v670
        %v672 = vpop.f32.mrf.mxu0
        %v673 = vpop.f32.mrf.mxu0
        %v674 = vadd.f32 0.0, %v673
        %v675 = vpop.f32.mrf.mxu0
        %676 = vmatprep.mubr.bf16.mxu0 0
        %677 = vmatmul.mubr.bf16.gmra.mxu0 %v532
        %v678 = vpop.f32.mrf.mxu0
        %v679 = vadd.f32 0.0, %v678
        %v680 = vpop.f32.mrf.mxu0
        %v681 = vpop.f32.mrf.mxu0
        %v682 = vadd.f32 0.0, %v681
        %v683 = vpop.f32.mrf.mxu0
        %684 = vmatprep.mubr.bf16.mxu0 0
        %685 = vmatmul.mubr.bf16.gmra.mxu0 %v535
        %v686 = vpop.f32.mrf.mxu0
        %v687 = vadd.f32 0.0, %v686
        %v688 = vpop.f32.mrf.mxu0
        %v689 = vpop.f32.mrf.mxu0
        %v690 = vadd.f32 0.0, %v689
        %v691 = vpop.f32.mrf.mxu0
        %692 = vmatprep.mubr.bf16.mxu0 0
        %693 = vmatmul.mubr.bf16.gmra.mxu0 %v538
        %v694 = vpop.f32.mrf.mxu0
        %v695 = vadd.f32 0.0, %v694
        %v696 = vpop.f32.mrf.mxu0
        %v697 = vpop.f32.mrf.mxu0
        %v698 = vadd.f32 0.0, %v697
        %v699 = vpop.f32.mrf.mxu0
        %700 = vmatprep.mubr.bf16.mxu0 0
        %701 = vmatmul.mubr.bf16.gmra.mxu0 %v541
        %v702 = vpop.f32.mrf.mxu0
        %v703 = vadd.f32 0.0, %v702
        %v704 = vpop.f32.mrf.mxu0
        %v705 = vpop.f32.mrf.mxu0
        %v706 = vadd.f32 0.0, %v705
        %v707 = vpop.f32.mrf.mxu0
        %708 = vmatprep.mubr.bf16.mxu0 0
        %709 = vmatmul.mubr.bf16.gmra.mxu0 %v544
        %v710 = vpop.f32.mrf.mxu0
        %v711 = vadd.f32 0.0, %v710
        %v712 = vpop.f32.mrf.mxu0
        %v713 = vpop.f32.mrf.mxu0
        %v714 = vadd.f32 0.0, %v713
        %v715 = vpop.f32.mrf.mxu0
        %716 = vmatprep.mubr.bf16.mxu0 0
        %717 = vmatmul.mubr.bf16.gmra.mxu0 %v547
        %v718 = vpop.f32.mrf.mxu0
        %v719 = vadd.f32 0.0, %v718
        %v720 = vpop.f32.mrf.mxu0
        %v721 = vpop.f32.mrf.mxu0
        %v722 = vadd.f32 0.0, %v721
        %v723 = vpop.f32.mrf.mxu0
        %724 = vmatprep.mubr.bf16.mxu0 0
        %725 = vmatmul.mubr.bf16.gmra.mxu0 %v550
        %v726 = vpop.f32.mrf.mxu0
        %v727 = vadd.f32 0.0, %v726
        %v728 = vpop.f32.mrf.mxu0
        %v729 = vpop.f32.mrf.mxu0
        %v730 = vadd.f32 0.0, %v729
        %v731 = vpop.f32.mrf.mxu0
        %732 = vdwg.mxu0
        %v733 = vsel %vm497, %v332, 0
        %v735 = vsel %vm497, %v333, 0
        %v737 = vsel %vm497, %v334, 0
        %v739 = vsel %vm497, %v335, 0
        %v741 = vsel %vm497, %v336, 0
        %v743 = vsel %vm497, %v337, 0
        %v745 = vsel %vm497, %v338, 0
        %v747 = vsel %vm497, %v339, 0
        %v749 = vsel %vm497, %v340, 0
        %v751 = vsel %vm497, %v341, 0
        %v753 = vsel %vm497, %v342, 0
        %v755 = vsel %vm497, %v343, 0
        %v757 = vsel %vm497, %v344, 0
        %v759 = vsel %vm497, %v345, 0
        %v761 = vsel %vm497, %v346, 0
        %v763 = vsel %vm497, %v347, 0
        %v765 = vsel %vm497, %v348, 0
        %v767 = vsel %vm497, %v349, 0
        %v770 = vsel %vm552, %v350, 0
        %772 = vmatprep.subr.bf16.mxu0 0
        %773 = vmatpush1.bf16.msra.mxu0 0
        %774 = vmatprep.subr.bf16.mxu0 0
        %775 = vmatpush1.bf16.msra.mxu0 0
        %776 = vmatprep.subr.bf16.mxu0 0
        %777 = vmatpush1.bf16.msra.mxu0 0
        %778 = vmatprep.subr.bf16.mxu0 0
        %779 = vmatpush1.bf16.msra.mxu0 0
        %780 = vmatprep.subr.bf16.mxu0 0
        %781 = vmatpush1.bf16.msra.mxu0 0
        %782 = vmatprep.subr.bf16.mxu0 0
        %783 = vmatpush1.bf16.msra.mxu0 0
        %784 = vmatprep.subr.bf16.mxu0 0
        %785 = vmatpush1.bf16.msra.mxu0 0
        %786 = vmatprep.subr.bf16.mxu0 0
        %787 = vmatpush1.bf16.msra.mxu0 %v770
        %788 = vmatprep.subr.bf16.mxu0 0
        %789 = vmatpush2.bf16.msra.mxu0 0
        %790 = vmatprep.subr.bf16.mxu0 0
        %791 = vmatpush2.bf16.msra.mxu0 0
        %792 = vmatprep.subr.bf16.mxu0 0
        %793 = vmatpush2.bf16.msra.mxu0 0
        %794 = vmatprep.subr.bf16.mxu0 0
        %795 = vmatpush2.bf16.msra.mxu0 0
        %796 = vmatprep.subr.bf16.mxu0 0
        %797 = vmatpush2.bf16.msra.mxu0 0
        %798 = vmatprep.subr.bf16.mxu0 0
        %799 = vmatpush2.bf16.msra.mxu0 0
        %800 = vmatprep.subr.bf16.mxu0 0
        %801 = vmatpush2.bf16.msra.mxu0 0
        %802 = vmatprep.subr.bf16.mxu0 0
        %803 = vmatpush2.bf16.msra.mxu0 0
        %804 = vmatprep.mubr.bf16.mxu0 0
        %805 = vmatmul.mubr.bf16.gmra.mxu0 %v733
        %v806 = vpop.f32.mrf.mxu0
        %v807 = vadd.f32 %v591, %v806
        %v808 = vpop.f32.mrf.mxu0
        %v809 = vpop.f32.mrf.mxu0
        %v810 = vadd.f32 %v594, %v809
        %v811 = vpop.f32.mrf.mxu0
        %812 = vmatprep.mubr.bf16.mxu0 0
        %813 = vmatmul.mubr.bf16.gmra.mxu0 %v735
        %v814 = vpop.f32.mrf.mxu0
        %v815 = vadd.f32 %v599, %v814
        %v816 = vpop.f32.mrf.mxu0
        %v817 = vpop.f32.mrf.mxu0
        %v818 = vadd.f32 %v602, %v817
        %v819 = vpop.f32.mrf.mxu0
        %820 = vmatprep.mubr.bf16.mxu0 0
        %821 = vmatmul.mubr.bf16.gmra.mxu0 %v737
        %v822 = vpop.f32.mrf.mxu0
        %v823 = vadd.f32 %v607, %v822
        %v824 = vpop.f32.mrf.mxu0
        %v825 = vpop.f32.mrf.mxu0
        %v826 = vadd.f32 %v610, %v825
        %v827 = vpop.f32.mrf.mxu0
        %828 = vmatprep.mubr.bf16.mxu0 0
        %829 = vmatmul.mubr.bf16.gmra.mxu0 %v739
        %v830 = vpop.f32.mrf.mxu0
        %v831 = vadd.f32 %v615, %v830
        %v832 = vpop.f32.mrf.mxu0
        %v833 = vpop.f32.mrf.mxu0
        %v834 = vadd.f32 %v618, %v833
        %v835 = vpop.f32.mrf.mxu0
        %836 = vmatprep.mubr.bf16.mxu0 0
        %837 = vmatmul.mubr.bf16.gmra.mxu0 %v741
        %v838 = vpop.f32.mrf.mxu0
        %v839 = vadd.f32 %v623, %v838
        %v840 = vpop.f32.mrf.mxu0
        %v841 = vpop.f32.mrf.mxu0
        %v842 = vadd.f32 %v626, %v841
        %v843 = vpop.f32.mrf.mxu0
        %844 = vmatprep.mubr.bf16.mxu0 0
        %845 = vmatmul.mubr.bf16.gmra.mxu0 %v743
        %v846 = vpop.f32.mrf.mxu0
        %v847 = vadd.f32 %v631, %v846
        %v848 = vpop.f32.mrf.mxu0
        %v849 = vpop.f32.mrf.mxu0
        %v850 = vadd.f32 %v634, %v849
        %v851 = vpop.f32.mrf.mxu0
        %852 = vmatprep.mubr.bf16.mxu0 0
        %853 = vmatmul.mubr.bf16.gmra.mxu0 %v745
        %v854 = vpop.f32.mrf.mxu0
        %v855 = vadd.f32 %v639, %v854
        %v856 = vpop.f32.mrf.mxu0
        %v857 = vpop.f32.mrf.mxu0
        %v858 = vadd.f32 %v642, %v857
        %v859 = vpop.f32.mrf.mxu0
        %860 = vmatprep.mubr.bf16.mxu0 0
        %861 = vmatmul.mubr.bf16.gmra.mxu0 %v747
        %v862 = vpop.f32.mrf.mxu0
        %v863 = vadd.f32 %v647, %v862
        %v864 = vpop.f32.mrf.mxu0
        %v865 = vpop.f32.mrf.mxu0
        %v866 = vadd.f32 %v650, %v865
        %v867 = vpop.f32.mrf.mxu0
        %868 = vmatprep.mubr.bf16.mxu0 0
        %869 = vmatmul.mubr.bf16.gmra.mxu0 %v749
        %v870 = vpop.f32.mrf.mxu0
        %v871 = vadd.f32 %v655, %v870
        %v872 = vpop.f32.mrf.mxu0
        %v873 = vpop.f32.mrf.mxu0
        %v874 = vadd.f32 %v658, %v873
        %v875 = vpop.f32.mrf.mxu0
        %876 = vmatprep.mubr.bf16.mxu0 0
        %877 = vmatmul.mubr.bf16.gmra.mxu0 %v751
        %v878 = vpop.f32.mrf.mxu0
        %v879 = vadd.f32 %v663, %v878
        %v880 = vpop.f32.mrf.mxu0
        %v881 = vpop.f32.mrf.mxu0
        %v882 = vadd.f32 %v666, %v881
        %v883 = vpop.f32.mrf.mxu0
        %884 = vmatprep.mubr.bf16.mxu0 0
        %885 = vmatmul.mubr.bf16.gmra.mxu0 %v753
        %v886 = vpop.f32.mrf.mxu0
        %v887 = vadd.f32 %v671, %v886
        %v888 = vpop.f32.mrf.mxu0
        %v889 = vpop.f32.mrf.mxu0
        %v890 = vadd.f32 %v674, %v889
        %v891 = vpop.f32.mrf.mxu0
        %892 = vmatprep.mubr.bf16.mxu0 0
        %893 = vmatmul.mubr.bf16.gmra.mxu0 %v755
        %v894 = vpop.f32.mrf.mxu0
        %v895 = vadd.f32 %v679, %v894
        %v896 = vpop.f32.mrf.mxu0
        %v897 = vpop.f32.mrf.mxu0
        %v898 = vadd.f32 %v682, %v897
        %v899 = vpop.f32.mrf.mxu0
        %900 = vmatprep.mubr.bf16.mxu0 0
        %901 = vmatmul.mubr.bf16.gmra.mxu0 %v757
        %v902 = vpop.f32.mrf.mxu0
        %v903 = vadd.f32 %v687, %v902
        %v904 = vpop.f32.mrf.mxu0
        %v905 = vpop.f32.mrf.mxu0
        %v906 = vadd.f32 %v690, %v905
        %v907 = vpop.f32.mrf.mxu0
        %908 = vmatprep.mubr.bf16.mxu0 0
        %909 = vmatmul.mubr.bf16.gmra.mxu0 %v759
        %v910 = vpop.f32.mrf.mxu0
        %v911 = vadd.f32 %v695, %v910
        %v912 = vpop.f32.mrf.mxu0
        %v913 = vpop.f32.mrf.mxu0
        %v914 = vadd.f32 %v698, %v913
        %v915 = vpop.f32.mrf.mxu0
        %916 = vmatprep.mubr.bf16.mxu0 0
        %917 = vmatmul.mubr.bf16.gmra.mxu0 %v761
        %v918 = vpop.f32.mrf.mxu0
        %v919 = vadd.f32 %v703, %v918
        %v920 = vpop.f32.mrf.mxu0
        %v921 = vpop.f32.mrf.mxu0
        %v922 = vadd.f32 %v706, %v921
        %v923 = vpop.f32.mrf.mxu0
        %924 = vmatprep.mubr.bf16.mxu0 0
        %925 = vmatmul.mubr.bf16.gmra.mxu0 %v763
        %v926 = vpop.f32.mrf.mxu0
        %v927 = vadd.f32 %v711, %v926
        %v928 = vpop.f32.mrf.mxu0
        %v929 = vpop.f32.mrf.mxu0
        %v930 = vadd.f32 %v714, %v929
        %v931 = vpop.f32.mrf.mxu0
        %932 = vmatprep.mubr.bf16.mxu0 0
        %933 = vmatmul.mubr.bf16.gmra.mxu0 %v765
        %v934 = vpop.f32.mrf.mxu0
        %v935 = vadd.f32 %v719, %v934
        %v936 = vpop.f32.mrf.mxu0
        %v937 = vpop.f32.mrf.mxu0
        %v938 = vadd.f32 %v722, %v937
        %v939 = vpop.f32.mrf.mxu0
        %940 = vmatprep.mubr.bf16.mxu0 0
        %941 = vmatmul.mubr.bf16.gmra.mxu0 %v767
        %v942 = vpop.f32.mrf.mxu0
        %v943 = vadd.f32 %v727, %v942
        %v944 = vpop.f32.mrf.mxu0
        %v945 = vpop.f32.mrf.mxu0
        %v946 = vadd.f32 %v730, %v945
        %v947 = vpop.f32.mrf.mxu0
        %948 = vdwg.mxu0
        %s949 = scalar_lea.vmem %s2, 4
        %v950 = vld [vmem:[%s949] sm:$0x3]
        %vm969 = vcmask 1046528
        %v970 = vrot.slane %v332, 1
        %v971 = vrot.slane %v333, 1
        %v972 = vsel %vm969, %v970, %v971
        %v973 = vrot.slane %v334, 1
        %v974 = vsel %vm969, %v971, %v973
        %v975 = vrot.slane %v335, 1
        %v976 = vsel %vm969, %v973, %v975
        %v977 = vrot.slane %v336, 1
        %v978 = vsel %vm969, %v975, %v977
        %v979 = vrot.slane %v337, 1
        %v980 = vsel %vm969, %v977, %v979
        %v981 = vrot.slane %v338, 1
        %v982 = vsel %vm969, %v979, %v981
        %v983 = vrot.slane %v339, 1
        %v984 = vsel %vm969, %v981, %v983
        %v985 = vrot.slane %v340, 1
        %v986 = vsel %vm969, %v983, %v985
        %v987 = vrot.slane %v341, 1
        %v988 = vsel %vm969, %v985, %v987
        %v989 = vrot.slane %v342, 1
        %v990 = vsel %vm969, %v987, %v989
        %v991 = vrot.slane %v343, 1
        %v992 = vsel %vm969, %v989, %v991
        %v993 = vrot.slane %v344, 1
        %v994 = vsel %vm969, %v991, %v993
        %v995 = vrot.slane %v345, 1
        %v996 = vsel %vm969, %v993, %v995
        %v997 = vrot.slane %v346, 1
        %v998 = vsel %vm969, %v995, %v997
        %v999 = vrot.slane %v347, 1
        %v1000 = vsel %vm969, %v997, %v999
        %v1001 = vrot.slane %v348, 1
        %v1002 = vsel %vm969, %v999, %v1001
        %v1003 = vrot.slane %v349, 1
        %v1004 = vsel %vm969, %v1001, %v1003
        %v1006 = vsel %vm497, %v972, 0
        %v1009 = vsel %vm497, %v974, 0
        %v1012 = vsel %vm497, %v976, 0
        %v1015 = vsel %vm497, %v978, 0
        %v1018 = vsel %vm497, %v980, 0
        %v1021 = vsel %vm497, %v982, 0
        %v1024 = vsel %vm497, %v984, 0
        %v1027 = vsel %vm497, %v986, 0
        %v1030 = vsel %vm497, %v988, 0
        %v1033 = vsel %vm497, %v990, 0
        %v1036 = vsel %vm497, %v992, 0
        %v1039 = vsel %vm497, %v994, 0
        %v1042 = vsel %vm497, %v996, 0
        %v1045 = vsel %vm497, %v998, 0
        %v1048 = vsel %vm497, %v1000, 0
        %v1051 = vsel %vm497, %v1002, 0
        %v1054 = vsel %vm497, %v1004, 0
        %v1057 = vsel %vm497, %v1003, 0
        %v1060 = vsel %vm552, %v950, 0
        %1062 = vmatprep.subr.bf16.mxu0 0
        %1063 = vmatpush1.bf16.msra.mxu0 0
        %1064 = vmatprep.subr.bf16.mxu0 0
        %1065 = vmatpush1.bf16.msra.mxu0 0
        %1066 = vmatprep.subr.bf16.mxu0 0
        %1067 = vmatpush1.bf16.msra.mxu0 0
        %1068 = vmatprep.subr.bf16.mxu0 0
        %1069 = vmatpush1.bf16.msra.mxu0 0
        %1070 = vmatprep.subr.bf16.mxu0 0
        %1071 = vmatpush1.bf16.msra.mxu0 0
        %1072 = vmatprep.subr.bf16.mxu0 0
        %1073 = vmatpush1.bf16.msra.mxu0 0
        %1074 = vmatprep.subr.bf16.mxu0 0
        %1075 = vmatpush1.bf16.msra.mxu0 0
        %1076 = vmatprep.subr.bf16.mxu0 0
        %1077 = vmatpush1.bf16.msra.mxu0 %v1060
        %1078 = vmatprep.subr.bf16.mxu0 0
        %1079 = vmatpush2.bf16.msra.mxu0 0
        %1080 = vmatprep.subr.bf16.mxu0 0
        %1081 = vmatpush2.bf16.msra.mxu0 0
        %1082 = vmatprep.subr.bf16.mxu0 0
        %1083 = vmatpush2.bf16.msra.mxu0 0
        %1084 = vmatprep.subr.bf16.mxu0 0
        %1085 = vmatpush2.bf16.msra.mxu0 0
        %1086 = vmatprep.subr.bf16.mxu0 0
        %1087 = vmatpush2.bf16.msra.mxu0 0
        %1088 = vmatprep.subr.bf16.mxu0 0
        %1089 = vmatpush2.bf16.msra.mxu0 0
        %1090 = vmatprep.subr.bf16.mxu0 0
        %1091 = vmatpush2.bf16.msra.mxu0 0
        %1092 = vmatprep.subr.bf16.mxu0 0
        %1093 = vmatpush2.bf16.msra.mxu0 0
        %1094 = vmatprep.mubr.bf16.mxu0 0
        %1095 = vmatmul.mubr.bf16.gmra.mxu0 %v1006
        %v1096 = vpop.f32.mrf.mxu0
        %v1097 = vadd.f32 0.0, %v1096
        %v1098 = vpop.f32.mrf.mxu0
        %v1099 = vpop.f32.mrf.mxu0
        %v1100 = vadd.f32 0.0, %v1099
        %v1101 = vpop.f32.mrf.mxu0
        %1102 = vmatprep.mubr.bf16.mxu0 0
        %1103 = vmatmul.mubr.bf16.gmra.mxu0 %v1009
        %v1104 = vpop.f32.mrf.mxu0
        %v1105 = vadd.f32 0.0, %v1104
        %v1106 = vpop.f32.mrf.mxu0
        %v1107 = vpop.f32.mrf.mxu0
        %v1108 = vadd.f32 0.0, %v1107
        %v1109 = vpop.f32.mrf.mxu0
        %1110 = vmatprep.mubr.bf16.mxu0 0
        %1111 = vmatmul.mubr.bf16.gmra.mxu0 %v1012
        %v1112 = vpop.f32.mrf.mxu0
        %v1113 = vadd.f32 0.0, %v1112
        %v1114 = vpop.f32.mrf.mxu0
        %v1115 = vpop.f32.mrf.mxu0
        %v1116 = vadd.f32 0.0, %v1115
        %v1117 = vpop.f32.mrf.mxu0
        %1118 = vmatprep.mubr.bf16.mxu0 0
        %1119 = vmatmul.mubr.bf16.gmra.mxu0 %v1015
        %v1120 = vpop.f32.mrf.mxu0
        %v1121 = vadd.f32 0.0, %v1120
        %v1122 = vpop.f32.mrf.mxu0
        %v1123 = vpop.f32.mrf.mxu0
        %v1124 = vadd.f32 0.0, %v1123
        %v1125 = vpop.f32.mrf.mxu0
        %1126 = vmatprep.mubr.bf16.mxu0 0
        %1127 = vmatmul.mubr.bf16.gmra.mxu0 %v1018
        %v1128 = vpop.f32.mrf.mxu0
        %v1129 = vadd.f32 0.0, %v1128
        %v1130 = vpop.f32.mrf.mxu0
        %v1131 = vpop.f32.mrf.mxu0
        %v1132 = vadd.f32 0.0, %v1131
        %v1133 = vpop.f32.mrf.mxu0
        %1134 = vmatprep.mubr.bf16.mxu0 0
        %1135 = vmatmul.mubr.bf16.gmra.mxu0 %v1021
        %v1136 = vpop.f32.mrf.mxu0
        %v1137 = vadd.f32 0.0, %v1136
        %v1138 = vpop.f32.mrf.mxu0
        %v1139 = vpop.f32.mrf.mxu0
        %v1140 = vadd.f32 0.0, %v1139
        %v1141 = vpop.f32.mrf.mxu0
        %1142 = vmatprep.mubr.bf16.mxu0 0
        %1143 = vmatmul.mubr.bf16.gmra.mxu0 %v1024
        %v1144 = vpop.f32.mrf.mxu0
        %v1145 = vadd.f32 0.0, %v1144
        %v1146 = vpop.f32.mrf.mxu0
        %v1147 = vpop.f32.mrf.mxu0
        %v1148 = vadd.f32 0.0, %v1147
        %v1149 = vpop.f32.mrf.mxu0
        %1150 = vmatprep.mubr.bf16.mxu0 0
        %1151 = vmatmul.mubr.bf16.gmra.mxu0 %v1027
        %v1152 = vpop.f32.mrf.mxu0
        %v1153 = vadd.f32 0.0, %v1152
        %v1154 = vpop.f32.mrf.mxu0
        %v1155 = vpop.f32.mrf.mxu0
        %v1156 = vadd.f32 0.0, %v1155
        %v1157 = vpop.f32.mrf.mxu0
        %1158 = vmatprep.mubr.bf16.mxu0 0
        %1159 = vmatmul.mubr.bf16.gmra.mxu0 %v1030
        %v1160 = vpop.f32.mrf.mxu0
        %v1161 = vadd.f32 0.0, %v1160
        %v1162 = vpop.f32.mrf.mxu0
        %v1163 = vpop.f32.mrf.mxu0
        %v1164 = vadd.f32 0.0, %v1163
        %v1165 = vpop.f32.mrf.mxu0
        %1166 = vmatprep.mubr.bf16.mxu0 0
        %1167 = vmatmul.mubr.bf16.gmra.mxu0 %v1033
        %v1168 = vpop.f32.mrf.mxu0
        %v1169 = vadd.f32 0.0, %v1168
        %v1170 = vpop.f32.mrf.mxu0
        %v1171 = vpop.f32.mrf.mxu0
        %v1172 = vadd.f32 0.0, %v1171
        %v1173 = vpop.f32.mrf.mxu0
        %1174 = vmatprep.mubr.bf16.mxu0 0
        %1175 = vmatmul.mubr.bf16.gmra.mxu0 %v1036
        %v1176 = vpop.f32.mrf.mxu0
        %v1177 = vadd.f32 0.0, %v1176
        %v1178 = vpop.f32.mrf.mxu0
        %v1179 = vpop.f32.mrf.mxu0
        %v1180 = vadd.f32 0.0, %v1179
        %v1181 = vpop.f32.mrf.mxu0
        %1182 = vmatprep.mubr.bf16.mxu0 0
        %1183 = vmatmul.mubr.bf16.gmra.mxu0 %v1039
        %v1184 = vpop.f32.mrf.mxu0
        %v1185 = vadd.f32 0.0, %v1184
        %v1186 = vpop.f32.mrf.mxu0
        %v1187 = vpop.f32.mrf.mxu0
        %v1188 = vadd.f32 0.0, %v1187
        %v1189 = vpop.f32.mrf.mxu0
        %1190 = vmatprep.mubr.bf16.mxu0 0
        %1191 = vmatmul.mubr.bf16.gmra.mxu0 %v1042
        %v1192 = vpop.f32.mrf.mxu0
        %v1193 = vadd.f32 0.0, %v1192
        %v1194 = vpop.f32.mrf.mxu0
        %v1195 = vpop.f32.mrf.mxu0
        %v1196 = vadd.f32 0.0, %v1195
        %v1197 = vpop.f32.mrf.mxu0
        %1198 = vmatprep.mubr.bf16.mxu0 0
        %1199 = vmatmul.mubr.bf16.gmra.mxu0 %v1045
        %v1200 = vpop.f32.mrf.mxu0
        %v1201 = vadd.f32 0.0, %v1200
        %v1202 = vpop.f32.mrf.mxu0
        %v1203 = vpop.f32.mrf.mxu0
        %v1204 = vadd.f32 0.0, %v1203
        %v1205 = vpop.f32.mrf.mxu0
        %1206 = vmatprep.mubr.bf16.mxu0 0
        %1207 = vmatmul.mubr.bf16.gmra.mxu0 %v1048
        %v1208 = vpop.f32.mrf.mxu0
        %v1209 = vadd.f32 0.0, %v1208
        %v1210 = vpop.f32.mrf.mxu0
        %v1211 = vpop.f32.mrf.mxu0
        %v1212 = vadd.f32 0.0, %v1211
        %v1213 = vpop.f32.mrf.mxu0
        %1214 = vmatprep.mubr.bf16.mxu0 0
        %1215 = vmatmul.mubr.bf16.gmra.mxu0 %v1051
        %v1216 = vpop.f32.mrf.mxu0
        %v1217 = vadd.f32 0.0, %v1216
        %v1218 = vpop.f32.mrf.mxu0
        %v1219 = vpop.f32.mrf.mxu0
        %v1220 = vadd.f32 0.0, %v1219
        %v1221 = vpop.f32.mrf.mxu0
        %1222 = vmatprep.mubr.bf16.mxu0 0
        %1223 = vmatmul.mubr.bf16.gmra.mxu0 %v1054
        %v1224 = vpop.f32.mrf.mxu0
        %v1225 = vadd.f32 0.0, %v1224
        %v1226 = vpop.f32.mrf.mxu0
        %v1227 = vpop.f32.mrf.mxu0
        %v1228 = vadd.f32 0.0, %v1227
        %v1229 = vpop.f32.mrf.mxu0
        %1230 = vmatprep.mubr.bf16.mxu0 0
        %1231 = vmatmul.mubr.bf16.gmra.mxu0 %v1057
        %v1232 = vpop.f32.mrf.mxu0
        %v1233 = vadd.f32 0.0, %v1232
        %v1234 = vpop.f32.mrf.mxu0
        %v1235 = vpop.f32.mrf.mxu0
        %v1236 = vadd.f32 0.0, %v1235
        %v1237 = vpop.f32.mrf.mxu0
        %1238 = vdwg.mxu0
        %v1239 = vadd.f32 %v807, %v1097
        %v1240 = vadd.f32 %v810, %v1100
        %v1241 = vadd.f32 %v815, %v1105
        %v1242 = vadd.f32 %v818, %v1108
        %v1243 = vadd.f32 %v823, %v1113
        %v1244 = vadd.f32 %v826, %v1116
        %v1245 = vadd.f32 %v831, %v1121
        %v1246 = vadd.f32 %v834, %v1124
        %v1247 = vadd.f32 %v839, %v1129
        %v1248 = vadd.f32 %v842, %v1132
        %v1249 = vadd.f32 %v847, %v1137
        %v1250 = vadd.f32 %v850, %v1140
        %v1251 = vadd.f32 %v855, %v1145
        %v1252 = vadd.f32 %v858, %v1148
        %v1253 = vadd.f32 %v863, %v1153
        %v1254 = vadd.f32 %v866, %v1156
        %v1255 = vadd.f32 %v871, %v1161
        %v1256 = vadd.f32 %v874, %v1164
        %v1257 = vadd.f32 %v879, %v1169
        %v1258 = vadd.f32 %v882, %v1172
        %v1259 = vadd.f32 %v887, %v1177
        %v1260 = vadd.f32 %v890, %v1180
        %v1261 = vadd.f32 %v895, %v1185
        %v1262 = vadd.f32 %v898, %v1188
        %v1263 = vadd.f32 %v903, %v1193
        %v1264 = vadd.f32 %v906, %v1196
        %v1265 = vadd.f32 %v911, %v1201
        %v1266 = vadd.f32 %v914, %v1204
        %v1267 = vadd.f32 %v919, %v1209
        %v1268 = vadd.f32 %v922, %v1212
        %v1269 = vadd.f32 %v927, %v1217
        %v1270 = vadd.f32 %v930, %v1220
        %v1271 = vadd.f32 %v935, %v1225
        %v1272 = vadd.f32 %v938, %v1228
        %v1273 = vadd.f32 %v943, %v1233
        %v1274 = vadd.f32 %v946, %v1236
        %v1275 = vpack.c.bf16 %v328, %v327
        %s1276 = scalar_lea.vmem %s2, 6
        %v1277 = vld [vmem:[%s1276] sm:$0x3]
        %v1279 = vrot.slane %v1275, 1
        %v1280 = vsel %vm969, %v1003, %v1279
        %v1282 = vsel %vm497, %v1280, 0
        %v1285 = vsel %vm497, %v1279, 0
        %v1288 = vsel %vm552, %v1277, 0
        %1290 = vmatprep.subr.bf16.mxu0 0
        %1291 = vmatpush1.bf16.msra.mxu0 0
        %1292 = vmatprep.subr.bf16.mxu0 0
        %1293 = vmatpush1.bf16.msra.mxu0 0
        %1294 = vmatprep.subr.bf16.mxu0 0
        %1295 = vmatpush1.bf16.msra.mxu0 0
        %1296 = vmatprep.subr.bf16.mxu0 0
        %1297 = vmatpush1.bf16.msra.mxu0 0
        %1298 = vmatprep.subr.bf16.mxu0 0
        %1299 = vmatpush1.bf16.msra.mxu0 0
        %1300 = vmatprep.subr.bf16.mxu0 0
        %1301 = vmatpush1.bf16.msra.mxu0 0
        %1302 = vmatprep.subr.bf16.mxu0 0
        %1303 = vmatpush1.bf16.msra.mxu0 0
        %1304 = vmatprep.subr.bf16.mxu0 0
        %1305 = vmatpush1.bf16.msra.mxu0 %v1288
        %1306 = vmatprep.subr.bf16.mxu0 0
        %1307 = vmatpush2.bf16.msra.mxu0 0
        %1308 = vmatprep.subr.bf16.mxu0 0
        %1309 = vmatpush2.bf16.msra.mxu0 0
        %1310 = vmatprep.subr.bf16.mxu0 0
        %1311 = vmatpush2.bf16.msra.mxu0 0
        %1312 = vmatprep.subr.bf16.mxu0 0
        %1313 = vmatpush2.bf16.msra.mxu0 0
        %1314 = vmatprep.subr.bf16.mxu0 0
        %1315 = vmatpush2.bf16.msra.mxu0 0
        %1316 = vmatprep.subr.bf16.mxu0 0
        %1317 = vmatpush2.bf16.msra.mxu0 0
        %1318 = vmatprep.subr.bf16.mxu0 0
        %1319 = vmatpush2.bf16.msra.mxu0 0
        %1320 = vmatprep.subr.bf16.mxu0 0
        %1321 = vmatpush2.bf16.msra.mxu0 0
        %1322 = vmatprep.mubr.bf16.mxu0 0
        %1323 = vmatmul.mubr.bf16.gmra.mxu0 %v1009
        %v1324 = vpop.f32.mrf.mxu0
        %v1325 = vadd.f32 0.0, %v1324
        %v1326 = vpop.f32.mrf.mxu0
        %v1327 = vpop.f32.mrf.mxu0
        %v1328 = vadd.f32 0.0, %v1327
        %v1329 = vpop.f32.mrf.mxu0
        %1330 = vmatprep.mubr.bf16.mxu0 0
        %1331 = vmatmul.mubr.bf16.gmra.mxu0 %v1012
        %v1332 = vpop.f32.mrf.mxu0
        %v1333 = vadd.f32 0.0, %v1332
        %v1334 = vpop.f32.mrf.mxu0
        %v1335 = vpop.f32.mrf.mxu0
        %v1336 = vadd.f32 0.0, %v1335
        %v1337 = vpop.f32.mrf.mxu0
        %1338 = vmatprep.mubr.bf16.mxu0 0
        %1339 = vmatmul.mubr.bf16.gmra.mxu0 %v1015
        %v1340 = vpop.f32.mrf.mxu0
        %v1341 = vadd.f32 0.0, %v1340
        %v1342 = vpop.f32.mrf.mxu0
        %v1343 = vpop.f32.mrf.mxu0
        %v1344 = vadd.f32 0.0, %v1343
        %v1345 = vpop.f32.mrf.mxu0
        %1346 = vmatprep.mubr.bf16.mxu0 0
        %1347 = vmatmul.mubr.bf16.gmra.mxu0 %v1018
        %v1348 = vpop.f32.mrf.mxu0
        %v1349 = vadd.f32 0.0, %v1348
        %v1350 = vpop.f32.mrf.mxu0
        %v1351 = vpop.f32.mrf.mxu0
        %v1352 = vadd.f32 0.0, %v1351
        %v1353 = vpop.f32.mrf.mxu0
        %1354 = vmatprep.mubr.bf16.mxu0 0
        %1355 = vmatmul.mubr.bf16.gmra.mxu0 %v1021
        %v1356 = vpop.f32.mrf.mxu0
        %v1357 = vadd.f32 0.0, %v1356
        %v1358 = vpop.f32.mrf.mxu0
        %v1359 = vpop.f32.mrf.mxu0
        %v1360 = vadd.f32 0.0, %v1359
        %v1361 = vpop.f32.mrf.mxu0
        %1362 = vmatprep.mubr.bf16.mxu0 0
        %1363 = vmatmul.mubr.bf16.gmra.mxu0 %v1024
        %v1364 = vpop.f32.mrf.mxu0
        %v1365 = vadd.f32 0.0, %v1364
        %v1366 = vpop.f32.mrf.mxu0
        %v1367 = vpop.f32.mrf.mxu0
        %v1368 = vadd.f32 0.0, %v1367
        %v1369 = vpop.f32.mrf.mxu0
        %1370 = vmatprep.mubr.bf16.mxu0 0
        %1371 = vmatmul.mubr.bf16.gmra.mxu0 %v1027
        %v1372 = vpop.f32.mrf.mxu0
        %v1373 = vadd.f32 0.0, %v1372
        %v1374 = vpop.f32.mrf.mxu0
        %v1375 = vpop.f32.mrf.mxu0
        %v1376 = vadd.f32 0.0, %v1375
        %v1377 = vpop.f32.mrf.mxu0
        %1378 = vmatprep.mubr.bf16.mxu0 0
        %1379 = vmatmul.mubr.bf16.gmra.mxu0 %v1030
        %v1380 = vpop.f32.mrf.mxu0
        %v1381 = vadd.f32 0.0, %v1380
        %v1382 = vpop.f32.mrf.mxu0
        %v1383 = vpop.f32.mrf.mxu0
        %v1384 = vadd.f32 0.0, %v1383
        %v1385 = vpop.f32.mrf.mxu0
        %1386 = vmatprep.mubr.bf16.mxu0 0
        %1387 = vmatmul.mubr.bf16.gmra.mxu0 %v1033
        %v1388 = vpop.f32.mrf.mxu0
        %v1389 = vadd.f32 0.0, %v1388
        %v1390 = vpop.f32.mrf.mxu0
        %v1391 = vpop.f32.mrf.mxu0
        %v1392 = vadd.f32 0.0, %v1391
        %v1393 = vpop.f32.mrf.mxu0
        %1394 = vmatprep.mubr.bf16.mxu0 0
        %1395 = vmatmul.mubr.bf16.gmra.mxu0 %v1036
        %v1396 = vpop.f32.mrf.mxu0
        %v1397 = vadd.f32 0.0, %v1396
        %v1398 = vpop.f32.mrf.mxu0
        %v1399 = vpop.f32.mrf.mxu0
        %v1400 = vadd.f32 0.0, %v1399
        %v1401 = vpop.f32.mrf.mxu0
        %1402 = vmatprep.mubr.bf16.mxu0 0
        %1403 = vmatmul.mubr.bf16.gmra.mxu0 %v1039
        %v1404 = vpop.f32.mrf.mxu0
        %v1405 = vadd.f32 0.0, %v1404
        %v1406 = vpop.f32.mrf.mxu0
        %v1407 = vpop.f32.mrf.mxu0
        %v1408 = vadd.f32 0.0, %v1407
        %v1409 = vpop.f32.mrf.mxu0
        %1410 = vmatprep.mubr.bf16.mxu0 0
        %1411 = vmatmul.mubr.bf16.gmra.mxu0 %v1042
        %v1412 = vpop.f32.mrf.mxu0
        %v1413 = vadd.f32 0.0, %v1412
        %v1414 = vpop.f32.mrf.mxu0
        %v1415 = vpop.f32.mrf.mxu0
        %v1416 = vadd.f32 0.0, %v1415
        %v1417 = vpop.f32.mrf.mxu0
        %1418 = vmatprep.mubr.bf16.mxu0 0
        %1419 = vmatmul.mubr.bf16.gmra.mxu0 %v1045
        %v1420 = vpop.f32.mrf.mxu0
        %v1421 = vadd.f32 0.0, %v1420
        %v1422 = vpop.f32.mrf.mxu0
        %v1423 = vpop.f32.mrf.mxu0
        %v1424 = vadd.f32 0.0, %v1423
        %v1425 = vpop.f32.mrf.mxu0
        %1426 = vmatprep.mubr.bf16.mxu0 0
        %1427 = vmatmul.mubr.bf16.gmra.mxu0 %v1048
        %v1428 = vpop.f32.mrf.mxu0
        %v1429 = vadd.f32 0.0, %v1428
        %v1430 = vpop.f32.mrf.mxu0
        %v1431 = vpop.f32.mrf.mxu0
        %v1432 = vadd.f32 0.0, %v1431
        %v1433 = vpop.f32.mrf.mxu0
        %1434 = vmatprep.mubr.bf16.mxu0 0
        %1435 = vmatmul.mubr.bf16.gmra.mxu0 %v1051
        %v1436 = vpop.f32.mrf.mxu0
        %v1437 = vadd.f32 0.0, %v1436
        %v1438 = vpop.f32.mrf.mxu0
        %v1439 = vpop.f32.mrf.mxu0
        %v1440 = vadd.f32 0.0, %v1439
        %v1441 = vpop.f32.mrf.mxu0
        %1442 = vmatprep.mubr.bf16.mxu0 0
        %1443 = vmatmul.mubr.bf16.gmra.mxu0 %v1054
        %v1444 = vpop.f32.mrf.mxu0
        %v1445 = vadd.f32 0.0, %v1444
        %v1446 = vpop.f32.mrf.mxu0
        %v1447 = vpop.f32.mrf.mxu0
        %v1448 = vadd.f32 0.0, %v1447
        %v1449 = vpop.f32.mrf.mxu0
        %1450 = vmatprep.mubr.bf16.mxu0 0
        %1451 = vmatmul.mubr.bf16.gmra.mxu0 %v1282
        %v1452 = vpop.f32.mrf.mxu0
        %v1453 = vadd.f32 0.0, %v1452
        %v1454 = vpop.f32.mrf.mxu0
        %v1455 = vpop.f32.mrf.mxu0
        %v1456 = vadd.f32 0.0, %v1455
        %v1457 = vpop.f32.mrf.mxu0
        %1458 = vmatprep.mubr.bf16.mxu0 0
        %1459 = vmatmul.mubr.bf16.gmra.mxu0 %v1285
        %v1460 = vpop.f32.mrf.mxu0
        %v1461 = vadd.f32 0.0, %v1460
        %v1462 = vpop.f32.mrf.mxu0
        %v1463 = vpop.f32.mrf.mxu0
        %v1464 = vadd.f32 0.0, %v1463
        %v1465 = vpop.f32.mrf.mxu0
        %1466 = vdwg.mxu0
        %v1467 = vadd.f32 %v1239, %v1325
        %v1468 = vadd.f32 %v1240, %v1328
        %v1469 = vadd.f32 %v1241, %v1333
        %v1470 = vadd.f32 %v1242, %v1336
        %v1471 = vadd.f32 %v1243, %v1341
        %v1472 = vadd.f32 %v1244, %v1344
        %v1473 = vadd.f32 %v1245, %v1349
        %v1474 = vadd.f32 %v1246, %v1352
        %v1475 = vadd.f32 %v1247, %v1357
        %v1476 = vadd.f32 %v1248, %v1360
        %v1477 = vadd.f32 %v1249, %v1365
        %v1478 = vadd.f32 %v1250, %v1368
        %v1479 = vadd.f32 %v1251, %v1373
        %v1480 = vadd.f32 %v1252, %v1376
        %v1481 = vadd.f32 %v1253, %v1381
        %v1482 = vadd.f32 %v1254, %v1384
        %v1483 = vadd.f32 %v1255, %v1389
        %v1484 = vadd.f32 %v1256, %v1392
        %v1485 = vadd.f32 %v1257, %v1397
        %v1486 = vadd.f32 %v1258, %v1400
        %v1487 = vadd.f32 %v1259, %v1405
        %v1488 = vadd.f32 %v1260, %v1408
        %v1489 = vadd.f32 %v1261, %v1413
        %v1490 = vadd.f32 %v1262, %v1416
        %v1491 = vadd.f32 %v1263, %v1421
        %v1492 = vadd.f32 %v1264, %v1424
        %v1493 = vadd.f32 %v1265, %v1429
        %v1494 = vadd.f32 %v1266, %v1432
        %v1495 = vadd.f32 %v1267, %v1437
        %v1496 = vadd.f32 %v1268, %v1440
        %v1497 = vadd.f32 %v1269, %v1445
        %v1498 = vadd.f32 %v1270, %v1448
        %v1499 = vadd.f32 %v1271, %v1453
        %v1500 = vadd.f32 %v1272, %v1456
        %v1501 = vadd.f32 %v1273, %v1461
        %v1502 = vadd.f32 %v1274, %v1464
        %v1503 = vpack.c.bf16 %v329, %v329
        %s1504 = scalar_lea.vmem %s2, 8
        %v1505 = vld [vmem:[%s1504] sm:$0x3]
        %vm1506 = vsmask.f32 6400
        %v1507 = vrot.slane %v366, 1
        %v1508 = vrot.slane %v362, 2
        %v1509 = vor.u32 %v1507, %v1508
        %v1510 = vrot.slane %v374, 1
        %v1511 = vrot.slane %v370, 2
        %v1512 = vor.u32 %v1510, %v1511
        %v1513 = vsel %vm1506, %v1509, %v1512
        %v1514 = vrot.slane %v382, 1
        %v1515 = vrot.slane %v378, 2
        %v1516 = vor.u32 %v1514, %v1515
        %v1517 = vsel %vm1506, %v1512, %v1516
        %v1518 = vrot.slane %v390, 1
        %v1519 = vrot.slane %v386, 2
        %v1520 = vor.u32 %v1518, %v1519
        %v1521 = vsel %vm1506, %v1516, %v1520
        %v1522 = vrot.slane %v398, 1
        %v1523 = vrot.slane %v394, 2
        %v1524 = vor.u32 %v1522, %v1523
        %v1525 = vsel %vm1506, %v1520, %v1524
        %v1526 = vrot.slane %v406, 1
        %v1527 = vrot.slane %v402, 2
        %v1528 = vor.u32 %v1526, %v1527
        %v1529 = vsel %vm1506, %v1524, %v1528
        %v1530 = vrot.slane %v414, 1
        %v1531 = vrot.slane %v410, 2
        %v1532 = vor.u32 %v1530, %v1531
        %v1533 = vsel %vm1506, %v1528, %v1532
        %v1534 = vrot.slane %v422, 1
        %v1535 = vrot.slane %v418, 2
        %v1536 = vor.u32 %v1534, %v1535
        %v1537 = vsel %vm1506, %v1532, %v1536
        %v1538 = vrot.slane %v430, 1
        %v1539 = vrot.slane %v426, 2
        %v1540 = vor.u32 %v1538, %v1539
        %v1541 = vsel %vm1506, %v1536, %v1540
        %v1542 = vrot.slane %v438, 1
        %v1543 = vrot.slane %v434, 2
        %v1544 = vor.u32 %v1542, %v1543
        %v1545 = vsel %vm1506, %v1540, %v1544
        %v1546 = vrot.slane %v446, 1
        %v1547 = vrot.slane %v442, 2
        %v1548 = vor.u32 %v1546, %v1547
        %v1549 = vsel %vm1506, %v1544, %v1548
        %v1550 = vrot.slane %v454, 1
        %v1551 = vrot.slane %v450, 2
        %v1552 = vor.u32 %v1550, %v1551
        %v1553 = vsel %vm1506, %v1548, %v1552
        %v1554 = vrot.slane %v462, 1
        %v1555 = vrot.slane %v458, 2
        %v1556 = vor.u32 %v1554, %v1555
        %v1557 = vsel %vm1506, %v1552, %v1556
        %v1558 = vrot.slane %v470, 1
        %v1559 = vrot.slane %v466, 2
        %v1560 = vor.u32 %v1558, %v1559
        %v1561 = vsel %vm1506, %v1556, %v1560
        %v1562 = vrot.slane %v478, 1
        %v1563 = vrot.slane %v474, 2
        %v1564 = vor.u32 %v1562, %v1563
        %v1565 = vsel %vm1506, %v1560, %v1564
        %v1566 = vrot.slane %v486, 1
        %v1567 = vrot.slane %v482, 2
        %v1568 = vor.u32 %v1566, %v1567
        %v1569 = vsel %vm1506, %v1564, %v1568
        %v1570 = vrot.slane %v494, 1
        %v1571 = vrot.slane %v490, 2
        %v1572 = vor.u32 %v1570, %v1571
        %v1573 = vsel %vm1506, %v1568, %v1572
        %v1575 = vshrl.u32 %v1275, 16
        %v1577 = vrot.slane %v1575, 1
        %v1578 = vshll.u32 %v1275, 16
        %v1580 = vrot.slane %v1578, 2
        %v1581 = vor.u32 %v1577, %v1580
        %v1582 = vsel %vm1506, %v1572, %v1581
        %v1584 = vshll.u32 %v1503, 16
        %v1586 = vrot.slane %v1584, 2
        %v1587 = vsel %vm1506, %v1581, %v1586
        %v1589 = vsel %vm497, %v1513, 0
        %v1592 = vsel %vm497, %v1517, 0
        %v1595 = vsel %vm497, %v1521, 0
        %v1598 = vsel %vm497, %v1525, 0
        %v1601 = vsel %vm497, %v1529, 0
        %v1604 = vsel %vm497, %v1533, 0
        %v1607 = vsel %vm497, %v1537, 0
        %v1610 = vsel %vm497, %v1541, 0
        %v1613 = vsel %vm497, %v1545, 0
        %v1616 = vsel %vm497, %v1549, 0
        %v1619 = vsel %vm497, %v1553, 0
        %v1622 = vsel %vm497, %v1557, 0
        %v1625 = vsel %vm497, %v1561, 0
        %v1628 = vsel %vm497, %v1565, 0
        %v1631 = vsel %vm497, %v1569, 0
        %v1634 = vsel %vm497, %v1573, 0
        %v1637 = vsel %vm497, %v1582, 0
        %v1640 = vsel %vm497, %v1587, 0
        %v1643 = vsel %vm552, %v1505, 0
        %1645 = vmatprep.subr.bf16.mxu0 0
        %1646 = vmatpush1.bf16.msra.mxu0 0
        %1647 = vmatprep.subr.bf16.mxu0 0
        %1648 = vmatpush1.bf16.msra.mxu0 0
        %1649 = vmatprep.subr.bf16.mxu0 0
        %1650 = vmatpush1.bf16.msra.mxu0 0
        %1651 = vmatprep.subr.bf16.mxu0 0
        %1652 = vmatpush1.bf16.msra.mxu0 0
        %1653 = vmatprep.subr.bf16.mxu0 0
        %1654 = vmatpush1.bf16.msra.mxu0 0
        %1655 = vmatprep.subr.bf16.mxu0 0
        %1656 = vmatpush1.bf16.msra.mxu0 0
        %1657 = vmatprep.subr.bf16.mxu0 0
        %1658 = vmatpush1.bf16.msra.mxu0 0
        %1659 = vmatprep.subr.bf16.mxu0 0
        %1660 = vmatpush1.bf16.msra.mxu0 %v1643
        %1661 = vmatprep.subr.bf16.mxu0 0
        %1662 = vmatpush2.bf16.msra.mxu0 0
        %1663 = vmatprep.subr.bf16.mxu0 0
        %1664 = vmatpush2.bf16.msra.mxu0 0
        %1665 = vmatprep.subr.bf16.mxu0 0
        %1666 = vmatpush2.bf16.msra.mxu0 0
        %1667 = vmatprep.subr.bf16.mxu0 0
        %1668 = vmatpush2.bf16.msra.mxu0 0
        %1669 = vmatprep.subr.bf16.mxu0 0
        %1670 = vmatpush2.bf16.msra.mxu0 0
        %1671 = vmatprep.subr.bf16.mxu0 0
        %1672 = vmatpush2.bf16.msra.mxu0 0
        %1673 = vmatprep.subr.bf16.mxu0 0
        %1674 = vmatpush2.bf16.msra.mxu0 0
        %1675 = vmatprep.subr.bf16.mxu0 0
        %1676 = vmatpush2.bf16.msra.mxu0 0
        %1677 = vmatprep.mubr.bf16.mxu0 0
        %1678 = vmatmul.mubr.bf16.gmra.mxu0 %v1589
        %v1679 = vpop.f32.mrf.mxu0
        %v1680 = vadd.f32 0.0, %v1679
        %v1681 = vpop.f32.mrf.mxu0
        %v1682 = vpop.f32.mrf.mxu0
        %v1683 = vadd.f32 0.0, %v1682
        %v1684 = vpop.f32.mrf.mxu0
        %1685 = vmatprep.mubr.bf16.mxu0 0
        %1686 = vmatmul.mubr.bf16.gmra.mxu0 %v1592
        %v1687 = vpop.f32.mrf.mxu0
        %v1688 = vadd.f32 0.0, %v1687
        %v1689 = vpop.f32.mrf.mxu0
        %v1690 = vpop.f32.mrf.mxu0
        %v1691 = vadd.f32 0.0, %v1690
        %v1692 = vpop.f32.mrf.mxu0
        %1693 = vmatprep.mubr.bf16.mxu0 0
        %1694 = vmatmul.mubr.bf16.gmra.mxu0 %v1595
        %v1695 = vpop.f32.mrf.mxu0
        %v1696 = vadd.f32 0.0, %v1695
        %v1697 = vpop.f32.mrf.mxu0
        %v1698 = vpop.f32.mrf.mxu0
        %v1699 = vadd.f32 0.0, %v1698
        %v1700 = vpop.f32.mrf.mxu0
        %1701 = vmatprep.mubr.bf16.mxu0 0
        %1702 = vmatmul.mubr.bf16.gmra.mxu0 %v1598
        %v1703 = vpop.f32.mrf.mxu0
        %v1704 = vadd.f32 0.0, %v1703
        %v1705 = vpop.f32.mrf.mxu0
        %v1706 = vpop.f32.mrf.mxu0
        %v1707 = vadd.f32 0.0, %v1706
        %v1708 = vpop.f32.mrf.mxu0
        %1709 = vmatprep.mubr.bf16.mxu0 0
        %1710 = vmatmul.mubr.bf16.gmra.mxu0 %v1601
        %v1711 = vpop.f32.mrf.mxu0
        %v1712 = vadd.f32 0.0, %v1711
        %v1713 = vpop.f32.mrf.mxu0
        %v1714 = vpop.f32.mrf.mxu0
        %v1715 = vadd.f32 0.0, %v1714
        %v1716 = vpop.f32.mrf.mxu0
        %1717 = vmatprep.mubr.bf16.mxu0 0
        %1718 = vmatmul.mubr.bf16.gmra.mxu0 %v1604
        %v1719 = vpop.f32.mrf.mxu0
        %v1720 = vadd.f32 0.0, %v1719
        %v1721 = vpop.f32.mrf.mxu0
        %v1722 = vpop.f32.mrf.mxu0
        %v1723 = vadd.f32 0.0, %v1722
        %v1724 = vpop.f32.mrf.mxu0
        %1725 = vmatprep.mubr.bf16.mxu0 0
        %1726 = vmatmul.mubr.bf16.gmra.mxu0 %v1607
        %v1727 = vpop.f32.mrf.mxu0
        %v1728 = vadd.f32 0.0, %v1727
        %v1729 = vpop.f32.mrf.mxu0
        %v1730 = vpop.f32.mrf.mxu0
        %v1731 = vadd.f32 0.0, %v1730
        %v1732 = vpop.f32.mrf.mxu0
        %1733 = vmatprep.mubr.bf16.mxu0 0
        %1734 = vmatmul.mubr.bf16.gmra.mxu0 %v1610
        %v1735 = vpop.f32.mrf.mxu0
        %v1736 = vadd.f32 0.0, %v1735
        %v1737 = vpop.f32.mrf.mxu0
        %v1738 = vpop.f32.mrf.mxu0
        %v1739 = vadd.f32 0.0, %v1738
        %v1740 = vpop.f32.mrf.mxu0
        %1741 = vmatprep.mubr.bf16.mxu0 0
        %1742 = vmatmul.mubr.bf16.gmra.mxu0 %v1613
        %v1743 = vpop.f32.mrf.mxu0
        %v1744 = vadd.f32 0.0, %v1743
        %v1745 = vpop.f32.mrf.mxu0
        %v1746 = vpop.f32.mrf.mxu0
        %v1747 = vadd.f32 0.0, %v1746
        %v1748 = vpop.f32.mrf.mxu0
        %1749 = vmatprep.mubr.bf16.mxu0 0
        %1750 = vmatmul.mubr.bf16.gmra.mxu0 %v1616
        %v1751 = vpop.f32.mrf.mxu0
        %v1752 = vadd.f32 0.0, %v1751
        %v1753 = vpop.f32.mrf.mxu0
        %v1754 = vpop.f32.mrf.mxu0
        %v1755 = vadd.f32 0.0, %v1754
        %v1756 = vpop.f32.mrf.mxu0
        %1757 = vmatprep.mubr.bf16.mxu0 0
        %1758 = vmatmul.mubr.bf16.gmra.mxu0 %v1619
        %v1759 = vpop.f32.mrf.mxu0
        %v1760 = vadd.f32 0.0, %v1759
        %v1761 = vpop.f32.mrf.mxu0
        %v1762 = vpop.f32.mrf.mxu0
        %v1763 = vadd.f32 0.0, %v1762
        %v1764 = vpop.f32.mrf.mxu0
        %1765 = vmatprep.mubr.bf16.mxu0 0
        %1766 = vmatmul.mubr.bf16.gmra.mxu0 %v1622
        %v1767 = vpop.f32.mrf.mxu0
        %v1768 = vadd.f32 0.0, %v1767
        %v1769 = vpop.f32.mrf.mxu0
        %v1770 = vpop.f32.mrf.mxu0
        %v1771 = vadd.f32 0.0, %v1770
        %v1772 = vpop.f32.mrf.mxu0
        %1773 = vmatprep.mubr.bf16.mxu0 0
        %1774 = vmatmul.mubr.bf16.gmra.mxu0 %v1625
        %v1775 = vpop.f32.mrf.mxu0
        %v1776 = vadd.f32 0.0, %v1775
        %v1777 = vpop.f32.mrf.mxu0
        %v1778 = vpop.f32.mrf.mxu0
        %v1779 = vadd.f32 0.0, %v1778
        %v1780 = vpop.f32.mrf.mxu0
        %1781 = vmatprep.mubr.bf16.mxu0 0
        %1782 = vmatmul.mubr.bf16.gmra.mxu0 %v1628
        %v1783 = vpop.f32.mrf.mxu0
        %v1784 = vadd.f32 0.0, %v1783
        %v1785 = vpop.f32.mrf.mxu0
        %v1786 = vpop.f32.mrf.mxu0
        %v1787 = vadd.f32 0.0, %v1786
        %v1788 = vpop.f32.mrf.mxu0
        %1789 = vmatprep.mubr.bf16.mxu0 0
        %1790 = vmatmul.mubr.bf16.gmra.mxu0 %v1631
        %v1791 = vpop.f32.mrf.mxu0
        %v1792 = vadd.f32 0.0, %v1791
        %v1793 = vpop.f32.mrf.mxu0
        %v1794 = vpop.f32.mrf.mxu0
        %v1795 = vadd.f32 0.0, %v1794
        %v1796 = vpop.f32.mrf.mxu0
        %1797 = vmatprep.mubr.bf16.mxu0 0
        %1798 = vmatmul.mubr.bf16.gmra.mxu0 %v1634
        %v1799 = vpop.f32.mrf.mxu0
        %v1800 = vadd.f32 0.0, %v1799
        %v1801 = vpop.f32.mrf.mxu0
        %v1802 = vpop.f32.mrf.mxu0
        %v1803 = vadd.f32 0.0, %v1802
        %v1804 = vpop.f32.mrf.mxu0
        %1805 = vmatprep.mubr.bf16.mxu0 0
        %1806 = vmatmul.mubr.bf16.gmra.mxu0 %v1637
        %v1807 = vpop.f32.mrf.mxu0
        %v1808 = vadd.f32 0.0, %v1807
        %v1809 = vpop.f32.mrf.mxu0
        %v1810 = vpop.f32.mrf.mxu0
        %v1811 = vadd.f32 0.0, %v1810
        %v1812 = vpop.f32.mrf.mxu0
        %1813 = vmatprep.mubr.bf16.mxu0 0
        %1814 = vmatmul.mubr.bf16.gmra.mxu0 %v1640
        %v1815 = vpop.f32.mrf.mxu0
        %v1816 = vadd.f32 0.0, %v1815
        %v1817 = vpop.f32.mrf.mxu0
        %v1818 = vpop.f32.mrf.mxu0
        %v1819 = vadd.f32 0.0, %v1818
        %v1820 = vpop.f32.mrf.mxu0
        %1821 = vdwg.mxu0
        %v1822 = vadd.f32 %v1467, %v1680
        %v1823 = vadd.f32 %v1468, %v1683
        %v1824 = vadd.f32 %v1469, %v1688
        %v1825 = vadd.f32 %v1470, %v1691
        %v1826 = vadd.f32 %v1471, %v1696
        %v1827 = vadd.f32 %v1472, %v1699
        %v1828 = vadd.f32 %v1473, %v1704
        %v1829 = vadd.f32 %v1474, %v1707
        %v1830 = vadd.f32 %v1475, %v1712
        %v1831 = vadd.f32 %v1476, %v1715
        %v1832 = vadd.f32 %v1477, %v1720
        %v1833 = vadd.f32 %v1478, %v1723
        %v1834 = vadd.f32 %v1479, %v1728
        %v1835 = vadd.f32 %v1480, %v1731
        %v1836 = vadd.f32 %v1481, %v1736
        %v1837 = vadd.f32 %v1482, %v1739
        %v1838 = vadd.f32 %v1483, %v1744
        %v1839 = vadd.f32 %v1484, %v1747
        %v1840 = vadd.f32 %v1485, %v1752
        %v1841 = vadd.f32 %v1486, %v1755
        %v1842 = vadd.f32 %v1487, %v1760
        %v1843 = vadd.f32 %v1488, %v1763
        %v1844 = vadd.f32 %v1489, %v1768
        %v1845 = vadd.f32 %v1490, %v1771
        %v1846 = vadd.f32 %v1491, %v1776
        %v1847 = vadd.f32 %v1492, %v1779
        %v1848 = vadd.f32 %v1493, %v1784
        %v1849 = vadd.f32 %v1494, %v1787
        %v1850 = vadd.f32 %v1495, %v1792
        %v1851 = vadd.f32 %v1496, %v1795
        %v1852 = vadd.f32 %v1497, %v1800
        %v1853 = vadd.f32 %v1498, %v1803
        %v1854 = vadd.f32 %v1499, %v1808
        %v1855 = vadd.f32 %v1500, %v1811
        %v1856 = vadd.f32 %v1501, %v1816
        %v1857 = vadd.f32 %v1502, %v1819
        %s1858 = scalar_lea.vmem %s2, 10
        %v1859 = vld [vmem:[%s1858] sm:$0x3]
        %vm1861 = vcmask 1045504
        %v1862 = vrot.slane %v333, 2
        %v1863 = vrot.slane %v334, 2
        %v1864 = vsel %vm1861, %v1862, %v1863
        %v1865 = vrot.slane %v335, 2
        %v1866 = vsel %vm1861, %v1863, %v1865
        %v1867 = vrot.slane %v336, 2
        %v1868 = vsel %vm1861, %v1865, %v1867
        %v1869 = vrot.slane %v337, 2
        %v1870 = vsel %vm1861, %v1867, %v1869
        %v1871 = vrot.slane %v338, 2
        %v1872 = vsel %vm1861, %v1869, %v1871
        %v1873 = vrot.slane %v339, 2
        %v1874 = vsel %vm1861, %v1871, %v1873
        %v1875 = vrot.slane %v340, 2
        %v1876 = vsel %vm1861, %v1873, %v1875
        %v1877 = vrot.slane %v341, 2
        %v1878 = vsel %vm1861, %v1875, %v1877
        %v1879 = vrot.slane %v342, 2
        %v1880 = vsel %vm1861, %v1877, %v1879
        %v1881 = vrot.slane %v343, 2
        %v1882 = vsel %vm1861, %v1879, %v1881
        %v1883 = vrot.slane %v344, 2
        %v1884 = vsel %vm1861, %v1881, %v1883
        %v1885 = vrot.slane %v345, 2
        %v1886 = vsel %vm1861, %v1883, %v1885
        %v1887 = vrot.slane %v346, 2
        %v1888 = vsel %vm1861, %v1885, %v1887
        %v1889 = vrot.slane %v347, 2
        %v1890 = vsel %vm1861, %v1887, %v1889
        %v1891 = vrot.slane %v348, 2
        %v1892 = vsel %vm1861, %v1889, %v1891
        %v1893 = vrot.slane %v349, 2
        %v1894 = vsel %vm1861, %v1891, %v1893
        %v1895 = vrot.slane %v1275, 2
        %v1896 = vsel %vm1861, %v1893, %v1895
        %v1897 = vrot.slane %v1503, 2
        %v1898 = vsel %vm1861, %v1895, %v1897
        %v1900 = vsel %vm497, %v1864, 0
        %v1903 = vsel %vm497, %v1866, 0
        %v1906 = vsel %vm497, %v1868, 0
        %v1909 = vsel %vm497, %v1870, 0
        %v1912 = vsel %vm497, %v1872, 0
        %v1915 = vsel %vm497, %v1874, 0
        %v1918 = vsel %vm497, %v1876, 0
        %v1921 = vsel %vm497, %v1878, 0
        %v1924 = vsel %vm497, %v1880, 0
        %v1927 = vsel %vm497, %v1882, 0
        %v1930 = vsel %vm497, %v1884, 0
        %v1933 = vsel %vm497, %v1886, 0
        %v1936 = vsel %vm497, %v1888, 0
        %v1939 = vsel %vm497, %v1890, 0
        %v1942 = vsel %vm497, %v1892, 0
        %v1945 = vsel %vm497, %v1894, 0
        %v1948 = vsel %vm497, %v1896, 0
        %v1951 = vsel %vm497, %v1898, 0
        %v1954 = vsel %vm552, %v1859, 0
        %1956 = vmatprep.subr.bf16.mxu0 0
        %1957 = vmatpush1.bf16.msra.mxu0 0
        %1958 = vmatprep.subr.bf16.mxu0 0
        %1959 = vmatpush1.bf16.msra.mxu0 0
        %1960 = vmatprep.subr.bf16.mxu0 0
        %1961 = vmatpush1.bf16.msra.mxu0 0
        %1962 = vmatprep.subr.bf16.mxu0 0
        %1963 = vmatpush1.bf16.msra.mxu0 0
        %1964 = vmatprep.subr.bf16.mxu0 0
        %1965 = vmatpush1.bf16.msra.mxu0 0
        %1966 = vmatprep.subr.bf16.mxu0 0
        %1967 = vmatpush1.bf16.msra.mxu0 0
        %1968 = vmatprep.subr.bf16.mxu0 0
        %1969 = vmatpush1.bf16.msra.mxu0 0
        %1970 = vmatprep.subr.bf16.mxu0 0
        %1971 = vmatpush1.bf16.msra.mxu0 %v1954
        %1972 = vmatprep.subr.bf16.mxu0 0
        %1973 = vmatpush2.bf16.msra.mxu0 0
        %1974 = vmatprep.subr.bf16.mxu0 0
        %1975 = vmatpush2.bf16.msra.mxu0 0
        %1976 = vmatprep.subr.bf16.mxu0 0
        %1977 = vmatpush2.bf16.msra.mxu0 0
        %1978 = vmatprep.subr.bf16.mxu0 0
        %1979 = vmatpush2.bf16.msra.mxu0 0
        %1980 = vmatprep.subr.bf16.mxu0 0
        %1981 = vmatpush2.bf16.msra.mxu0 0
        %1982 = vmatprep.subr.bf16.mxu0 0
        %1983 = vmatpush2.bf16.msra.mxu0 0
        %1984 = vmatprep.subr.bf16.mxu0 0
        %1985 = vmatpush2.bf16.msra.mxu0 0
        %1986 = vmatprep.subr.bf16.mxu0 0
        %1987 = vmatpush2.bf16.msra.mxu0 0
        %1988 = vmatprep.mubr.bf16.mxu0 0
        %1989 = vmatmul.mubr.bf16.gmra.mxu0 %v1900
        %v1990 = vpop.f32.mrf.mxu0
        %v1991 = vadd.f32 0.0, %v1990
        %v1992 = vpop.f32.mrf.mxu0
        %v1993 = vpop.f32.mrf.mxu0
        %v1994 = vadd.f32 0.0, %v1993
        %v1995 = vpop.f32.mrf.mxu0
        %1996 = vmatprep.mubr.bf16.mxu0 0
        %1997 = vmatmul.mubr.bf16.gmra.mxu0 %v1903
        %v1998 = vpop.f32.mrf.mxu0
        %v1999 = vadd.f32 0.0, %v1998
        %v2000 = vpop.f32.mrf.mxu0
        %v2001 = vpop.f32.mrf.mxu0
        %v2002 = vadd.f32 0.0, %v2001
        %v2003 = vpop.f32.mrf.mxu0
        %2004 = vmatprep.mubr.bf16.mxu0 0
        %2005 = vmatmul.mubr.bf16.gmra.mxu0 %v1906
        %v2006 = vpop.f32.mrf.mxu0
        %v2007 = vadd.f32 0.0, %v2006
        %v2008 = vpop.f32.mrf.mxu0
        %v2009 = vpop.f32.mrf.mxu0
        %v2010 = vadd.f32 0.0, %v2009
        %v2011 = vpop.f32.mrf.mxu0
        %2012 = vmatprep.mubr.bf16.mxu0 0
        %2013 = vmatmul.mubr.bf16.gmra.mxu0 %v1909
        %v2014 = vpop.f32.mrf.mxu0
        %v2015 = vadd.f32 0.0, %v2014
        %v2016 = vpop.f32.mrf.mxu0
        %v2017 = vpop.f32.mrf.mxu0
        %v2018 = vadd.f32 0.0, %v2017
        %v2019 = vpop.f32.mrf.mxu0
        %2020 = vmatprep.mubr.bf16.mxu0 0
        %2021 = vmatmul.mubr.bf16.gmra.mxu0 %v1912
        %v2022 = vpop.f32.mrf.mxu0
        %v2023 = vadd.f32 0.0, %v2022
        %v2024 = vpop.f32.mrf.mxu0
        %v2025 = vpop.f32.mrf.mxu0
        %v2026 = vadd.f32 0.0, %v2025
        %v2027 = vpop.f32.mrf.mxu0
        %2028 = vmatprep.mubr.bf16.mxu0 0
        %2029 = vmatmul.mubr.bf16.gmra.mxu0 %v1915
        %v2030 = vpop.f32.mrf.mxu0
        %v2031 = vadd.f32 0.0, %v2030
        %v2032 = vpop.f32.mrf.mxu0
        %v2033 = vpop.f32.mrf.mxu0
        %v2034 = vadd.f32 0.0, %v2033
        %v2035 = vpop.f32.mrf.mxu0
        %2036 = vmatprep.mubr.bf16.mxu0 0
        %2037 = vmatmul.mubr.bf16.gmra.mxu0 %v1918
        %v2038 = vpop.f32.mrf.mxu0
        %v2039 = vadd.f32 0.0, %v2038
        %v2040 = vpop.f32.mrf.mxu0
        %v2041 = vpop.f32.mrf.mxu0
        %v2042 = vadd.f32 0.0, %v2041
        %v2043 = vpop.f32.mrf.mxu0
        %2044 = vmatprep.mubr.bf16.mxu0 0
        %2045 = vmatmul.mubr.bf16.gmra.mxu0 %v1921
        %v2046 = vpop.f32.mrf.mxu0
        %v2047 = vadd.f32 0.0, %v2046
        %v2048 = vpop.f32.mrf.mxu0
        %v2049 = vpop.f32.mrf.mxu0
        %v2050 = vadd.f32 0.0, %v2049
        %v2051 = vpop.f32.mrf.mxu0
        %2052 = vmatprep.mubr.bf16.mxu0 0
        %2053 = vmatmul.mubr.bf16.gmra.mxu0 %v1924
        %v2054 = vpop.f32.mrf.mxu0
        %v2055 = vadd.f32 0.0, %v2054
        %v2056 = vpop.f32.mrf.mxu0
        %v2057 = vpop.f32.mrf.mxu0
        %v2058 = vadd.f32 0.0, %v2057
        %v2059 = vpop.f32.mrf.mxu0
        %2060 = vmatprep.mubr.bf16.mxu0 0
        %2061 = vmatmul.mubr.bf16.gmra.mxu0 %v1927
        %v2062 = vpop.f32.mrf.mxu0
        %v2063 = vadd.f32 0.0, %v2062
        %v2064 = vpop.f32.mrf.mxu0
        %v2065 = vpop.f32.mrf.mxu0
        %v2066 = vadd.f32 0.0, %v2065
        %v2067 = vpop.f32.mrf.mxu0
        %2068 = vmatprep.mubr.bf16.mxu0 0
        %2069 = vmatmul.mubr.bf16.gmra.mxu0 %v1930
        %v2070 = vpop.f32.mrf.mxu0
        %v2071 = vadd.f32 0.0, %v2070
        %v2072 = vpop.f32.mrf.mxu0
        %v2073 = vpop.f32.mrf.mxu0
        %v2074 = vadd.f32 0.0, %v2073
        %v2075 = vpop.f32.mrf.mxu0
        %2076 = vmatprep.mubr.bf16.mxu0 0
        %2077 = vmatmul.mubr.bf16.gmra.mxu0 %v1933
        %v2078 = vpop.f32.mrf.mxu0
        %v2079 = vadd.f32 0.0, %v2078
        %v2080 = vpop.f32.mrf.mxu0
        %v2081 = vpop.f32.mrf.mxu0
        %v2082 = vadd.f32 0.0, %v2081
        %v2083 = vpop.f32.mrf.mxu0
        %2084 = vmatprep.mubr.bf16.mxu0 0
        %2085 = vmatmul.mubr.bf16.gmra.mxu0 %v1936
        %v2086 = vpop.f32.mrf.mxu0
        %v2087 = vadd.f32 0.0, %v2086
        %v2088 = vpop.f32.mrf.mxu0
        %v2089 = vpop.f32.mrf.mxu0
        %v2090 = vadd.f32 0.0, %v2089
        %v2091 = vpop.f32.mrf.mxu0
        %2092 = vmatprep.mubr.bf16.mxu0 0
        %2093 = vmatmul.mubr.bf16.gmra.mxu0 %v1939
        %v2094 = vpop.f32.mrf.mxu0
        %v2095 = vadd.f32 0.0, %v2094
        %v2096 = vpop.f32.mrf.mxu0
        %v2097 = vpop.f32.mrf.mxu0
        %v2098 = vadd.f32 0.0, %v2097
        %v2099 = vpop.f32.mrf.mxu0
        %2100 = vmatprep.mubr.bf16.mxu0 0
        %2101 = vmatmul.mubr.bf16.gmra.mxu0 %v1942
        %v2102 = vpop.f32.mrf.mxu0
        %v2103 = vadd.f32 0.0, %v2102
        %v2104 = vpop.f32.mrf.mxu0
        %v2105 = vpop.f32.mrf.mxu0
        %v2106 = vadd.f32 0.0, %v2105
        %v2107 = vpop.f32.mrf.mxu0
        %2108 = vmatprep.mubr.bf16.mxu0 0
        %2109 = vmatmul.mubr.bf16.gmra.mxu0 %v1945
        %v2110 = vpop.f32.mrf.mxu0
        %v2111 = vadd.f32 0.0, %v2110
        %v2112 = vpop.f32.mrf.mxu0
        %v2113 = vpop.f32.mrf.mxu0
        %v2114 = vadd.f32 0.0, %v2113
        %v2115 = vpop.f32.mrf.mxu0
        %2116 = vmatprep.mubr.bf16.mxu0 0
        %2117 = vmatmul.mubr.bf16.gmra.mxu0 %v1948
        %v2118 = vpop.f32.mrf.mxu0
        %v2119 = vadd.f32 0.0, %v2118
        %v2120 = vpop.f32.mrf.mxu0
        %v2121 = vpop.f32.mrf.mxu0
        %v2122 = vadd.f32 0.0, %v2121
        %v2123 = vpop.f32.mrf.mxu0
        %2124 = vmatprep.mubr.bf16.mxu0 0
        %2125 = vmatmul.mubr.bf16.gmra.mxu0 %v1951
        %v2126 = vpop.f32.mrf.mxu0
        %v2127 = vadd.f32 0.0, %v2126
        %v2128 = vpop.f32.mrf.mxu0
        %v2129 = vpop.f32.mrf.mxu0
        %v2130 = vadd.f32 0.0, %v2129
        %v2131 = vpop.f32.mrf.mxu0
        %2132 = vdwg.mxu0
        %v2133 = vadd.f32 %v1822, %v1991
        %v2134 = vadd.f32 %v1823, %v1994
        %v2135 = vadd.f32 %v1824, %v1999
        %v2136 = vadd.f32 %v1825, %v2002
        %v2137 = vadd.f32 %v1826, %v2007
        %v2138 = vadd.f32 %v1827, %v2010
        %v2139 = vadd.f32 %v1828, %v2015
        %v2140 = vadd.f32 %v1829, %v2018
        %v2141 = vadd.f32 %v1830, %v2023
        %v2142 = vadd.f32 %v1831, %v2026
        %v2143 = vadd.f32 %v1832, %v2031
        %v2144 = vadd.f32 %v1833, %v2034
        %v2145 = vadd.f32 %v1834, %v2039
        %v2146 = vadd.f32 %v1835, %v2042
        %v2147 = vadd.f32 %v1836, %v2047
        %v2148 = vadd.f32 %v1837, %v2050
        %v2149 = vadd.f32 %v1838, %v2055
        %v2150 = vadd.f32 %v1839, %v2058
        %v2151 = vadd.f32 %v1840, %v2063
        %v2152 = vadd.f32 %v1841, %v2066
        %v2153 = vadd.f32 %v1842, %v2071
        %v2154 = vadd.f32 %v1843, %v2074
        %v2155 = vadd.f32 %v1844, %v2079
        %v2156 = vadd.f32 %v1845, %v2082
        %v2157 = vadd.f32 %v1846, %v2087
        %v2158 = vadd.f32 %v1847, %v2090
        %v2159 = vadd.f32 %v1848, %v2095
        %v2160 = vadd.f32 %v1849, %v2098
        %v2161 = vadd.f32 %v1850, %v2103
        %v2162 = vadd.f32 %v1851, %v2106
        %v2163 = vadd.f32 %v1852, %v2111
        %v2164 = vadd.f32 %v1853, %v2114
        %v2165 = vadd.f32 %v1854, %v2119
        %v2166 = vadd.f32 %v1855, %v2122
        %v2167 = vadd.f32 %v1856, %v2127
        %v2168 = vadd.f32 %v1857, %v2130
        %v2169 = vpack.c.bf16 %v330, %v329
        %v2170 = vpack.c.bf16 %v331, %v331
        %s2171 = scalar_lea.vmem %s2, 12
        %v2172 = vld [vmem:[%s2171] sm:$0x3]
        %v2175 = vrot.slane %v2169, 2
        %v2176 = vsel %vm1861, %v1895, %v2175
        %v2177 = vrot.slane %v2170, 2
        %v2178 = vsel %vm1861, %v2175, %v2177
        %v2180 = vsel %vm497, %v2176, 0
        %v2183 = vsel %vm497, %v2178, 0
        %v2186 = vsel %vm552, %v2172, 0
        %2188 = vmatprep.subr.bf16.mxu0 0
        %2189 = vmatpush1.bf16.msra.mxu0 0
        %2190 = vmatprep.subr.bf16.mxu0 0
        %2191 = vmatpush1.bf16.msra.mxu0 0
        %2192 = vmatprep.subr.bf16.mxu0 0
        %2193 = vmatpush1.bf16.msra.mxu0 0
        %2194 = vmatprep.subr.bf16.mxu0 0
        %2195 = vmatpush1.bf16.msra.mxu0 0
        %2196 = vmatprep.subr.bf16.mxu0 0
        %2197 = vmatpush1.bf16.msra.mxu0 0
        %2198 = vmatprep.subr.bf16.mxu0 0
        %2199 = vmatpush1.bf16.msra.mxu0 0
        %2200 = vmatprep.subr.bf16.mxu0 0
        %2201 = vmatpush1.bf16.msra.mxu0 0
        %2202 = vmatprep.subr.bf16.mxu0 0
        %2203 = vmatpush1.bf16.msra.mxu0 %v2186
        %2204 = vmatprep.subr.bf16.mxu0 0
        %2205 = vmatpush2.bf16.msra.mxu0 0
        %2206 = vmatprep.subr.bf16.mxu0 0
        %2207 = vmatpush2.bf16.msra.mxu0 0
        %2208 = vmatprep.subr.bf16.mxu0 0
        %2209 = vmatpush2.bf16.msra.mxu0 0
        %2210 = vmatprep.subr.bf16.mxu0 0
        %2211 = vmatpush2.bf16.msra.mxu0 0
        %2212 = vmatprep.subr.bf16.mxu0 0
        %2213 = vmatpush2.bf16.msra.mxu0 0
        %2214 = vmatprep.subr.bf16.mxu0 0
        %2215 = vmatpush2.bf16.msra.mxu0 0
        %2216 = vmatprep.subr.bf16.mxu0 0
        %2217 = vmatpush2.bf16.msra.mxu0 0
        %2218 = vmatprep.subr.bf16.mxu0 0
        %2219 = vmatpush2.bf16.msra.mxu0 0
        %2220 = vmatprep.mubr.bf16.mxu0 0
        %2221 = vmatmul.mubr.bf16.gmra.mxu0 %v1903
        %v2222 = vpop.f32.mrf.mxu0
        %v2223 = vadd.f32 0.0, %v2222
        %v2224 = vpop.f32.mrf.mxu0
        %v2225 = vpop.f32.mrf.mxu0
        %v2226 = vadd.f32 0.0, %v2225
        %v2227 = vpop.f32.mrf.mxu0
        %2228 = vmatprep.mubr.bf16.mxu0 0
        %2229 = vmatmul.mubr.bf16.gmra.mxu0 %v1906
        %v2230 = vpop.f32.mrf.mxu0
        %v2231 = vadd.f32 0.0, %v2230
        %v2232 = vpop.f32.mrf.mxu0
        %v2233 = vpop.f32.mrf.mxu0
        %v2234 = vadd.f32 0.0, %v2233
        %v2235 = vpop.f32.mrf.mxu0
        %2236 = vmatprep.mubr.bf16.mxu0 0
        %2237 = vmatmul.mubr.bf16.gmra.mxu0 %v1909
        %v2238 = vpop.f32.mrf.mxu0
        %v2239 = vadd.f32 0.0, %v2238
        %v2240 = vpop.f32.mrf.mxu0
        %v2241 = vpop.f32.mrf.mxu0
        %v2242 = vadd.f32 0.0, %v2241
        %v2243 = vpop.f32.mrf.mxu0
        %2244 = vmatprep.mubr.bf16.mxu0 0
        %2245 = vmatmul.mubr.bf16.gmra.mxu0 %v1912
        %v2246 = vpop.f32.mrf.mxu0
        %v2247 = vadd.f32 0.0, %v2246
        %v2248 = vpop.f32.mrf.mxu0
        %v2249 = vpop.f32.mrf.mxu0
        %v2250 = vadd.f32 0.0, %v2249
        %v2251 = vpop.f32.mrf.mxu0
        %2252 = vmatprep.mubr.bf16.mxu0 0
        %2253 = vmatmul.mubr.bf16.gmra.mxu0 %v1915
        %v2254 = vpop.f32.mrf.mxu0
        %v2255 = vadd.f32 0.0, %v2254
        %v2256 = vpop.f32.mrf.mxu0
        %v2257 = vpop.f32.mrf.mxu0
        %v2258 = vadd.f32 0.0, %v2257
        %v2259 = vpop.f32.mrf.mxu0
        %2260 = vmatprep.mubr.bf16.mxu0 0
        %2261 = vmatmul.mubr.bf16.gmra.mxu0 %v1918
        %v2262 = vpop.f32.mrf.mxu0
        %v2263 = vadd.f32 0.0, %v2262
        %v2264 = vpop.f32.mrf.mxu0
        %v2265 = vpop.f32.mrf.mxu0
        %v2266 = vadd.f32 0.0, %v2265
        %v2267 = vpop.f32.mrf.mxu0
        %2268 = vmatprep.mubr.bf16.mxu0 0
        %2269 = vmatmul.mubr.bf16.gmra.mxu0 %v1921
        %v2270 = vpop.f32.mrf.mxu0
        %v2271 = vadd.f32 0.0, %v2270
        %v2272 = vpop.f32.mrf.mxu0
        %v2273 = vpop.f32.mrf.mxu0
        %v2274 = vadd.f32 0.0, %v2273
        %v2275 = vpop.f32.mrf.mxu0
        %2276 = vmatprep.mubr.bf16.mxu0 0
        %2277 = vmatmul.mubr.bf16.gmra.mxu0 %v1924
        %v2278 = vpop.f32.mrf.mxu0
        %v2279 = vadd.f32 0.0, %v2278
        %v2280 = vpop.f32.mrf.mxu0
        %v2281 = vpop.f32.mrf.mxu0
        %v2282 = vadd.f32 0.0, %v2281
        %v2283 = vpop.f32.mrf.mxu0
        %2284 = vmatprep.mubr.bf16.mxu0 0
        %2285 = vmatmul.mubr.bf16.gmra.mxu0 %v1927
        %v2286 = vpop.f32.mrf.mxu0
        %v2287 = vadd.f32 0.0, %v2286
        %v2288 = vpop.f32.mrf.mxu0
        %v2289 = vpop.f32.mrf.mxu0
        %v2290 = vadd.f32 0.0, %v2289
        %v2291 = vpop.f32.mrf.mxu0
        %2292 = vmatprep.mubr.bf16.mxu0 0
        %2293 = vmatmul.mubr.bf16.gmra.mxu0 %v1930
        %v2294 = vpop.f32.mrf.mxu0
        %v2295 = vadd.f32 0.0, %v2294
        %v2296 = vpop.f32.mrf.mxu0
        %v2297 = vpop.f32.mrf.mxu0
        %v2298 = vadd.f32 0.0, %v2297
        %v2299 = vpop.f32.mrf.mxu0
        %2300 = vmatprep.mubr.bf16.mxu0 0
        %2301 = vmatmul.mubr.bf16.gmra.mxu0 %v1933
        %v2302 = vpop.f32.mrf.mxu0
        %v2303 = vadd.f32 0.0, %v2302
        %v2304 = vpop.f32.mrf.mxu0
        %v2305 = vpop.f32.mrf.mxu0
        %v2306 = vadd.f32 0.0, %v2305
        %v2307 = vpop.f32.mrf.mxu0
        %2308 = vmatprep.mubr.bf16.mxu0 0
        %2309 = vmatmul.mubr.bf16.gmra.mxu0 %v1936
        %v2310 = vpop.f32.mrf.mxu0
        %v2311 = vadd.f32 0.0, %v2310
        %v2312 = vpop.f32.mrf.mxu0
        %v2313 = vpop.f32.mrf.mxu0
        %v2314 = vadd.f32 0.0, %v2313
        %v2315 = vpop.f32.mrf.mxu0
        %2316 = vmatprep.mubr.bf16.mxu0 0
        %2317 = vmatmul.mubr.bf16.gmra.mxu0 %v1939
        %v2318 = vpop.f32.mrf.mxu0
        %v2319 = vadd.f32 0.0, %v2318
        %v2320 = vpop.f32.mrf.mxu0
        %v2321 = vpop.f32.mrf.mxu0
        %v2322 = vadd.f32 0.0, %v2321
        %v2323 = vpop.f32.mrf.mxu0
        %2324 = vmatprep.mubr.bf16.mxu0 0
        %2325 = vmatmul.mubr.bf16.gmra.mxu0 %v1942
        %v2326 = vpop.f32.mrf.mxu0
        %v2327 = vadd.f32 0.0, %v2326
        %v2328 = vpop.f32.mrf.mxu0
        %v2329 = vpop.f32.mrf.mxu0
        %v2330 = vadd.f32 0.0, %v2329
        %v2331 = vpop.f32.mrf.mxu0
        %2332 = vmatprep.mubr.bf16.mxu0 0
        %2333 = vmatmul.mubr.bf16.gmra.mxu0 %v1945
        %v2334 = vpop.f32.mrf.mxu0
        %v2335 = vadd.f32 0.0, %v2334
        %v2336 = vpop.f32.mrf.mxu0
        %v2337 = vpop.f32.mrf.mxu0
        %v2338 = vadd.f32 0.0, %v2337
        %v2339 = vpop.f32.mrf.mxu0
        %2340 = vmatprep.mubr.bf16.mxu0 0
        %2341 = vmatmul.mubr.bf16.gmra.mxu0 %v1948
        %v2342 = vpop.f32.mrf.mxu0
        %v2343 = vadd.f32 0.0, %v2342
        %v2344 = vpop.f32.mrf.mxu0
        %v2345 = vpop.f32.mrf.mxu0
        %v2346 = vadd.f32 0.0, %v2345
        %v2347 = vpop.f32.mrf.mxu0
        %2348 = vmatprep.mubr.bf16.mxu0 0
        %2349 = vmatmul.mubr.bf16.gmra.mxu0 %v2180
        %v2350 = vpop.f32.mrf.mxu0
        %v2351 = vadd.f32 0.0, %v2350
        %v2352 = vpop.f32.mrf.mxu0
        %v2353 = vpop.f32.mrf.mxu0
        %v2354 = vadd.f32 0.0, %v2353
        %v2355 = vpop.f32.mrf.mxu0
        %2356 = vmatprep.mubr.bf16.mxu0 0
        %2357 = vmatmul.mubr.bf16.gmra.mxu0 %v2183
        %v2358 = vpop.f32.mrf.mxu0
        %v2359 = vadd.f32 0.0, %v2358
        %v2360 = vpop.f32.mrf.mxu0
        %v2361 = vpop.f32.mrf.mxu0
        %v2362 = vadd.f32 0.0, %v2361
        %v2363 = vpop.f32.mrf.mxu0
        %2364 = vdwg.mxu0
        %v2365 = vadd.f32 %v2133, %v2223
        %v2366 = vadd.f32 %v2134, %v2226
        %v2367 = vadd.f32 %v2135, %v2231
        %v2368 = vadd.f32 %v2136, %v2234
        %v2369 = vadd.f32 %v2137, %v2239
        %v2370 = vadd.f32 %v2138, %v2242
        %v2371 = vadd.f32 %v2139, %v2247
        %v2372 = vadd.f32 %v2140, %v2250
        %v2373 = vadd.f32 %v2141, %v2255
        %v2374 = vadd.f32 %v2142, %v2258
        %v2375 = vadd.f32 %v2143, %v2263
        %v2376 = vadd.f32 %v2144, %v2266
        %v2377 = vadd.f32 %v2145, %v2271
        %v2378 = vadd.f32 %v2146, %v2274
        %v2379 = vadd.f32 %v2147, %v2279
        %v2380 = vadd.f32 %v2148, %v2282
        %v2381 = vadd.f32 %v2149, %v2287
        %v2382 = vadd.f32 %v2150, %v2290
        %v2383 = vadd.f32 %v2151, %v2295
        %v2384 = vadd.f32 %v2152, %v2298
        %v2385 = vadd.f32 %v2153, %v2303
        %v2386 = vadd.f32 %v2154, %v2306
        %v2387 = vadd.f32 %v2155, %v2311
        %v2388 = vadd.f32 %v2156, %v2314
        %v2389 = vadd.f32 %v2157, %v2319
        %v2390 = vadd.f32 %v2158, %v2322
        %v2391 = vadd.f32 %v2159, %v2327
        %v2392 = vadd.f32 %v2160, %v2330
        %v2393 = vadd.f32 %v2161, %v2335
        %v2394 = vadd.f32 %v2162, %v2338
        %v2395 = vadd.f32 %v2163, %v2343
        %v2396 = vadd.f32 %v2164, %v2346
        %v2397 = vadd.f32 %v2165, %v2351
        %v2398 = vadd.f32 %v2166, %v2354
        %v2399 = vadd.f32 %v2167, %v2359
        %v2400 = vadd.f32 %v2168, %v2362
        %s2401 = scalar_lea.vmem %s2, 14
        %v2402 = vld [vmem:[%s2401] sm:$0x3]
        %vm2403 = vsmask.f32 5376
        %v2404 = vrot.slane %v374, 2
        %v2405 = vrot.slane %v370, 3
        %v2406 = vor.u32 %v2404, %v2405
        %v2407 = vrot.slane %v382, 2
        %v2408 = vrot.slane %v378, 3
        %v2409 = vor.u32 %v2407, %v2408
        %v2410 = vsel %vm2403, %v2406, %v2409
        %v2411 = vrot.slane %v390, 2
        %v2412 = vrot.slane %v386, 3
        %v2413 = vor.u32 %v2411, %v2412
        %v2414 = vsel %vm2403, %v2409, %v2413
        %v2415 = vrot.slane %v398, 2
        %v2416 = vrot.slane %v394, 3
        %v2417 = vor.u32 %v2415, %v2416
        %v2418 = vsel %vm2403, %v2413, %v2417
        %v2419 = vrot.slane %v406, 2
        %v2420 = vrot.slane %v402, 3
        %v2421 = vor.u32 %v2419, %v2420
        %v2422 = vsel %vm2403, %v2417, %v2421
        %v2423 = vrot.slane %v414, 2
        %v2424 = vrot.slane %v410, 3
        %v2425 = vor.u32 %v2423, %v2424
        %v2426 = vsel %vm2403, %v2421, %v2425
        %v2427 = vrot.slane %v422, 2
        %v2428 = vrot.slane %v418, 3
        %v2429 = vor.u32 %v2427, %v2428
        %v2430 = vsel %vm2403, %v2425, %v2429
        %v2431 = vrot.slane %v430, 2
        %v2432 = vrot.slane %v426, 3
        %v2433 = vor.u32 %v2431, %v2432
        %v2434 = vsel %vm2403, %v2429, %v2433
        %v2435 = vrot.slane %v438, 2
        %v2436 = vrot.slane %v434, 3
        %v2437 = vor.u32 %v2435, %v2436
        %v2438 = vsel %vm2403, %v2433, %v2437
        %v2439 = vrot.slane %v446, 2
        %v2440 = vrot.slane %v442, 3
        %v2441 = vor.u32 %v2439, %v2440
        %v2442 = vsel %vm2403, %v2437, %v2441
        %v2443 = vrot.slane %v454, 2
        %v2444 = vrot.slane %v450, 3
        %v2445 = vor.u32 %v2443, %v2444
        %v2446 = vsel %vm2403, %v2441, %v2445
        %v2447 = vrot.slane %v462, 2
        %v2448 = vrot.slane %v458, 3
        %v2449 = vor.u32 %v2447, %v2448
        %v2450 = vsel %vm2403, %v2445, %v2449
        %v2451 = vrot.slane %v470, 2
        %v2452 = vrot.slane %v466, 3
        %v2453 = vor.u32 %v2451, %v2452
        %v2454 = vsel %vm2403, %v2449, %v2453
        %v2455 = vrot.slane %v478, 2
        %v2456 = vrot.slane %v474, 3
        %v2457 = vor.u32 %v2455, %v2456
        %v2458 = vsel %vm2403, %v2453, %v2457
        %v2459 = vrot.slane %v486, 2
        %v2460 = vrot.slane %v482, 3
        %v2461 = vor.u32 %v2459, %v2460
        %v2462 = vsel %vm2403, %v2457, %v2461
        %v2463 = vrot.slane %v494, 2
        %v2464 = vrot.slane %v490, 3
        %v2465 = vor.u32 %v2463, %v2464
        %v2466 = vsel %vm2403, %v2461, %v2465
        %v2467 = vrot.slane %v1575, 2
        %v2468 = vrot.slane %v1578, 3
        %v2469 = vor.u32 %v2467, %v2468
        %v2470 = vsel %vm2403, %v2465, %v2469
        %v2472 = vshrl.u32 %v2169, 16
        %v2474 = vrot.slane %v2472, 2
        %v2475 = vshll.u32 %v2169, 16
        %v2477 = vrot.slane %v2475, 3
        %v2478 = vor.u32 %v2474, %v2477
        %v2479 = vsel %vm2403, %v2469, %v2478
        %v2481 = vshrl.u32 %v2170, 16
        %v2483 = vrot.slane %v2481, 2
        %v2484 = vshll.u32 %v2170, 16
        %v2486 = vrot.slane %v2484, 3
        %v2487 = vor.u32 %v2483, %v2486
        %v2488 = vsel %vm2403, %v2478, %v2487
        %v2490 = vsel %vm497, %v2410, 0
        %v2493 = vsel %vm497, %v2414, 0
        %v2496 = vsel %vm497, %v2418, 0
        %v2499 = vsel %vm497, %v2422, 0
        %v2502 = vsel %vm497, %v2426, 0
        %v2505 = vsel %vm497, %v2430, 0
        %v2508 = vsel %vm497, %v2434, 0
        %v2511 = vsel %vm497, %v2438, 0
        %v2514 = vsel %vm497, %v2442, 0
        %v2517 = vsel %vm497, %v2446, 0
        %v2520 = vsel %vm497, %v2450, 0
        %v2523 = vsel %vm497, %v2454, 0
        %v2526 = vsel %vm497, %v2458, 0
        %v2529 = vsel %vm497, %v2462, 0
        %v2532 = vsel %vm497, %v2466, 0
        %v2535 = vsel %vm497, %v2470, 0
        %v2538 = vsel %vm497, %v2479, 0
        %v2541 = vsel %vm497, %v2488, 0
        %v2544 = vsel %vm552, %v2402, 0
        %2546 = vmatprep.subr.bf16.mxu0 0
        %2547 = vmatpush1.bf16.msra.mxu0 0
        %2548 = vmatprep.subr.bf16.mxu0 0
        %2549 = vmatpush1.bf16.msra.mxu0 0
        %2550 = vmatprep.subr.bf16.mxu0 0
        %2551 = vmatpush1.bf16.msra.mxu0 0
        %2552 = vmatprep.subr.bf16.mxu0 0
        %2553 = vmatpush1.bf16.msra.mxu0 0
        %2554 = vmatprep.subr.bf16.mxu0 0
        %2555 = vmatpush1.bf16.msra.mxu0 0
        %2556 = vmatprep.subr.bf16.mxu0 0
        %2557 = vmatpush1.bf16.msra.mxu0 0
        %2558 = vmatprep.subr.bf16.mxu0 0
        %2559 = vmatpush1.bf16.msra.mxu0 0
        %2560 = vmatprep.subr.bf16.mxu0 0
        %2561 = vmatpush1.bf16.msra.mxu0 %v2544
        %2562 = vmatprep.subr.bf16.mxu0 0
        %2563 = vmatpush2.bf16.msra.mxu0 0
        %2564 = vmatprep.subr.bf16.mxu0 0
        %2565 = vmatpush2.bf16.msra.mxu0 0
        %2566 = vmatprep.subr.bf16.mxu0 0
        %2567 = vmatpush2.bf16.msra.mxu0 0
        %2568 = vmatprep.subr.bf16.mxu0 0
        %2569 = vmatpush2.bf16.msra.mxu0 0
        %2570 = vmatprep.subr.bf16.mxu0 0
        %2571 = vmatpush2.bf16.msra.mxu0 0
        %2572 = vmatprep.subr.bf16.mxu0 0
        %2573 = vmatpush2.bf16.msra.mxu0 0
        %2574 = vmatprep.subr.bf16.mxu0 0
        %2575 = vmatpush2.bf16.msra.mxu0 0
        %2576 = vmatprep.subr.bf16.mxu0 0
        %2577 = vmatpush2.bf16.msra.mxu0 0
        %2578 = vmatprep.mubr.bf16.mxu0 0
        %2579 = vmatmul.mubr.bf16.gmra.mxu0 %v2490
        %v2580 = vpop.f32.mrf.mxu0
        %v2581 = vadd.f32 0.0, %v2580
        %v2582 = vpop.f32.mrf.mxu0
        %v2583 = vpop.f32.mrf.mxu0
        %v2584 = vadd.f32 0.0, %v2583
        %v2585 = vpop.f32.mrf.mxu0
        %2586 = vmatprep.mubr.bf16.mxu0 0
        %2587 = vmatmul.mubr.bf16.gmra.mxu0 %v2493
        %v2588 = vpop.f32.mrf.mxu0
        %v2589 = vadd.f32 0.0, %v2588
        %v2590 = vpop.f32.mrf.mxu0
        %v2591 = vpop.f32.mrf.mxu0
        %v2592 = vadd.f32 0.0, %v2591
        %v2593 = vpop.f32.mrf.mxu0
        %2594 = vmatprep.mubr.bf16.mxu0 0
        %2595 = vmatmul.mubr.bf16.gmra.mxu0 %v2496
        %v2596 = vpop.f32.mrf.mxu0
        %v2597 = vadd.f32 0.0, %v2596
        %v2598 = vpop.f32.mrf.mxu0
        %v2599 = vpop.f32.mrf.mxu0
        %v2600 = vadd.f32 0.0, %v2599
        %v2601 = vpop.f32.mrf.mxu0
        %2602 = vmatprep.mubr.bf16.mxu0 0
        %2603 = vmatmul.mubr.bf16.gmra.mxu0 %v2499
        %v2604 = vpop.f32.mrf.mxu0
        %v2605 = vadd.f32 0.0, %v2604
        %v2606 = vpop.f32.mrf.mxu0
        %v2607 = vpop.f32.mrf.mxu0
        %v2608 = vadd.f32 0.0, %v2607
        %v2609 = vpop.f32.mrf.mxu0
        %2610 = vmatprep.mubr.bf16.mxu0 0
        %2611 = vmatmul.mubr.bf16.gmra.mxu0 %v2502
        %v2612 = vpop.f32.mrf.mxu0
        %v2613 = vadd.f32 0.0, %v2612
        %v2614 = vpop.f32.mrf.mxu0
        %v2615 = vpop.f32.mrf.mxu0
        %v2616 = vadd.f32 0.0, %v2615
        %v2617 = vpop.f32.mrf.mxu0
        %2618 = vmatprep.mubr.bf16.mxu0 0
        %2619 = vmatmul.mubr.bf16.gmra.mxu0 %v2505
        %v2620 = vpop.f32.mrf.mxu0
        %v2621 = vadd.f32 0.0, %v2620
        %v2622 = vpop.f32.mrf.mxu0
        %v2623 = vpop.f32.mrf.mxu0
        %v2624 = vadd.f32 0.0, %v2623
        %v2625 = vpop.f32.mrf.mxu0
        %2626 = vmatprep.mubr.bf16.mxu0 0
        %2627 = vmatmul.mubr.bf16.gmra.mxu0 %v2508
        %v2628 = vpop.f32.mrf.mxu0
        %v2629 = vadd.f32 0.0, %v2628
        %v2630 = vpop.f32.mrf.mxu0
        %v2631 = vpop.f32.mrf.mxu0
        %v2632 = vadd.f32 0.0, %v2631
        %v2633 = vpop.f32.mrf.mxu0
        %2634 = vmatprep.mubr.bf16.mxu0 0
        %2635 = vmatmul.mubr.bf16.gmra.mxu0 %v2511
        %v2636 = vpop.f32.mrf.mxu0
        %v2637 = vadd.f32 0.0, %v2636
        %v2638 = vpop.f32.mrf.mxu0
        %v2639 = vpop.f32.mrf.mxu0
        %v2640 = vadd.f32 0.0, %v2639
        %v2641 = vpop.f32.mrf.mxu0
        %2642 = vmatprep.mubr.bf16.mxu0 0
        %2643 = vmatmul.mubr.bf16.gmra.mxu0 %v2514
        %v2644 = vpop.f32.mrf.mxu0
        %v2645 = vadd.f32 0.0, %v2644
        %v2646 = vpop.f32.mrf.mxu0
        %v2647 = vpop.f32.mrf.mxu0
        %v2648 = vadd.f32 0.0, %v2647
        %v2649 = vpop.f32.mrf.mxu0
        %2650 = vmatprep.mubr.bf16.mxu0 0
        %2651 = vmatmul.mubr.bf16.gmra.mxu0 %v2517
        %v2652 = vpop.f32.mrf.mxu0
        %v2653 = vadd.f32 0.0, %v2652
        %v2654 = vpop.f32.mrf.mxu0
        %v2655 = vpop.f32.mrf.mxu0
        %v2656 = vadd.f32 0.0, %v2655
        %v2657 = vpop.f32.mrf.mxu0
        %2658 = vmatprep.mubr.bf16.mxu0 0
        %2659 = vmatmul.mubr.bf16.gmra.mxu0 %v2520
        %v2660 = vpop.f32.mrf.mxu0
        %v2661 = vadd.f32 0.0, %v2660
        %v2662 = vpop.f32.mrf.mxu0
        %v2663 = vpop.f32.mrf.mxu0
        %v2664 = vadd.f32 0.0, %v2663
        %v2665 = vpop.f32.mrf.mxu0
        %2666 = vmatprep.mubr.bf16.mxu0 0
        %2667 = vmatmul.mubr.bf16.gmra.mxu0 %v2523
        %v2668 = vpop.f32.mrf.mxu0
        %v2669 = vadd.f32 0.0, %v2668
        %v2670 = vpop.f32.mrf.mxu0
        %v2671 = vpop.f32.mrf.mxu0
        %v2672 = vadd.f32 0.0, %v2671
        %v2673 = vpop.f32.mrf.mxu0
        %2674 = vmatprep.mubr.bf16.mxu0 0
        %2675 = vmatmul.mubr.bf16.gmra.mxu0 %v2526
        %v2676 = vpop.f32.mrf.mxu0
        %v2677 = vadd.f32 0.0, %v2676
        %v2678 = vpop.f32.mrf.mxu0
        %v2679 = vpop.f32.mrf.mxu0
        %v2680 = vadd.f32 0.0, %v2679
        %v2681 = vpop.f32.mrf.mxu0
        %2682 = vmatprep.mubr.bf16.mxu0 0
        %2683 = vmatmul.mubr.bf16.gmra.mxu0 %v2529
        %v2684 = vpop.f32.mrf.mxu0
        %v2685 = vadd.f32 0.0, %v2684
        %v2686 = vpop.f32.mrf.mxu0
        %v2687 = vpop.f32.mrf.mxu0
        %v2688 = vadd.f32 0.0, %v2687
        %v2689 = vpop.f32.mrf.mxu0
        %2690 = vmatprep.mubr.bf16.mxu0 0
        %2691 = vmatmul.mubr.bf16.gmra.mxu0 %v2532
        %v2692 = vpop.f32.mrf.mxu0
        %v2693 = vadd.f32 0.0, %v2692
        %v2694 = vpop.f32.mrf.mxu0
        %v2695 = vpop.f32.mrf.mxu0
        %v2696 = vadd.f32 0.0, %v2695
        %v2697 = vpop.f32.mrf.mxu0
        %2698 = vmatprep.mubr.bf16.mxu0 0
        %2699 = vmatmul.mubr.bf16.gmra.mxu0 %v2535
        %v2700 = vpop.f32.mrf.mxu0
        %v2701 = vadd.f32 0.0, %v2700
        %v2702 = vpop.f32.mrf.mxu0
        %v2703 = vpop.f32.mrf.mxu0
        %v2704 = vadd.f32 0.0, %v2703
        %v2705 = vpop.f32.mrf.mxu0
        %2706 = vmatprep.mubr.bf16.mxu0 0
        %2707 = vmatmul.mubr.bf16.gmra.mxu0 %v2538
        %v2708 = vpop.f32.mrf.mxu0
        %v2709 = vadd.f32 0.0, %v2708
        %v2710 = vpop.f32.mrf.mxu0
        %v2711 = vpop.f32.mrf.mxu0
        %v2712 = vadd.f32 0.0, %v2711
        %v2713 = vpop.f32.mrf.mxu0
        %2714 = vmatprep.mubr.bf16.mxu0 0
        %2715 = vmatmul.mubr.bf16.gmra.mxu0 %v2541
        %v2716 = vpop.f32.mrf.mxu0
        %v2717 = vadd.f32 0.0, %v2716
        %v2718 = vpop.f32.mrf.mxu0
        %v2719 = vpop.f32.mrf.mxu0
        %v2720 = vadd.f32 0.0, %v2719
        %v2721 = vpop.f32.mrf.mxu0
        %2722 = vdwg.mxu0
        %v2723 = vadd.f32 %v2365, %v2581
        %v2724 = vadd.f32 %v2366, %v2584
        %v2725 = vadd.f32 %v2367, %v2589
        %v2726 = vadd.f32 %v2368, %v2592
        %v2727 = vadd.f32 %v2369, %v2597
        %v2728 = vadd.f32 %v2370, %v2600
        %v2729 = vadd.f32 %v2371, %v2605
        %v2730 = vadd.f32 %v2372, %v2608
        %v2731 = vadd.f32 %v2373, %v2613
        %v2732 = vadd.f32 %v2374, %v2616
        %v2733 = vadd.f32 %v2375, %v2621
        %v2734 = vadd.f32 %v2376, %v2624
        %v2735 = vadd.f32 %v2377, %v2629
        %v2736 = vadd.f32 %v2378, %v2632
        %v2737 = vadd.f32 %v2379, %v2637
        %v2738 = vadd.f32 %v2380, %v2640
        %v2739 = vadd.f32 %v2381, %v2645
        %v2740 = vadd.f32 %v2382, %v2648
        %v2741 = vadd.f32 %v2383, %v2653
        %v2742 = vadd.f32 %v2384, %v2656
        %v2743 = vadd.f32 %v2385, %v2661
        %v2744 = vadd.f32 %v2386, %v2664
        %v2745 = vadd.f32 %v2387, %v2669
        %v2746 = vadd.f32 %v2388, %v2672
        %v2747 = vadd.f32 %v2389, %v2677
        %v2748 = vadd.f32 %v2390, %v2680
        %v2749 = vadd.f32 %v2391, %v2685
        %v2750 = vadd.f32 %v2392, %v2688
        %v2751 = vadd.f32 %v2393, %v2693
        %v2752 = vadd.f32 %v2394, %v2696
        %v2753 = vadd.f32 %v2395, %v2701
        %v2754 = vadd.f32 %v2396, %v2704
        %v2755 = vadd.f32 %v2397, %v2709
        %v2756 = vadd.f32 %v2398, %v2712
        %v2757 = vadd.f32 %v2399, %v2717
        %v2758 = vadd.f32 %v2400, %v2720
        %s2759 = scalar_lea.vmem %s2, 16
        %v2760 = vld [vmem:[%s2759] sm:$0x3]
        %vm2761 = vcmask 1044480
        %v2762 = vrot.slane %v334, 3
        %v2763 = vrot.slane %v335, 3
        %v2764 = vsel %vm2761, %v2762, %v2763
        %v2765 = vrot.slane %v336, 3
        %v2766 = vsel %vm2761, %v2763, %v2765
        %v2767 = vrot.slane %v337, 3
        %v2768 = vsel %vm2761, %v2765, %v2767
        %v2769 = vrot.slane %v338, 3
        %v2770 = vsel %vm2761, %v2767, %v2769
        %v2771 = vrot.slane %v339, 3
        %v2772 = vsel %vm2761, %v2769, %v2771
        %v2773 = vrot.slane %v340, 3
        %v2774 = vsel %vm2761, %v2771, %v2773
        %v2775 = vrot.slane %v341, 3
        %v2776 = vsel %vm2761, %v2773, %v2775
        %v2777 = vrot.slane %v342, 3
        %v2778 = vsel %vm2761, %v2775, %v2777
        %v2779 = vrot.slane %v343, 3
        %v2780 = vsel %vm2761, %v2777, %v2779
        %v2781 = vrot.slane %v344, 3
        %v2782 = vsel %vm2761, %v2779, %v2781
        %v2783 = vrot.slane %v345, 3
        %v2784 = vsel %vm2761, %v2781, %v2783
        %v2785 = vrot.slane %v346, 3
        %v2786 = vsel %vm2761, %v2783, %v2785
        %v2787 = vrot.slane %v347, 3
        %v2788 = vsel %vm2761, %v2785, %v2787
        %v2789 = vrot.slane %v348, 3
        %v2790 = vsel %vm2761, %v2787, %v2789
        %v2791 = vrot.slane %v349, 3
        %v2792 = vsel %vm2761, %v2789, %v2791
        %v2793 = vrot.slane %v1275, 3
        %v2794 = vsel %vm2761, %v2791, %v2793
        %v2795 = vrot.slane %v2169, 3
        %v2796 = vsel %vm2761, %v2793, %v2795
        %v2797 = vrot.slane %v2170, 3
        %v2798 = vsel %vm2761, %v2795, %v2797
        %v2800 = vsel %vm497, %v2764, 0
        %v2803 = vsel %vm497, %v2766, 0
        %v2806 = vsel %vm497, %v2768, 0
        %v2809 = vsel %vm497, %v2770, 0
        %v2812 = vsel %vm497, %v2772, 0
        %v2815 = vsel %vm497, %v2774, 0
        %v2818 = vsel %vm497, %v2776, 0
        %v2821 = vsel %vm497, %v2778, 0
        %v2824 = vsel %vm497, %v2780, 0
        %v2827 = vsel %vm497, %v2782, 0
        %v2830 = vsel %vm497, %v2784, 0
        %v2833 = vsel %vm497, %v2786, 0
        %v2836 = vsel %vm497, %v2788, 0
        %v2839 = vsel %vm497, %v2790, 0
        %v2842 = vsel %vm497, %v2792, 0
        %v2845 = vsel %vm497, %v2794, 0
        %v2848 = vsel %vm497, %v2796, 0
        %v2851 = vsel %vm497, %v2798, 0
        %v2854 = vsel %vm552, %v2760, 0
        %2856 = vmatprep.subr.bf16.mxu0 0
        %2857 = vmatpush1.bf16.msra.mxu0 0
        %2858 = vmatprep.subr.bf16.mxu0 0
        %2859 = vmatpush1.bf16.msra.mxu0 0
        %2860 = vmatprep.subr.bf16.mxu0 0
        %2861 = vmatpush1.bf16.msra.mxu0 0
        %2862 = vmatprep.subr.bf16.mxu0 0
        %2863 = vmatpush1.bf16.msra.mxu0 0
        %2864 = vmatprep.subr.bf16.mxu0 0
        %2865 = vmatpush1.bf16.msra.mxu0 0
        %2866 = vmatprep.subr.bf16.mxu0 0
        %2867 = vmatpush1.bf16.msra.mxu0 0
        %2868 = vmatprep.subr.bf16.mxu0 0
        %2869 = vmatpush1.bf16.msra.mxu0 0
        %2870 = vmatprep.subr.bf16.mxu0 0
        %2871 = vmatpush1.bf16.msra.mxu0 %v2854
        %2872 = vmatprep.subr.bf16.mxu0 0
        %2873 = vmatpush2.bf16.msra.mxu0 0
        %2874 = vmatprep.subr.bf16.mxu0 0
        %2875 = vmatpush2.bf16.msra.mxu0 0
        %2876 = vmatprep.subr.bf16.mxu0 0
        %2877 = vmatpush2.bf16.msra.mxu0 0
        %2878 = vmatprep.subr.bf16.mxu0 0
        %2879 = vmatpush2.bf16.msra.mxu0 0
        %2880 = vmatprep.subr.bf16.mxu0 0
        %2881 = vmatpush2.bf16.msra.mxu0 0
        %2882 = vmatprep.subr.bf16.mxu0 0
        %2883 = vmatpush2.bf16.msra.mxu0 0
        %2884 = vmatprep.subr.bf16.mxu0 0
        %2885 = vmatpush2.bf16.msra.mxu0 0
        %2886 = vmatprep.subr.bf16.mxu0 0
        %2887 = vmatpush2.bf16.msra.mxu0 0
        %2888 = vmatprep.mubr.bf16.mxu0 0
        %2889 = vmatmul.mubr.bf16.gmra.mxu0 %v2800
        %v2890 = vpop.f32.mrf.mxu0
        %v2891 = vadd.f32 0.0, %v2890
        %v2892 = vpop.f32.mrf.mxu0
        %v2893 = vpop.f32.mrf.mxu0
        %v2894 = vadd.f32 0.0, %v2893
        %v2895 = vpop.f32.mrf.mxu0
        %2896 = vmatprep.mubr.bf16.mxu0 0
        %2897 = vmatmul.mubr.bf16.gmra.mxu0 %v2803
        %v2898 = vpop.f32.mrf.mxu0
        %v2899 = vadd.f32 0.0, %v2898
        %v2900 = vpop.f32.mrf.mxu0
        %v2901 = vpop.f32.mrf.mxu0
        %v2902 = vadd.f32 0.0, %v2901
        %v2903 = vpop.f32.mrf.mxu0
        %2904 = vmatprep.mubr.bf16.mxu0 0
        %2905 = vmatmul.mubr.bf16.gmra.mxu0 %v2806
        %v2906 = vpop.f32.mrf.mxu0
        %v2907 = vadd.f32 0.0, %v2906
        %v2908 = vpop.f32.mrf.mxu0
        %v2909 = vpop.f32.mrf.mxu0
        %v2910 = vadd.f32 0.0, %v2909
        %v2911 = vpop.f32.mrf.mxu0
        %2912 = vmatprep.mubr.bf16.mxu0 0
        %2913 = vmatmul.mubr.bf16.gmra.mxu0 %v2809
        %v2914 = vpop.f32.mrf.mxu0
        %v2915 = vadd.f32 0.0, %v2914
        %v2916 = vpop.f32.mrf.mxu0
        %v2917 = vpop.f32.mrf.mxu0
        %v2918 = vadd.f32 0.0, %v2917
        %v2919 = vpop.f32.mrf.mxu0
        %2920 = vmatprep.mubr.bf16.mxu0 0
        %2921 = vmatmul.mubr.bf16.gmra.mxu0 %v2812
        %v2922 = vpop.f32.mrf.mxu0
        %v2923 = vadd.f32 0.0, %v2922
        %v2924 = vpop.f32.mrf.mxu0
        %v2925 = vpop.f32.mrf.mxu0
        %v2926 = vadd.f32 0.0, %v2925
        %v2927 = vpop.f32.mrf.mxu0
        %2928 = vmatprep.mubr.bf16.mxu0 0
        %2929 = vmatmul.mubr.bf16.gmra.mxu0 %v2815
        %v2930 = vpop.f32.mrf.mxu0
        %v2931 = vadd.f32 0.0, %v2930
        %v2932 = vpop.f32.mrf.mxu0
        %v2933 = vpop.f32.mrf.mxu0
        %v2934 = vadd.f32 0.0, %v2933
        %v2935 = vpop.f32.mrf.mxu0
        %2936 = vmatprep.mubr.bf16.mxu0 0
        %2937 = vmatmul.mubr.bf16.gmra.mxu0 %v2818
        %v2938 = vpop.f32.mrf.mxu0
        %v2939 = vadd.f32 0.0, %v2938
        %v2940 = vpop.f32.mrf.mxu0
        %v2941 = vpop.f32.mrf.mxu0
        %v2942 = vadd.f32 0.0, %v2941
        %v2943 = vpop.f32.mrf.mxu0
        %2944 = vmatprep.mubr.bf16.mxu0 0
        %2945 = vmatmul.mubr.bf16.gmra.mxu0 %v2821
        %v2946 = vpop.f32.mrf.mxu0
        %v2947 = vadd.f32 0.0, %v2946
        %v2948 = vpop.f32.mrf.mxu0
        %v2949 = vpop.f32.mrf.mxu0
        %v2950 = vadd.f32 0.0, %v2949
        %v2951 = vpop.f32.mrf.mxu0
        %2952 = vmatprep.mubr.bf16.mxu0 0
        %2953 = vmatmul.mubr.bf16.gmra.mxu0 %v2824
        %v2954 = vpop.f32.mrf.mxu0
        %v2955 = vadd.f32 0.0, %v2954
        %v2956 = vpop.f32.mrf.mxu0
        %v2957 = vpop.f32.mrf.mxu0
        %v2958 = vadd.f32 0.0, %v2957
        %v2959 = vpop.f32.mrf.mxu0
        %2960 = vmatprep.mubr.bf16.mxu0 0
        %2961 = vmatmul.mubr.bf16.gmra.mxu0 %v2827
        %v2962 = vpop.f32.mrf.mxu0
        %v2963 = vadd.f32 0.0, %v2962
        %v2964 = vpop.f32.mrf.mxu0
        %v2965 = vpop.f32.mrf.mxu0
        %v2966 = vadd.f32 0.0, %v2965
        %v2967 = vpop.f32.mrf.mxu0
        %2968 = vmatprep.mubr.bf16.mxu0 0
        %2969 = vmatmul.mubr.bf16.gmra.mxu0 %v2830
        %v2970 = vpop.f32.mrf.mxu0
        %v2971 = vadd.f32 0.0, %v2970
        %v2972 = vpop.f32.mrf.mxu0
        %v2973 = vpop.f32.mrf.mxu0
        %v2974 = vadd.f32 0.0, %v2973
        %v2975 = vpop.f32.mrf.mxu0
        %2976 = vmatprep.mubr.bf16.mxu0 0
        %2977 = vmatmul.mubr.bf16.gmra.mxu0 %v2833
        %v2978 = vpop.f32.mrf.mxu0
        %v2979 = vadd.f32 0.0, %v2978
        %v2980 = vpop.f32.mrf.mxu0
        %v2981 = vpop.f32.mrf.mxu0
        %v2982 = vadd.f32 0.0, %v2981
        %v2983 = vpop.f32.mrf.mxu0
        %2984 = vmatprep.mubr.bf16.mxu0 0
        %2985 = vmatmul.mubr.bf16.gmra.mxu0 %v2836
        %v2986 = vpop.f32.mrf.mxu0
        %v2987 = vadd.f32 0.0, %v2986
        %v2988 = vpop.f32.mrf.mxu0
        %v2989 = vpop.f32.mrf.mxu0
        %v2990 = vadd.f32 0.0, %v2989
        %v2991 = vpop.f32.mrf.mxu0
        %2992 = vmatprep.mubr.bf16.mxu0 0
        %2993 = vmatmul.mubr.bf16.gmra.mxu0 %v2839
        %v2994 = vpop.f32.mrf.mxu0
        %v2995 = vadd.f32 0.0, %v2994
        %v2996 = vpop.f32.mrf.mxu0
        %v2997 = vpop.f32.mrf.mxu0
        %v2998 = vadd.f32 0.0, %v2997
        %v2999 = vpop.f32.mrf.mxu0
        %3000 = vmatprep.mubr.bf16.mxu0 0
        %3001 = vmatmul.mubr.bf16.gmra.mxu0 %v2842
        %v3002 = vpop.f32.mrf.mxu0
        %v3003 = vadd.f32 0.0, %v3002
        %v3004 = vpop.f32.mrf.mxu0
        %v3005 = vpop.f32.mrf.mxu0
        %v3006 = vadd.f32 0.0, %v3005
        %v3007 = vpop.f32.mrf.mxu0
        %3008 = vmatprep.mubr.bf16.mxu0 0
        %3009 = vmatmul.mubr.bf16.gmra.mxu0 %v2845
        %v3010 = vpop.f32.mrf.mxu0
        %v3011 = vadd.f32 0.0, %v3010
        %v3012 = vpop.f32.mrf.mxu0
        %v3013 = vpop.f32.mrf.mxu0
        %v3014 = vadd.f32 0.0, %v3013
        %v3015 = vpop.f32.mrf.mxu0
        %3016 = vmatprep.mubr.bf16.mxu0 0
        %3017 = vmatmul.mubr.bf16.gmra.mxu0 %v2848
        %v3018 = vpop.f32.mrf.mxu0
        %v3019 = vadd.f32 0.0, %v3018
        %v3020 = vpop.f32.mrf.mxu0
        %v3021 = vpop.f32.mrf.mxu0
        %v3022 = vadd.f32 0.0, %v3021
        %v3023 = vpop.f32.mrf.mxu0
        %3024 = vmatprep.mubr.bf16.mxu0 0
        %3025 = vmatmul.mubr.bf16.gmra.mxu0 %v2851
        %v3026 = vpop.f32.mrf.mxu0
        %v3027 = vadd.f32 0.0, %v3026
        %v3028 = vpop.f32.mrf.mxu0
        %v3029 = vpop.f32.mrf.mxu0
        %v3030 = vadd.f32 0.0, %v3029
        %v3031 = vpop.f32.mrf.mxu0
        %3032 = vdwg.mxu0
        %v3033 = vadd.f32 %v2723, %v2891
        %v3034 = vadd.f32 %v2724, %v2894
        %v3035 = vadd.f32 %v2725, %v2899
        %v3036 = vadd.f32 %v2726, %v2902
        %v3037 = vadd.f32 %v2727, %v2907
        %v3038 = vadd.f32 %v2728, %v2910
        %v3039 = vadd.f32 %v2729, %v2915
        %v3040 = vadd.f32 %v2730, %v2918
        %v3041 = vadd.f32 %v2731, %v2923
        %v3042 = vadd.f32 %v2732, %v2926
        %v3043 = vadd.f32 %v2733, %v2931
        %v3044 = vadd.f32 %v2734, %v2934
        %v3045 = vadd.f32 %v2735, %v2939
        %v3046 = vadd.f32 %v2736, %v2942
        %v3047 = vadd.f32 %v2737, %v2947
        %v3048 = vadd.f32 %v2738, %v2950
        %v3049 = vadd.f32 %v2739, %v2955
        %v3050 = vadd.f32 %v2740, %v2958
        %v3051 = vadd.f32 %v2741, %v2963
        %v3052 = vadd.f32 %v2742, %v2966
        %v3053 = vadd.f32 %v2743, %v2971
        %v3054 = vadd.f32 %v2744, %v2974
        %v3055 = vadd.f32 %v2745, %v2979
        %v3056 = vadd.f32 %v2746, %v2982
        %v3057 = vadd.f32 %v2747, %v2987
        %v3058 = vadd.f32 %v2748, %v2990
        %v3059 = vadd.f32 %v2749, %v2995
        %v3060 = vadd.f32 %v2750, %v2998
        %v3061 = vadd.f32 %v2751, %v3003
        %v3062 = vadd.f32 %v2752, %v3006
        %v3063 = vadd.f32 %v2753, %v3011
        %v3064 = vadd.f32 %v2754, %v3014
        %v3065 = vadd.f32 %v2755, %v3019
        %v3066 = vadd.f32 %v2756, %v3022
        %v3067 = vadd.f32 %v2757, %v3027
        %v3068 = vadd.f32 %v2758, %v3030
        %v3069 = vld [vmem:[%s3] sm:$0x1]
        %v3071 = vlaneseq
        %v3072 = vshrl.u32 %v3071, 7
        %v3073 = vsub.s32 0, %v3072
        %v3074 = vrot.slane %v3069, %v3073
        %v3076 = vadd.f32 %v3033, %v3074
        %v3077 = vadd.f32 %v3034, %v3074
        %v3078 = vadd.f32 %v3035, %v3074
        %v3079 = vadd.f32 %v3036, %v3074
        %v3080 = vadd.f32 %v3037, %v3074
        %v3081 = vadd.f32 %v3038, %v3074
        %v3082 = vadd.f32 %v3039, %v3074
        %v3083 = vadd.f32 %v3040, %v3074
        %v3084 = vadd.f32 %v3041, %v3074
        %v3085 = vadd.f32 %v3042, %v3074
        %v3086 = vadd.f32 %v3043, %v3074
        %v3087 = vadd.f32 %v3044, %v3074
        %v3088 = vadd.f32 %v3045, %v3074
        %v3089 = vadd.f32 %v3046, %v3074
        %v3090 = vadd.f32 %v3047, %v3074
        %v3091 = vadd.f32 %v3048, %v3074
        %v3092 = vadd.f32 %v3049, %v3074
        %v3093 = vadd.f32 %v3050, %v3074
        %v3094 = vadd.f32 %v3051, %v3074
        %v3095 = vadd.f32 %v3052, %v3074
        %v3096 = vadd.f32 %v3053, %v3074
        %v3097 = vadd.f32 %v3054, %v3074
        %v3098 = vadd.f32 %v3055, %v3074
        %v3099 = vadd.f32 %v3056, %v3074
        %v3100 = vadd.f32 %v3057, %v3074
        %v3101 = vadd.f32 %v3058, %v3074
        %v3102 = vadd.f32 %v3059, %v3074
        %v3103 = vadd.f32 %v3060, %v3074
        %v3104 = vadd.f32 %v3061, %v3074
        %v3105 = vadd.f32 %v3062, %v3074
        %v3106 = vadd.f32 %v3063, %v3074
        %v3107 = vadd.f32 %v3064, %v3074
        %v3108 = vadd.f32 %v3065, %v3074
        %v3109 = vadd.f32 %v3066, %v3074
        %v3110 = vadd.f32 %v3067, %v3074
        %v3111 = vadd.f32 %v3068, %v3074
        %v3112 = vmax.f32 %v3076, 0.0
        %v3113 = vmax.f32 %v3077, 0.0
        %v3114 = vmax.f32 %v3078, 0.0
        %v3115 = vmax.f32 %v3079, 0.0
        %v3116 = vmax.f32 %v3080, 0.0
        %v3117 = vmax.f32 %v3081, 0.0
        %v3118 = vmax.f32 %v3082, 0.0
        %v3119 = vmax.f32 %v3083, 0.0
        %v3120 = vmax.f32 %v3084, 0.0
        %v3121 = vmax.f32 %v3085, 0.0
        %v3122 = vmax.f32 %v3086, 0.0
        %v3123 = vmax.f32 %v3087, 0.0
        %v3124 = vmax.f32 %v3088, 0.0
        %v3125 = vmax.f32 %v3089, 0.0
        %v3126 = vmax.f32 %v3090, 0.0
        %v3127 = vmax.f32 %v3091, 0.0
        %v3128 = vmax.f32 %v3092, 0.0
        %v3129 = vmax.f32 %v3093, 0.0
        %v3130 = vmax.f32 %v3094, 0.0
        %v3131 = vmax.f32 %v3095, 0.0
        %v3132 = vmax.f32 %v3096, 0.0
        %v3133 = vmax.f32 %v3097, 0.0
        %v3134 = vmax.f32 %v3098, 0.0
        %v3135 = vmax.f32 %v3099, 0.0
        %v3136 = vmax.f32 %v3100, 0.0
        %v3137 = vmax.f32 %v3101, 0.0
        %v3138 = vmax.f32 %v3102, 0.0
        %v3139 = vmax.f32 %v3103, 0.0
        %v3140 = vmax.f32 %v3104, 0.0
        %v3141 = vmax.f32 %v3105, 0.0
        %v3142 = vmax.f32 %v3106, 0.0
        %v3143 = vmax.f32 %v3107, 0.0
        %v3144 = vmax.f32 %v3108, 0.0
        %v3145 = vmax.f32 %v3109, 0.0
        %v3146 = vmax.f32 %v3110, 0.0
        %v3147 = vmax.f32 %v3111, 0.0
        %v3148 = vld [vmem:[%s1] sm:$0xff]
        %v3149 = vld [vmem:[%s1 + $0x8] sm:$0xff]
        %v3150 = vld [vmem:[%s1 + $0x10] sm:$0xff]
        %v3151 = vld [vmem:[%s1 + $0x18] sm:$0xff]
        %v3152 = vld [vmem:[%s1 + $0x20] sm:$0xff]
        %v3153 = vld [vmem:[%s1 + $0x28] sm:$0xff]
        %v3154 = vld [vmem:[%s1 + $0x30] sm:$0xff]
        %v3155 = vld [vmem:[%s1 + $0x38] sm:$0xff]
        %v3156 = vld [vmem:[%s1 + $0x40] sm:$0xff]
        %v3157 = vld [vmem:[%s1 + $0x48] sm:$0xff]
        %v3158 = vld [vmem:[%s1 + $0x50] sm:$0xff]
        %v3159 = vld [vmem:[%s1 + $0x58] sm:$0xff]
        %v3160 = vld [vmem:[%s1 + $0x60] sm:$0xff]
        %v3161 = vld [vmem:[%s1 + $0x68] sm:$0xff]
        %v3162 = vld [vmem:[%s1 + $0x70] sm:$0xff]
        %v3163 = vld [vmem:[%s1 + $0x78] sm:$0xff]
        %v3164 = vld [vmem:[%s1 + $0x80] sm:$0xff]
        %v3165 = vld [vmem:[%s1 + $0x88] sm:$0xff]
        %v3166 = vld [vmem:[%s1 + $0x90] sm:$0xff]
        %v3167 = vld [vmem:[%s1 + $0x98] sm:$0xff]
        %v3168 = vld [vmem:[%s1 + $0xa0] sm:$0xff]
        %v3169 = vld [vmem:[%s1 + $0xa8] sm:$0xff]
        %v3170 = vld [vmem:[%s1 + $0xb0] sm:$0xff]
        %v3171 = vld [vmem:[%s1 + $0xb8] sm:$0xff]
        %v3172 = vld [vmem:[%s1 + $0xc0] sm:$0xff]
        %v3173 = vld [vmem:[%s1 + $0xc8] sm:$0xff]
        %v3174 = vld [vmem:[%s1 + $0xd0] sm:$0xff]
        %v3175 = vld [vmem:[%s1 + $0xd8] sm:$0xff]
        %v3176 = vld [vmem:[%s1 + $0xe0] sm:$0xff]
        %v3177 = vld [vmem:[%s1 + $0xe8] sm:$0xff]
        %v3178 = vld [vmem:[%s1 + $0xf0] sm:$0xff]
        %v3179 = vld [vmem:[%s1 + $0xf8] sm:$0xff]
        %v3180 = vld [vmem:[%s1 + $0x100] sm:$0xff]
        %v3181 = vld [vmem:[%s1 + $0x108] sm:$0xff]
        %v3182 = vld [vmem:[%s1 + $0x110] sm:$0xff]
        %v3183 = vld [vmem:[%s1 + $0x118] sm:$0x3f]
        %3185 = vset.pattern.permute.xlu0 0
        %3186 = vperm.xlu0 %3185, %v3148
        %v3187 = vpop.permute.xlu0 %3186
        %3190 = vset.pattern.permute.xlu0 0
        %3191 = vperm.xlu0 %3190, %v3149
        %v3192 = vpop.permute.xlu0 %3191
        %3195 = vset.pattern.permute.xlu0 0
        %3196 = vperm.xlu0 %3195, %v3150
        %v3197 = vpop.permute.xlu0 %3196
        %3200 = vset.pattern.permute.xlu0 0
        %3201 = vperm.xlu0 %3200, %v3151
        %v3202 = vpop.permute.xlu0 %3201
        %3205 = vset.pattern.permute.xlu0 0
        %3206 = vperm.xlu0 %3205, %v3152
        %v3207 = vpop.permute.xlu0 %3206
        %3210 = vset.pattern.permute.xlu0 0
        %3211 = vperm.xlu0 %3210, %v3153
        %v3212 = vpop.permute.xlu0 %3211
        %3215 = vset.pattern.permute.xlu0 0
        %3216 = vperm.xlu0 %3215, %v3154
        %v3217 = vpop.permute.xlu0 %3216
        %3220 = vset.pattern.permute.xlu0 0
        %3221 = vperm.xlu0 %3220, %v3155
        %v3222 = vpop.permute.xlu0 %3221
        %3225 = vset.pattern.permute.xlu0 0
        %3226 = vperm.xlu0 %3225, %v3156
        %v3227 = vpop.permute.xlu0 %3226
        %3230 = vset.pattern.permute.xlu0 0
        %3231 = vperm.xlu0 %3230, %v3157
        %v3232 = vpop.permute.xlu0 %3231
        %3235 = vset.pattern.permute.xlu0 0
        %3236 = vperm.xlu0 %3235, %v3158
        %v3237 = vpop.permute.xlu0 %3236
        %3240 = vset.pattern.permute.xlu0 0
        %3241 = vperm.xlu0 %3240, %v3159
        %v3242 = vpop.permute.xlu0 %3241
        %3245 = vset.pattern.permute.xlu0 0
        %3246 = vperm.xlu0 %3245, %v3160
        %v3247 = vpop.permute.xlu0 %3246
        %3250 = vset.pattern.permute.xlu0 0
        %3251 = vperm.xlu0 %3250, %v3161
        %v3252 = vpop.permute.xlu0 %3251
        %3255 = vset.pattern.permute.xlu0 0
        %3256 = vperm.xlu0 %3255, %v3162
        %v3257 = vpop.permute.xlu0 %3256
        %3260 = vset.pattern.permute.xlu0 0
        %3261 = vperm.xlu0 %3260, %v3163
        %v3262 = vpop.permute.xlu0 %3261
        %3265 = vset.pattern.permute.xlu0 0
        %3266 = vperm.xlu0 %3265, %v3164
        %v3267 = vpop.permute.xlu0 %3266
        %3270 = vset.pattern.permute.xlu0 0
        %3271 = vperm.xlu0 %3270, %v3165
        %v3272 = vpop.permute.xlu0 %3271
        %3275 = vset.pattern.permute.xlu0 0
        %3276 = vperm.xlu0 %3275, %v3166
        %v3277 = vpop.permute.xlu0 %3276
        %3280 = vset.pattern.permute.xlu0 0
        %3281 = vperm.xlu0 %3280, %v3167
        %v3282 = vpop.permute.xlu0 %3281
        %3285 = vset.pattern.permute.xlu0 0
        %3286 = vperm.xlu0 %3285, %v3168
        %v3287 = vpop.permute.xlu0 %3286
        %3290 = vset.pattern.permute.xlu0 0
        %3291 = vperm.xlu0 %3290, %v3169
        %v3292 = vpop.permute.xlu0 %3291
        %3295 = vset.pattern.permute.xlu0 0
        %3296 = vperm.xlu0 %3295, %v3170
        %v3297 = vpop.permute.xlu0 %3296
        %3300 = vset.pattern.permute.xlu0 0
        %3301 = vperm.xlu0 %3300, %v3171
        %v3302 = vpop.permute.xlu0 %3301
        %3305 = vset.pattern.permute.xlu0 0
        %3306 = vperm.xlu0 %3305, %v3172
        %v3307 = vpop.permute.xlu0 %3306
        %3310 = vset.pattern.permute.xlu0 0
        %3311 = vperm.xlu0 %3310, %v3173
        %v3312 = vpop.permute.xlu0 %3311
        %3315 = vset.pattern.permute.xlu0 0
        %3316 = vperm.xlu0 %3315, %v3174
        %v3317 = vpop.permute.xlu0 %3316
        %3320 = vset.pattern.permute.xlu0 0
        %3321 = vperm.xlu0 %3320, %v3175
        %v3322 = vpop.permute.xlu0 %3321
        %3325 = vset.pattern.permute.xlu0 0
        %3326 = vperm.xlu0 %3325, %v3176
        %v3327 = vpop.permute.xlu0 %3326
        %3330 = vset.pattern.permute.xlu0 0
        %3331 = vperm.xlu0 %3330, %v3177
        %v3332 = vpop.permute.xlu0 %3331
        %3335 = vset.pattern.permute.xlu0 0
        %3336 = vperm.xlu0 %3335, %v3178
        %v3337 = vpop.permute.xlu0 %3336
        %3340 = vset.pattern.permute.xlu0 0
        %3341 = vperm.xlu0 %3340, %v3179
        %v3342 = vpop.permute.xlu0 %3341
        %3345 = vset.pattern.permute.xlu0 0
        %3346 = vperm.xlu0 %3345, %v3180
        %v3347 = vpop.permute.xlu0 %3346
        %3350 = vset.pattern.permute.xlu0 0
        %3351 = vperm.xlu0 %3350, %v3181
        %v3352 = vpop.permute.xlu0 %3351
        %3355 = vset.pattern.permute.xlu0 0
        %3356 = vperm.xlu0 %3355, %v3182
        %v3357 = vpop.permute.xlu0 %3356
        %3360 = vset.pattern.permute.xlu0 0
        %3361 = vperm.xlu0 %3360, %v3183
        %v3362 = vpop.permute.xlu0 %3361
        %v3364 = vmul.f32 %v3112, %v3187
        %v3365 = vmul.f32 %v3113, %v3192
        %v3366 = vmul.f32 %v3114, %v3197
        %v3367 = vmul.f32 %v3115, %v3202
        %v3368 = vmul.f32 %v3116, %v3207
        %v3369 = vmul.f32 %v3117, %v3212
        %v3370 = vmul.f32 %v3118, %v3217
        %v3371 = vmul.f32 %v3119, %v3222
        %v3372 = vmul.f32 %v3120, %v3227
        %v3373 = vmul.f32 %v3121, %v3232
        %v3374 = vmul.f32 %v3122, %v3237
        %v3375 = vmul.f32 %v3123, %v3242
        %v3376 = vmul.f32 %v3124, %v3247
        %v3377 = vmul.f32 %v3125, %v3252
        %v3378 = vmul.f32 %v3126, %v3257
        %v3379 = vmul.f32 %v3127, %v3262
        %v3380 = vmul.f32 %v3128, %v3267
        %v3381 = vmul.f32 %v3129, %v3272
        %v3382 = vmul.f32 %v3130, %v3277
        %v3383 = vmul.f32 %v3131, %v3282
        %v3384 = vmul.f32 %v3132, %v3287
        %v3385 = vmul.f32 %v3133, %v3292
        %v3386 = vmul.f32 %v3134, %v3297
        %v3387 = vmul.f32 %v3135, %v3302
        %v3388 = vmul.f32 %v3136, %v3307
        %v3389 = vmul.f32 %v3137, %v3312
        %v3390 = vmul.f32 %v3138, %v3317
        %v3391 = vmul.f32 %v3139, %v3322
        %v3392 = vmul.f32 %v3140, %v3327
        %v3393 = vmul.f32 %v3141, %v3332
        %v3394 = vmul.f32 %v3142, %v3337
        %v3395 = vmul.f32 %v3143, %v3342
        %v3396 = vmul.f32 %v3144, %v3347
        %v3397 = vmul.f32 %v3145, %v3352
        %v3398 = vmul.f32 %v3146, %v3357
        %v3399 = vmul.f32 %v3147, %v3362
        %vm3400 = vcmask 261120
        %v3401 = vsel %vm3400, %v3364, 0.0
        %v3402 = vsel %vm3400, %v3365, 0.0
        %v3403 = vadd.f32 %v3401, %v3402
        %v3404 = vsel %vm3400, %v3366, 0.0
        %v3405 = vadd.f32 %v3403, %v3404
        %v3406 = vsel %vm3400, %v3367, 0.0
        %v3407 = vadd.f32 %v3405, %v3406
        %v3408 = vsel %vm3400, %v3368, 0.0
        %v3409 = vadd.f32 %v3407, %v3408
        %v3410 = vsel %vm3400, %v3369, 0.0
        %v3411 = vadd.f32 %v3409, %v3410
        %v3412 = vsel %vm3400, %v3370, 0.0
        %v3413 = vadd.f32 %v3411, %v3412
        %v3414 = vsel %vm3400, %v3371, 0.0
        %v3415 = vadd.f32 %v3413, %v3414
        %v3416 = vsel %vm3400, %v3372, 0.0
        %v3417 = vadd.f32 %v3415, %v3416
        %v3418 = vsel %vm3400, %v3373, 0.0
        %v3419 = vadd.f32 %v3417, %v3418
        %v3420 = vsel %vm3400, %v3374, 0.0
        %v3421 = vadd.f32 %v3419, %v3420
        %v3422 = vsel %vm3400, %v3375, 0.0
        %v3423 = vadd.f32 %v3421, %v3422
        %v3424 = vsel %vm3400, %v3376, 0.0
        %v3425 = vadd.f32 %v3423, %v3424
        %v3426 = vsel %vm3400, %v3377, 0.0
        %v3427 = vadd.f32 %v3425, %v3426
        %v3428 = vsel %vm3400, %v3378, 0.0
        %v3429 = vadd.f32 %v3427, %v3428
        %v3430 = vsel %vm3400, %v3379, 0.0
        %v3431 = vadd.f32 %v3429, %v3430
        %v3432 = vsel %vm3400, %v3380, 0.0
        %v3433 = vadd.f32 %v3431, %v3432
        %v3434 = vsel %vm3400, %v3381, 0.0
        %v3435 = vadd.f32 %v3433, %v3434
        %v3436 = vsel %vm3400, %v3382, 0.0
        %v3437 = vadd.f32 %v3435, %v3436
        %v3438 = vsel %vm3400, %v3383, 0.0
        %v3439 = vadd.f32 %v3437, %v3438
        %v3440 = vsel %vm3400, %v3384, 0.0
        %v3441 = vadd.f32 %v3439, %v3440
        %v3442 = vsel %vm3400, %v3385, 0.0
        %v3443 = vadd.f32 %v3441, %v3442
        %v3444 = vsel %vm3400, %v3386, 0.0
        %v3445 = vadd.f32 %v3443, %v3444
        %v3446 = vsel %vm3400, %v3387, 0.0
        %v3447 = vadd.f32 %v3445, %v3446
        %v3448 = vsel %vm3400, %v3388, 0.0
        %v3449 = vadd.f32 %v3447, %v3448
        %v3450 = vsel %vm3400, %v3389, 0.0
        %v3451 = vadd.f32 %v3449, %v3450
        %v3452 = vsel %vm3400, %v3390, 0.0
        %v3453 = vadd.f32 %v3451, %v3452
        %v3454 = vsel %vm3400, %v3391, 0.0
        %v3455 = vadd.f32 %v3453, %v3454
        %v3456 = vsel %vm3400, %v3392, 0.0
        %v3457 = vadd.f32 %v3455, %v3456
        %v3458 = vsel %vm3400, %v3393, 0.0
        %v3459 = vadd.f32 %v3457, %v3458
        %v3460 = vsel %vm3400, %v3394, 0.0
        %v3461 = vadd.f32 %v3459, %v3460
        %v3462 = vsel %vm3400, %v3395, 0.0
        %v3463 = vadd.f32 %v3461, %v3462
        %v3464 = vsel %vm3400, %v3396, 0.0
        %v3465 = vadd.f32 %v3463, %v3464
        %v3466 = vsel %vm3400, %v3397, 0.0
        %v3467 = vadd.f32 %v3465, %v3466
        %v3468 = vsel %vm3400, %v3398, 0.0
        %v3469 = vadd.f32 %v3467, %v3468
        %vm3470 = vcmask 259072
        %v3471 = vsel %vm3470, %v3399, 0.0
        %v3472 = vadd.f32 %v3469, %v3471
        %v3473 = vrot.slane %v3472, 4
        %v3474 = vadd.f32 %v3472, %v3473
        %v3475 = vrot.slane %v3474, 2
        %v3476 = vadd.f32 %v3474, %v3475
        %v3477 = vrot.slane %v3476, 1
        %v3478 = vadd.f32 %v3476, %v3477
        %v3479 = vmul.f32 %v3478, 0.00390625
        %v3480 = vpack.c.bf16 %v3479, %v3479
        %v3481 = vld [vmem:[%s4] sm:$0xf]
        %v3482 = vld [vmem:[%s4 + $0x4] sm:$0xf]
        %v3483 = vld [vmem:[%s4 + $0x8] sm:$0xf]
        %v3484 = vld [vmem:[%s4 + $0xc] sm:$0xf]
        %v3485 = vld [vmem:[%s5] sm:$0x1]
        %v3490 = vunpack.c.l.b16 %v3481
        %v3491 = vunpack.c.l.b16 %v3482
        %v3492 = vunpack.c.l.b16 %v3483
        %v3493 = vunpack.c.l.b16 %v3484
        %v3494 = vpack.c.b16 %v3491, %v3490
        %v3495 = vpack.c.b16 %v3493, %v3492
        %v3499 = vsel %vm3400, %v3480, 0
        %3501 = vmatprep.subr.bf16.mxu0 0
        %3502 = vmatpush1.bf16.msra.mxu0 0
        %3503 = vmatprep.subr.bf16.mxu0 0
        %3504 = vmatpush1.bf16.msra.mxu0 0
        %3505 = vmatprep.subr.bf16.mxu0 0
        %3506 = vmatpush1.bf16.msra.mxu0 0
        %3507 = vmatprep.subr.bf16.mxu0 0
        %3508 = vmatpush1.bf16.msra.mxu0 0
        %3509 = vmatprep.subr.bf16.mxu0 0
        %3510 = vmatpush1.bf16.msra.mxu0 0
        %3511 = vmatprep.subr.bf16.mxu0 0
        %3512 = vmatpush1.bf16.msra.mxu0 0
        %3513 = vmatprep.subr.bf16.mxu0 0
        %3514 = vmatpush1.bf16.msra.mxu0 %v3495
        %3515 = vmatprep.subr.bf16.mxu0 0
        %3516 = vmatpush1.bf16.msra.mxu0 %v3494
        %3517 = vmatprep.subr.bf16.mxu0 0
        %3518 = vmatpush2.bf16.msra.mxu0 0
        %3519 = vmatprep.subr.bf16.mxu0 0
        %3520 = vmatpush2.bf16.msra.mxu0 0
        %3521 = vmatprep.subr.bf16.mxu0 0
        %3522 = vmatpush2.bf16.msra.mxu0 0
        %3523 = vmatprep.subr.bf16.mxu0 0
        %3524 = vmatpush2.bf16.msra.mxu0 0
        %3525 = vmatprep.subr.bf16.mxu0 0
        %3526 = vmatpush2.bf16.msra.mxu0 0
        %3527 = vmatprep.subr.bf16.mxu0 0
        %3528 = vmatpush2.bf16.msra.mxu0 0
        %3529 = vmatprep.subr.bf16.mxu0 0
        %3530 = vmatpush2.bf16.msra.mxu0 0
        %3531 = vmatprep.subr.bf16.mxu0 0
        %3532 = vmatpush2.bf16.msra.mxu0 0
        %3533 = vmatprep.mubr.bf16.mxu0 0
        %3534 = vmatmul.mubr.bf16.gmra.mxu0 %v3499
        %v3535 = vpop.f32.mrf.mxu0
        %v3536 = vadd.f32 %v3485, %v3535
        %v3537 = vpop.f32.mrf.mxu0
        %v3538 = vpop.f32.mrf.mxu0
        %v3539 = vpop.f32.mrf.mxu0
        %3540 = vdwg.mxu0
        %3541 = vst [vmem:[%s243] sm:$0x1] %v3536
        %s3542 = sand.u32 %s159, 1
        %s3543 = scalar_lea.sflag [#allocation3], %s3542
        %s3544 = sand.u32 %s159, 1
        %s3545 = scalar_lea.vmem [#allocation2], %s3544
        // Predicated region
        $region45: #{vit_merged_forward.1} parent=43 // pred_check
          %p3546 = pneg %p169
        $region46: #{vit_merged_forward.1} parent=43 // pred_check_branch
          %3548 = sbr.rel (%p3546) target = $region48
        $region47: #{vit_merged_forward.1} parent=43 // pred_region
          %s3550 = ssub.s32 16, 16
          %3551 = vsyncadd %s3543, %s3550
          %s3552 = smul.addr %s20, 16
          %s3553 = scalar_lea.hbm %s6, %s3552
          %s3555 = sshll.u32 %s3545, 4
          %s3556 = int_to_ptr.vmem [resolvable:$true] %s3555
          %3558 = dma.vmem_to_hbm [thread:$0]  %s3556, 16, %s3553, %s3543
        $region48: #{vit_merged_forward.1} parent=43 // pred_fallthru
          _
      $region44: #{vit_merged_forward.1} parent=5 // pred_fallthru
        _
      %p3559 = scmp.le.s32.totalorder 2, %s15
      // Predicated region
      $region49: #{vit_merged_forward.1} parent=5 // pred_check
        %p3560 = pneg %p3559
      $region50: #{vit_merged_forward.1} parent=5 // pred_check_branch
        %3562 = sbr.rel (%p3560) target = $region52
      $region51: #{vit_merged_forward.1} parent=5 // pred_region
        %s3563 = ssub.s32 %s15, 2
        // Predicated region
        $region53: #{vit_merged_forward.1} parent=51 // pred_check
          %p3564 = pneg %p175
        $region54: #{vit_merged_forward.1} parent=51 // pred_check_branch
          %3566 = sbr.rel (%p3564) target = $region56
        $region55: #{vit_merged_forward.1} parent=51 // pred_region
          %s3567 = sand.u32 %s160, 1
          %s3568 = scalar_lea.sflag [#allocation3], %s3567
          %s3569 = sand.u32 %s160, 1
          %s3570 = scalar_lea.vmem [#allocation2], %s3569
          %3571 = dma.done %s3568, 16
        $region56: #{vit_merged_forward.1} parent=51 // pred_fallthru
          _
      $region52: #{vit_merged_forward.1} parent=5 // pred_fallthru
        _
    $region6: #{vit_merged_forward.1} parent=1 // loop_footer
      %s19 = sadd.s32 1, %s15
    $region7: #{vit_merged_forward.1} parent=1 // loop_footer_branch
      %14 = sbr.rel target = $region3
    $region8: #{vit_merged_forward.1} parent=1 // loop_exit
      _
    %3572 = vsyncpa [#allocation3], 1
    %s3573 = scalar_lea.sflag [#allocation3], 1
    %3574 = vsyncpa %s3573, 1

</llo_original>
